<compile_context>
chip_gen: v6e
topology: v6e:2x2x1
jax: 0.10.0
libtpu: 0.0.40
codegen_flags: <defaults>
</compile_context>

<pallas_src>
import functools

import jax
import jax.numpy as jnp
from jax.experimental import pallas as pl
from jax.experimental.pallas import tpu as pltpu


# ----------------------------------------------------------------------------
# Helpers
# ----------------------------------------------------------------------------
def _round_up(x, m):
    return ((x + m - 1) // m) * m


def _split_rows(w, widths):
    """Split a (sum(widths), N) matrix into row blocks matching `widths`."""
    blocks, off = [], 0
    for width in widths:
        blocks.append(w[off:off + width])
        off += width
    return blocks


@functools.lru_cache(maxsize=None)
def _vmem_limit_bytes():
    """Per-generation scoped-VMEM request, with headroom for the compiler."""
    try:
        phys = int(pltpu.get_tpu_info().vmem_capacity_bytes)
    except Exception:
        phys = 64 << 20          # conservative fallback (v7x: 64 MiB physical)
    # leave ~16 MiB headroom; never ask for more than ~112 MiB (v5e/v6e)
    return int(min(max(phys - (16 << 20), 32 << 20), 112 << 20))


# ----------------------------------------------------------------------------
# Pallas kernel 1: variadic fused GEMM   out = sum_i A_i @ B_i + bias
# (used for the hoisted per-layer input projections -- both directions fused
#  into one 8H-wide output -- and for the final Linear; splitting the weights
#  per feature block avoids materializing any HBM concat)
# ----------------------------------------------------------------------------
def _make_matmul_kernel(n_pairs):
    def kernel(*refs):
        a_refs = refs[:n_pairs]
        b_refs = refs[n_pairs:2 * n_pairs]
        bias_ref = refs[2 * n_pairs]
        o_ref = refs[2 * n_pairs + 1]

        acc = jnp.dot(a_refs[0][...], b_refs[0][...],
                      preferred_element_type=jnp.float32)
        for a_ref, b_ref in zip(a_refs[1:], b_refs[1:]):
            acc = acc + jnp.dot(a_ref[...], b_ref[...],
                                preferred_element_type=jnp.float32)
        o_ref[...] = (acc + bias_ref[...]).astype(o_ref.dtype)

    return kernel


def fused_matmul(a_list, b_list, bias, *, out_dtype=jnp.float32, tile_m=512):
    """sum_i a_list[i] @ b_list[i] + bias, tiled over (N, M).

    All A_i share M (rows), all B_i share N (cols); each pair keeps its own
    K_i fully resident per block.  The grid is ordered N-tiles-outer /
    M-tiles-inner so the weight (B_i) blocks are grid-invariant over the inner
    M loop and are fetched from HBM only once per N tile.  The N tile is the
    full (128-padded) N whenever the double-buffered blocks fit the VMEM
    budget, and is halved otherwise (keeps v7x's 64 MiB VMEM in bounds).
    """
    M = a_list[0].shape[0]
    N = b_list[0].shape[1]
    sum_k = sum(a.shape[1] for a in a_list)
    in_itemsize = jnp.dtype(a_list[0].dtype).itemsize
    out_itemsize = jnp.dtype(out_dtype).itemsize

    limit = _vmem_limit_bytes()
    tm = min(tile_m, _round_up(M, 8))

    tn = _round_up(N, 128)
    budget = int(limit * 0.8)
    while tn > 128:
        need = (2 * sum_k * tn * in_itemsize        # weight blocks (x2 buffers)
                + 2 * tm * sum_k * in_itemsize      # activation blocks
                + 2 * tm * tn * out_itemsize        # output blocks
                + (2 << 20))                        # slack
        if need <= budget:
            break
        tn = _round_up(max(tn // 2, 128), 128)

    Mp = _round_up(M, tm)
    Np = _round_up(N, tn)

    a_pad = [a if Mp == M else jnp.pad(a, ((0, Mp - M), (0, 0)))
             for a in a_list]
    b_pad = [b if Np == N else jnp.pad(b, ((0, 0), (0, Np - N)))
             for b in b_list]
    bias2 = jnp.reshape(bias, (1, N)).astype(jnp.float32)
    if Np != N:
        bias2 = jnp.pad(bias2, ((0, 0), (0, Np - N)))

    n_pairs = len(a_list)
    # N-tiles outermost, M-tiles innermost: weight & bias block indices depend
    # only on j, so they stay VMEM-resident across the inner M sweep.
    in_specs = ([pl.BlockSpec((tm, a.shape[1]), lambda j, i: (i, 0))
                 for a in a_pad]
                + [pl.BlockSpec((b.shape[0], tn), lambda j, i: (0, j))
                   for b in b_pad]
                + [pl.BlockSpec((1, tn), lambda j, i: (0, j))])

    cost = pl.CostEstimate(
        flops=int(2 * M * N * sum_k),
        transcendentals=0,
        bytes_accessed=int((M * sum_k + sum_k * N) * in_itemsize
                           + M * N * out_itemsize + N * 4))

    out = pl.pallas_call(
        _make_matmul_kernel(n_pairs),
        out_shape=jax.ShapeDtypeStruct((Mp, Np), out_dtype),
        grid_spec=pltpu.PrefetchScalarGridSpec(
            num_scalar_prefetch=0,
            grid=(Np // tn, Mp // tm),
            in_specs=in_specs,
            out_specs=pl.BlockSpec((tm, tn), lambda j, i: (i, j)),
        ),
        compiler_params=pltpu.CompilerParams(
            dimension_semantics=("parallel", "parallel"),
            vmem_limit_bytes=limit),
        cost_estimate=cost,
    )(*a_pad, *b_pad, bias2)

    if Mp != M or Np != N:
        out = out[:M, :N]
    return out


# ----------------------------------------------------------------------------
# Pallas kernel 2: fused bidirectional LSTM recurrence over a time chunk.
# Grid axis 0 = time chunks (sequential).  Input gates are precomputed
# (x @ W_ih^T + b_ih + b_hh, both directions packed into one 8H-wide array),
# so each step only needs h_prev @ W_hh^T plus elementwise gate math.
# ----------------------------------------------------------------------------
def _bilstm_kernel(gxf_ref, gxb_ref, whhf_ref, whhb_ref,
                   hf_ref, hb_ref, hf_sc, cf_sc, hb_sc, cb_sc):
    """
    gxf_ref : (Tc, B, 4H) compute-dtype  fwd-direction gate inputs (col blk 0)
    gxb_ref : (Tc, B, 4H) compute-dtype  bwd-direction gate inputs (col blk 1,
                                         block taken from the mirrored chunk)
    whh*    : (H, 4H)                    recurrent weights (grid-invariant)
    hf_ref  : (Tc, B, H)                 forward hidden outputs for this chunk
    hb_ref  : (Tc, B, H)                 backward hidden outputs for this chunk
    *_sc    : (B, H) f32                 recurrent state, persists across steps
    """
    tc = gxf_ref.shape[0]
    H = hf_sc.shape[-1]
    cdt = whhf_ref.dtype

    @pl.when(pl.program_id(0) == 0)
    def _():
        hf_sc[...] = jnp.zeros_like(hf_sc)
        cf_sc[...] = jnp.zeros_like(cf_sc)
        hb_sc[...] = jnp.zeros_like(hb_sc)
        cb_sc[...] = jnp.zeros_like(cb_sc)

    def cell(gx, h_prev, c_prev, whh_ref):
        g = gx.astype(jnp.float32) + jnp.dot(
            h_prev.astype(cdt), whh_ref[...],
            preferred_element_type=jnp.float32)
        i_g = jax.nn.sigmoid(g[:, 0 * H:1 * H])   # input gate
        f_g = jax.nn.sigmoid(g[:, 1 * H:2 * H])   # forget gate
        g_g = jnp.tanh(g[:, 2 * H:3 * H])         # cell candidate
        o_g = jax.nn.sigmoid(g[:, 3 * H:4 * H])   # output gate
        c_new = f_g * c_prev + i_g * g_g
        h_new = o_g * jnp.tanh(c_new)
        return h_new, c_new

    def step(i, carry):
        # forward direction: local time i (global time chunk*Tc + i)
        h_new, c_new = cell(gxf_ref[i], hf_sc[...], cf_sc[...], whhf_ref)
        hf_sc[...] = h_new
        cf_sc[...] = c_new
        hf_ref[i] = h_new.astype(hf_ref.dtype)

        # backward direction: processes its chunk in reverse local order
        j = tc - 1 - i
        hb_new, cb_new = cell(gxb_ref[j], hb_sc[...], cb_sc[...], whhb_ref)
        hb_sc[...] = hb_new
        cb_sc[...] = cb_new
        hb_ref[j] = hb_new.astype(hb_ref.dtype)
        return carry

    # Partial unroll: lets the scheduler overlap the two directions' MXU /
    # EUP (sigmoid, tanh) / VPU gate math and hide the gx VMEM loads.
    jax.lax.fori_loop(0, tc, step, 0, unroll=int(min(8, tc)))


def _derive_time_chunk(B, H, itemsize, limit, cap):
    """Largest Tc whose pipelined VMEM footprint fits the budget."""
    budget = int(limit * 0.75)
    # per timestep: gx fwd+bwd blocks (x2 buffers) + h fwd+bwd out blocks (x2)
    per_t = 2 * 2 * B * 4 * H * itemsize + 2 * 2 * B * H * itemsize
    # fixed: W_hh fwd+bwd (x2 buffers, grid-invariant) + f32 h/c scratch
    fixed = 2 * 2 * H * 4 * H * itemsize + 4 * B * H * 4
    avail = max(budget - fixed, per_t)
    return int(max(1, min(cap, avail // per_t)))


def bilstm_layer(gx, w_hh_f, w_hh_b, hidden_dim, compute_dtype,
                 max_time_chunk=32):
    """Run the fused bidirectional recurrence.

    gx: (L, B, 8H) precomputed gate inputs (x @ W_ih^T + b_ih + b_hh); columns
    [:4H] are the forward-direction gates, [4H:] the backward-direction gates.
    Returns h_f, h_b of shape (L, B, H) in compute_dtype.
    """
    L, B, G = gx.shape
    H = hidden_dim
    assert G == 8 * H
    assert (4 * H) % 128 == 0, "hidden_dim must be a multiple of 32"

    limit = _vmem_limit_bytes()
    itemsize = jnp.dtype(compute_dtype).itemsize
    tc = min(_derive_time_chunk(B, H, itemsize, limit, max_time_chunk), L)
    L_pad = _round_up(L, tc)
    if L_pad != L:
        # Zero-padded (post-bias) gate inputs keep h/c exactly zero through the
        # padded tail, so the backward direction (which consumes the tail
        # first) starts its real work from the correct zero state.
        gx = jnp.pad(gx, ((0, L_pad - L), (0, 0), (0, 0)))
    n_chunks = L_pad // tc

    whhf_t = jnp.transpose(w_hh_f).astype(compute_dtype)   # (H, 4H)
    whhb_t = jnp.transpose(w_hh_b).astype(compute_dtype)   # (H, 4H)

    fwd_map = lambda c: (c, 0, 0)
    bwd_map = lambda c: (n_chunks - 1 - c, 0, 1)    # column block 1 = bwd gates
    out_fwd = lambda c: (c, 0, 0)
    out_bwd = lambda c: (n_chunks - 1 - c, 0, 0)

    cost = pl.CostEstimate(
        flops=int(2 * 2 * L_pad * B * H * 4 * H),
        transcendentals=int(2 * L_pad * B * 5 * H),
        bytes_accessed=int(L_pad * B * 8 * H * itemsize
                           + 2 * L_pad * B * H * itemsize
                           + 2 * H * 4 * H * itemsize))

    # TODO(synk): on v7x (2 TensorCores) split the fwd/bwd directions across
    # cores (pl.core_map / core-parallel leading grid axis) instead of
    # interleaving them inside one sequential kernel.
    h_f, h_b = pl.pallas_call(
        _bilstm_kernel,
        out_shape=(jax.ShapeDtypeStruct((L_pad, B, H), compute_dtype),
                   jax.ShapeDtypeStruct((L_pad, B, H), compute_dtype)),
        grid_spec=pltpu.PrefetchScalarGridSpec(
            num_scalar_prefetch=0,
            grid=(n_chunks,),
            in_specs=[
                pl.BlockSpec((tc, B, 4 * H), fwd_map),
                pl.BlockSpec((tc, B, 4 * H), bwd_map),
                # Grid-invariant recurrent weights: same block index every
                # step, so they are DMA'd from HBM only once.
                pl.BlockSpec((H, 4 * H), lambda c: (0, 0)),
                pl.BlockSpec((H, 4 * H), lambda c: (0, 0)),
            ],
            out_specs=[
                pl.BlockSpec((tc, B, H), out_fwd),
                pl.BlockSpec((tc, B, H), out_bwd),
            ],
            scratch_shapes=[pltpu.VMEM((B, H), jnp.float32)] * 4,
        ),
        compiler_params=pltpu.CompilerParams(
            dimension_semantics=("arbitrary",),
            vmem_limit_bytes=limit),
        cost_estimate=cost,
    )(gx, gx, whhf_t, whhb_t)

    if L_pad != L:
        h_f = h_f[:L]
        h_b = h_b[:L]
    return h_f, h_b


# ----------------------------------------------------------------------------
# Full forward pass
# ----------------------------------------------------------------------------
def skip_lstm_forward(x_ids, params, nin, nout, hidden_dim, num_layers,
                      compute_dtype=jnp.bfloat16, max_time_chunk=32):
    """Forward pass of SkipLSTM. x_ids: int32 (B, L) token indices."""
    B, L = x_ids.shape
    H = hidden_dim

    # Time-major token ids.  The (L*B, nin=21) one-hot and its K=21 MXU pass
    # are replaced by embedding-style row gathers (layer-1 input projection
    # and the one-hot block of the final skip projection).
    ids = jnp.reshape(jnp.transpose(x_ids), (L * B,))

    feat_blocks, feat_widths = [], []      # [h1_f, h1_b, h2_f, h2_b, ...]
    layer_in_blocks, layer_in_widths = None, None

    for layer in range(num_layers):
        p = params["layers"][layer]
        # Fuse fwd and bwd input projections: [W_ih^T | W_ih_r^T] -> (D, 8H)
        w_cat_t = jnp.concatenate(
            [jnp.transpose(p["w_ih"]), jnp.transpose(p["w_ih_r"])], axis=1)
        bias_cat = jnp.concatenate(
            [p["b_ih"] + p["b_hh"],
             p["b_ih_r"] + p["b_hh_r"]]).astype(jnp.float32)        # (8H,)

        if layer == 0:
            # Embedding gather instead of a K=21 one-hot GEMM.
            table = (w_cat_t + bias_cat[None, :]).astype(jnp.float32)
            gx = jnp.take(table, ids, axis=0).astype(compute_dtype)  # (L*B,8H)
        else:
            # Single hoisted, bias-folded GEMM per layer (both directions);
            # previous layer's fwd/bwd outputs consumed as separate operands
            # (weight rows split) so no concat is materialized.
            w_blocks = _split_rows(w_cat_t.astype(compute_dtype),
                                   layer_in_widths)
            gx = fused_matmul(layer_in_blocks, w_blocks, bias_cat,
                              out_dtype=compute_dtype)               # (L*B,8H)
        gx = gx.reshape(L, B, 8 * H)

        h_f, h_b = bilstm_layer(gx, p["w_hh"], p["w_hh_r"], H,
                                compute_dtype, max_time_chunk)
        hf_flat = h_f.reshape(L * B, H)
        hb_flat = h_b.reshape(L * B, H)

        feat_blocks += [hf_flat, hb_flat]
        feat_widths += [H, H]
        layer_in_blocks = [hf_flat, hb_flat]
        layer_in_widths = [H, H]

    # Final projection over the implicit concat [one_hot, h1, ..., hL]:
    # h-blocks via a tiled GEMM (weights split per feature block, nout padded
    # to a lane-dense 128); one_hot block via a gather of projection rows.
    wp_t = jnp.transpose(params["proj_w"]).astype(jnp.float32)       # (n, nout)
    skip = jnp.take(wp_t[:nin], ids, axis=0)                         # (L*B, nout)
    wp_h_blocks = _split_rows(wp_t[nin:].astype(compute_dtype), feat_widths)
    z = fused_matmul(feat_blocks, wp_h_blocks,
                     params["proj_b"].astype(jnp.float32),
                     out_dtype=jnp.float32)                          # (L*B, nout)
    z = z + skip
    return jnp.transpose(z.reshape(L, B, nout), (1, 0, 2))           # (B, L, nout)


# ----------------------------------------------------------------------------
# Deterministic parameter construction (PyTorch-style uniform init)
# ----------------------------------------------------------------------------
def init_params(key, nin, nout, hidden_dim, num_layers):
    k = 1.0 / jnp.sqrt(hidden_dim)
    params = {"layers": []}
    dim = nin
    for _ in range(num_layers):
        layer = {}
        for suffix in ("", "_r"):
            key, k1, k2, k3, k4 = jax.random.split(key, 5)
            layer["w_ih" + suffix] = jax.random.uniform(
                k1, (4 * hidden_dim, dim), jnp.float32, -k, k)
            layer["w_hh" + suffix] = jax.random.uniform(
                k2, (4 * hidden_dim, hidden_dim), jnp.float32, -k, k)
            layer["b_ih" + suffix] = jax.random.uniform(
                k3, (4 * hidden_dim,), jnp.float32, -k, k)
            layer["b_hh" + suffix] = jax.random.uniform(
                k4, (4 * hidden_dim,), jnp.float32, -k, k)
        params["layers"].append(layer)
        dim = 2 * hidden_dim

    n = 2 * hidden_dim * num_layers + nin
    key, k1, k2 = jax.random.split(key, 3)
    kp = 1.0 / jnp.sqrt(n)
    params["proj_w"] = jax.random.uniform(k1, (nout, n), jnp.float32, -kp, kp)
    params["proj_b"] = jax.random.uniform(k2, (nout,), jnp.float32, -kp, kp)
    return params


# ----------------------------------------------------------------------------
# Pure-JAX reference for verification
# ----------------------------------------------------------------------------
def _ref_lstm_dir(x_tm, w_ih, w_hh, b_ih, b_hh, hidden_dim, reverse):
    L, B, _ = x_tm.shape
    xs = x_tm[::-1] if reverse else x_tm

    def step(carry, x_t):
        h, c = carry
        g = x_t @ w_ih.T + h @ w_hh.T + (b_ih + b_hh)
        i = jax.nn.sigmoid(g[:, 0 * hidden_dim:1 * hidden_dim])
        f = jax.nn.sigmoid(g[:, 1 * hidden_dim:2 * hidden_dim])
        gg = jnp.tanh(g[:, 2 * hidden_dim:3 * hidden_dim])
        o = jax.nn.sigmoid(g[:, 3 * hidden_dim:4 * hidden_dim])
        c = f * c + i * gg
        h = o * jnp.tanh(c)
        return (h, c), h

    h0 = jnp.zeros((B, hidden_dim), jnp.float32)
    _, hs = jax.lax.scan(step, (h0, h0), xs)
    return hs[::-1] if reverse else hs


def ref_forward(x_ids, params, nin, nout, hidden_dim, num_layers):
    B, L = x_ids.shape
    one_hot = jax.nn.one_hot(x_ids, nin, dtype=jnp.float32)
    hs = [one_hot]
    h_ = one_hot
    for layer in range(num_layers):
        p = params["layers"][layer]
        x_tm = jnp.transpose(h_, (1, 0, 2))
        hf = _ref_lstm_dir(x_tm, p["w_ih"], p["w_hh"], p["b_ih"], p["b_hh"],
                           hidden_dim, False)
        hb = _ref_lstm_dir(x_tm, p["w_ih_r"], p["w_hh_r"], p["b_ih_r"],
                           p["b_hh_r"], hidden_dim, True)
        h = jnp.transpose(jnp.concatenate([hf, hb], -1), (1, 0, 2))
        hs.append(h)
        h_ = h
    h_cat = jnp.concatenate(hs, -1)
    z = h_cat.reshape(-1, h_cat.shape[-1]) @ params["proj_w"].T + params["proj_b"]
    return z.reshape(B, L, nout)


# ----------------------------------------------------------------------------
if __name__ == "__main__":
    # Small, module-consistent shapes (real prose_dlm config is nin=nout=21,
    # hidden=1024, layers=3 — hidden/layers scaled down for the test).
    B, L = 2, 8
    NIN, NOUT, HIDDEN, NUM_LAYERS = 21, 21, 32, 2

    key = jax.random.PRNGKey(0)
    key, kx, kx2 = jax.random.split(key, 3)
    x_ids = jax.random.randint(kx, (B, L), 0, NIN, dtype=jnp.int32)
    params = init_params(key, NIN, NOUT, HIDDEN, NUM_LAYERS)

    fwd = functools.partial(skip_lstm_forward, nin=NIN, nout=NOUT,
                            hidden_dim=HIDDEN, num_layers=NUM_LAYERS)

    ref = jax.block_until_ready(
        ref_forward(x_ids, params, NIN, NOUT, HIDDEN, NUM_LAYERS))

    # f32 compute path: should match the pure-JAX reference tightly.
    out_f32 = jax.block_until_ready(fwd(x_ids, params,
                                        compute_dtype=jnp.float32))
    assert out_f32.shape == (B, L, NOUT), out_f32.shape
    assert jnp.allclose(out_f32, ref, rtol=1e-3, atol=1e-3), (
        "f32 kernel mismatch vs pure-JAX reference")

    # bf16 compute path (production configuration): looser tolerance.
    out_bf16 = jax.block_until_ready(fwd(x_ids, params,
                                         compute_dtype=jnp.bfloat16))
    assert out_bf16.shape == (B, L, NOUT), out_bf16.shape
    assert jnp.allclose(out_bf16, ref, rtol=5e-2, atol=5e-2), (
        "bf16 kernel mismatch vs pure-JAX reference")

    # Odd sequence length + small forced chunk: exercises the zero-padded
    # time tail inside the recurrence kernel.
    L2 = 11
    x_ids2 = jax.random.randint(kx2, (B, L2), 0, NIN, dtype=jnp.int32)
    ref2 = jax.block_until_ready(
        ref_forward(x_ids2, params, NIN, NOUT, HIDDEN, NUM_LAYERS))
    out2 = jax.block_until_ready(fwd(x_ids2, params,
                                     compute_dtype=jnp.float32,
                                     max_time_chunk=4))
    assert out2.shape == (B, L2, NOUT), out2.shape
    assert jnp.allclose(out2, ref2, rtol=1e-3, atol=1e-3), (
        "padded-time kernel mismatch vs pure-JAX reference")

    print("KERNEL_OK")
</pallas_src>

<mosaic_0001>
module attributes {stable_mosaic.version = 11 : i64} {
  func.func @_bilstm_kernel(%arg0: i32, %arg1: memref<8x2x128xf32, #tpu.memory_space<vmem>>, %arg2: memref<8x2x128xf32, #tpu.memory_space<vmem>>, %arg3: memref<32x128xf32, #tpu.memory_space<vmem>>, %arg4: memref<32x128xf32, #tpu.memory_space<vmem>>, %arg5: memref<8x2x32xf32, #tpu.memory_space<vmem>>, %arg6: memref<8x2x32xf32, #tpu.memory_space<vmem>>, %arg7: memref<2x32xf32, #tpu.memory_space<vmem>>, %arg8: memref<2x32xf32, #tpu.memory_space<vmem>>, %arg9: memref<2x32xf32, #tpu.memory_space<vmem>>, %arg10: memref<2x32xf32, #tpu.memory_space<vmem>>) attributes {dimension_semantics = [#tpu.dimension_semantics<arbitrary>], iteration_bounds = array<i64: 1>, scalar_prefetch = 0 : i64, scratch_operands = 4 : i64, tpu.core_type = #tpu.core_type<tc>, window_params = [{transform_indices = @transform_0, window_bounds = array<i64: 8, 2, 128>}, {transform_indices = @transform_1, window_bounds = array<i64: 8, 2, 128>}, {pipeline_mode = #tpu.pipeline_mode<synchronous>, transform_indices = @transform_2, window_bounds = array<i64: 32, 128>}, {pipeline_mode = #tpu.pipeline_mode<synchronous>, transform_indices = @transform_3, window_bounds = array<i64: 32, 128>}, {transform_indices = @transform_4, window_bounds = array<i64: 8, 2, 32>}, {transform_indices = @transform_5, window_bounds = array<i64: 8, 2, 32>}]} {
    %c0_i32 = arith.constant 0 : i32
    %0 = arith.cmpi eq, %arg0, %c0_i32 : i32
    %1 = arith.extui %0 : i1 to i32
    %c0_i32_0 = arith.constant 0 : i32
    %2 = arith.cmpi ne, %1, %c0_i32_0 : i32
    scf.if %2 {
      %cst_296 = arith.constant 0.000000e+00 : f32
      %635 = vector.broadcast %cst_296 : f32 to vector<2x32xf32>
      %c0_297 = arith.constant 0 : index
      %c0_298 = arith.constant 0 : index
      %636 = vector.load %arg7[%c0_297, %c0_298] : memref<2x32xf32, #tpu.memory_space<vmem>>, vector<2x32xf32>
      tpu.vector_store %arg7[%c0_297, %c0_298], %635 {strides = array<i32>} : memref<2x32xf32, #tpu.memory_space<vmem>>, vector<2x32xf32>,
      %cst_299 = arith.constant 0.000000e+00 : f32
      %637 = vector.broadcast %cst_299 : f32 to vector<2x32xf32>
      %c0_300 = arith.constant 0 : index
      %c0_301 = arith.constant 0 : index
      %638 = vector.load %arg8[%c0_300, %c0_301] : memref<2x32xf32, #tpu.memory_space<vmem>>, vector<2x32xf32>
      tpu.vector_store %arg8[%c0_300, %c0_301], %637 {strides = array<i32>} : memref<2x32xf32, #tpu.memory_space<vmem>>, vector<2x32xf32>,
      %cst_302 = arith.constant 0.000000e+00 : f32
      %639 = vector.broadcast %cst_302 : f32 to vector<2x32xf32>
      %c0_303 = arith.constant 0 : index
      %c0_304 = arith.constant 0 : index
      %640 = vector.load %arg9[%c0_303, %c0_304] : memref<2x32xf32, #tpu.memory_space<vmem>>, vector<2x32xf32>
      tpu.vector_store %arg9[%c0_303, %c0_304], %639 {strides = array<i32>} : memref<2x32xf32, #tpu.memory_space<vmem>>, vector<2x32xf32>,
      %cst_305 = arith.constant 0.000000e+00 : f32
      %641 = vector.broadcast %cst_305 : f32 to vector<2x32xf32>
      %c0_306 = arith.constant 0 : index
      %c0_307 = arith.constant 0 : index
      %642 = vector.load %arg10[%c0_306, %c0_307] : memref<2x32xf32, #tpu.memory_space<vmem>>, vector<2x32xf32>
      tpu.vector_store %arg10[%c0_306, %c0_307], %641 {strides = array<i32>} : memref<2x32xf32, #tpu.memory_space<vmem>>, vector<2x32xf32>,
    } else {
    }
    %c0_i32_1 = arith.constant 0 : i32
    %3 = arith.index_cast %c0_i32_1 : i32 to index
    %c0 = arith.constant 0 : index
    %c0_2 = arith.constant 0 : index
    %4 = vector.load %arg1[%3, %c0, %c0_2] : memref<8x2x128xf32, #tpu.memory_space<vmem>>, vector<1x2x128xf32>
    %5 = vector.shape_cast %4 : vector<1x2x128xf32> to vector<2x128xf32>
    %c0_3 = arith.constant 0 : index
    %c0_4 = arith.constant 0 : index
    %6 = vector.load %arg7[%c0_3, %c0_4] : memref<2x32xf32, #tpu.memory_space<vmem>>, vector<2x32xf32>
    %c0_5 = arith.constant 0 : index
    %c0_6 = arith.constant 0 : index
    %7 = vector.load %arg8[%c0_5, %c0_6] : memref<2x32xf32, #tpu.memory_space<vmem>>, vector<2x32xf32>
    %c0_7 = arith.constant 0 : index
    %c0_8 = arith.constant 0 : index
    %8 = vector.load %arg3[%c0_7, %c0_8] : memref<32x128xf32, #tpu.memory_space<vmem>>, vector<32x128xf32>
    %cst = arith.constant dense<0.000000e+00> : vector<2x128xf32>
    %9 = tpu.matmul %6, %8, %cst {dimension_numbers = #tpu.dot_dimension_numbers<[1], [0], [0], [1], [0, 0, 1, 1], [], []>} : vector<2x32xf32>, vector<32x128xf32>, vector<2x128xf32> -> vector<2x128xf32>
    %10 = arith.addf %5, %9 : vector<2x128xf32>
    %11 = vector.extract_strided_slice %10 {offsets = [0, 0], sizes = [2, 32], strides = [1, 1]} : vector<2x128xf32> to vector<2x32xf32>
    %12 = arith.negf %11 : vector<2x32xf32>
    %13 = math.exp %12 : vector<2x32xf32>
    %cst_9 = arith.constant 1.000000e+00 : f32
    %14 = vector.broadcast %cst_9 : f32 to vector<2x32xf32>
    %15 = arith.addf %14, %13 : vector<2x32xf32>
    %16 = arith.divf %14, %15 : vector<2x32xf32>
    %17 = vector.extract_strided_slice %10 {offsets = [0, 32], sizes = [2, 32], strides = [1, 1]} : vector<2x128xf32> to vector<2x32xf32>
    %18 = arith.negf %17 : vector<2x32xf32>
    %19 = math.exp %18 : vector<2x32xf32>
    %cst_10 = arith.constant 1.000000e+00 : f32
    %20 = vector.broadcast %cst_10 : f32 to vector<2x32xf32>
    %21 = arith.addf %20, %19 : vector<2x32xf32>
    %22 = arith.divf %20, %21 : vector<2x32xf32>
    %23 = vector.extract_strided_slice %10 {offsets = [0, 64], sizes = [2, 32], strides = [1, 1]} : vector<2x128xf32> to vector<2x32xf32>
    %24 = math.tanh %23 : vector<2x32xf32>
    %25 = vector.extract_strided_slice %10 {offsets = [0, 96], sizes = [2, 32], strides = [1, 1]} : vector<2x128xf32> to vector<2x32xf32>
    %26 = arith.negf %25 : vector<2x32xf32>
    %27 = math.exp %26 : vector<2x32xf32>
    %cst_11 = arith.constant 1.000000e+00 : f32
    %28 = vector.broadcast %cst_11 : f32 to vector<2x32xf32>
    %29 = arith.addf %28, %27 : vector<2x32xf32>
    %30 = arith.divf %28, %29 : vector<2x32xf32>
    %31 = arith.mulf %22, %7 : vector<2x32xf32>
    %32 = arith.mulf %16, %24 : vector<2x32xf32>
    %33 = arith.addf %31, %32 : vector<2x32xf32>
    %34 = math.tanh %33 : vector<2x32xf32>
    %35 = arith.mulf %30, %34 : vector<2x32xf32>
    %c0_12 = arith.constant 0 : index
    %c0_13 = arith.constant 0 : index
    %36 = vector.load %arg7[%c0_12, %c0_13] : memref<2x32xf32, #tpu.memory_space<vmem>>, vector<2x32xf32>
    tpu.vector_store %arg7[%c0_12, %c0_13], %35 {strides = array<i32>} : memref<2x32xf32, #tpu.memory_space<vmem>>, vector<2x32xf32>,
    %c0_14 = arith.constant 0 : index
    %c0_15 = arith.constant 0 : index
    %37 = vector.load %arg8[%c0_14, %c0_15] : memref<2x32xf32, #tpu.memory_space<vmem>>, vector<2x32xf32>
    tpu.vector_store %arg8[%c0_14, %c0_15], %33 {strides = array<i32>} : memref<2x32xf32, #tpu.memory_space<vmem>>, vector<2x32xf32>,
    %38 = arith.index_cast %c0_i32_1 : i32 to index
    %c0_16 = arith.constant 0 : index
    %c0_17 = arith.constant 0 : index
    %39 = vector.load %arg5[%38, %c0_16, %c0_17] : memref<8x2x32xf32, #tpu.memory_space<vmem>>, vector<1x2x32xf32>
    %40 = vector.shape_cast %39 : vector<1x2x32xf32> to vector<2x32xf32>
    %41 = vector.shape_cast %35 : vector<2x32xf32> to vector<1x2x32xf32>
    tpu.vector_store %arg5[%38, %c0_16, %c0_17], %41 {strides = array<i32>} : memref<8x2x32xf32, #tpu.memory_space<vmem>>, vector<1x2x32xf32>,
    %c7_i32 = arith.constant 7 : i32
    %42 = arith.subi %c7_i32, %c0_i32_1 : i32
    %43 = arith.index_cast %42 : i32 to index
    %c0_18 = arith.constant 0 : index
    %c0_19 = arith.constant 0 : index
    %44 = vector.load %arg2[%43, %c0_18, %c0_19] : memref<8x2x128xf32, #tpu.memory_space<vmem>>, vector<1x2x128xf32>
    %45 = vector.shape_cast %44 : vector<1x2x128xf32> to vector<2x128xf32>
    %c0_20 = arith.constant 0 : index
    %c0_21 = arith.constant 0 : index
    %46 = vector.load %arg9[%c0_20, %c0_21] : memref<2x32xf32, #tpu.memory_space<vmem>>, vector<2x32xf32>
    %c0_22 = arith.constant 0 : index
    %c0_23 = arith.constant 0 : index
    %47 = vector.load %arg10[%c0_22, %c0_23] : memref<2x32xf32, #tpu.memory_space<vmem>>, vector<2x32xf32>
    %c0_24 = arith.constant 0 : index
    %c0_25 = arith.constant 0 : index
    %48 = vector.load %arg4[%c0_24, %c0_25] : memref<32x128xf32, #tpu.memory_space<vmem>>, vector<32x128xf32>
    %cst_26 = arith.constant dense<0.000000e+00> : vector<2x128xf32>
    %49 = tpu.matmul %46, %48, %cst_26 {dimension_numbers = #tpu.dot_dimension_numbers<[1], [0], [0], [1], [0, 0, 1, 1], [], []>} : vector<2x32xf32>, vector<32x128xf32>, vector<2x128xf32> -> vector<2x128xf32>
    %50 = arith.addf %45, %49 : vector<2x128xf32>
    %51 = vector.extract_strided_slice %50 {offsets = [0, 0], sizes = [2, 32], strides = [1, 1]} : vector<2x128xf32> to vector<2x32xf32>
    %52 = arith.negf %51 : vector<2x32xf32>
    %53 = math.exp %52 : vector<2x32xf32>
    %cst_27 = arith.constant 1.000000e+00 : f32
    %54 = vector.broadcast %cst_27 : f32 to vector<2x32xf32>
    %55 = arith.addf %54, %53 : vector<2x32xf32>
    %56 = arith.divf %54, %55 : vector<2x32xf32>
    %57 = vector.extract_strided_slice %50 {offsets = [0, 32], sizes = [2, 32], strides = [1, 1]} : vector<2x128xf32> to vector<2x32xf32>
    %58 = arith.negf %57 : vector<2x32xf32>
    %59 = math.exp %58 : vector<2x32xf32>
    %cst_28 = arith.constant 1.000000e+00 : f32
    %60 = vector.broadcast %cst_28 : f32 to vector<2x32xf32>
    %61 = arith.addf %60, %59 : vector<2x32xf32>
    %62 = arith.divf %60, %61 : vector<2x32xf32>
    %63 = vector.extract_strided_slice %50 {offsets = [0, 64], sizes = [2, 32], strides = [1, 1]} : vector<2x128xf32> to vector<2x32xf32>
    %64 = math.tanh %63 : vector<2x32xf32>
    %65 = vector.extract_strided_slice %50 {offsets = [0, 96], sizes = [2, 32], strides = [1, 1]} : vector<2x128xf32> to vector<2x32xf32>
    %66 = arith.negf %65 : vector<2x32xf32>
    %67 = math.exp %66 : vector<2x32xf32>
    %cst_29 = arith.constant 1.000000e+00 : f32
    %68 = vector.broadcast %cst_29 : f32 to vector<2x32xf32>
    %69 = arith.addf %68, %67 : vector<2x32xf32>
    %70 = arith.divf %68, %69 : vector<2x32xf32>
    %71 = arith.mulf %62, %47 : vector<2x32xf32>
    %72 = arith.mulf %56, %64 : vector<2x32xf32>
    %73 = arith.addf %71, %72 : vector<2x32xf32>
    %74 = math.tanh %73 : vector<2x32xf32>
    %75 = arith.mulf %70, %74 : vector<2x32xf32>
    %c0_30 = arith.constant 0 : index
    %c0_31 = arith.constant 0 : index
    %76 = vector.load %arg9[%c0_30, %c0_31] : memref<2x32xf32, #tpu.memory_space<vmem>>, vector<2x32xf32>
    tpu.vector_store %arg9[%c0_30, %c0_31], %75 {strides = array<i32>} : memref<2x32xf32, #tpu.memory_space<vmem>>, vector<2x32xf32>,
    %c0_32 = arith.constant 0 : index
    %c0_33 = arith.constant 0 : index
    %77 = vector.load %arg10[%c0_32, %c0_33] : memref<2x32xf32, #tpu.memory_space<vmem>>, vector<2x32xf32>
    tpu.vector_store %arg10[%c0_32, %c0_33], %73 {strides = array<i32>} : memref<2x32xf32, #tpu.memory_space<vmem>>, vector<2x32xf32>,
    %78 = arith.index_cast %42 : i32 to index
    %c0_34 = arith.constant 0 : index
    %c0_35 = arith.constant 0 : index
    %79 = vector.load %arg6[%78, %c0_34, %c0_35] : memref<8x2x32xf32, #tpu.memory_space<vmem>>, vector<1x2x32xf32>
    %80 = vector.shape_cast %79 : vector<1x2x32xf32> to vector<2x32xf32>
    %81 = vector.shape_cast %75 : vector<2x32xf32> to vector<1x2x32xf32>
    tpu.vector_store %arg6[%78, %c0_34, %c0_35], %81 {strides = array<i32>} : memref<8x2x32xf32, #tpu.memory_space<vmem>>, vector<1x2x32xf32>,
    %c1_i32 = arith.constant 1 : i32
    %82 = arith.index_cast %c1_i32 : i32 to index
    %c0_36 = arith.constant 0 : index
    %c0_37 = arith.constant 0 : index
    %83 = vector.load %arg1[%82, %c0_36, %c0_37] : memref<8x2x128xf32, #tpu.memory_space<vmem>>, vector<1x2x128xf32>
    %84 = vector.shape_cast %83 : vector<1x2x128xf32> to vector<2x128xf32>
    %c0_38 = arith.constant 0 : index
    %c0_39 = arith.constant 0 : index
    %85 = vector.load %arg7[%c0_38, %c0_39] : memref<2x32xf32, #tpu.memory_space<vmem>>, vector<2x32xf32>
    %c0_40 = arith.constant 0 : index
    %c0_41 = arith.constant 0 : index
    %86 = vector.load %arg8[%c0_40, %c0_41] : memref<2x32xf32, #tpu.memory_space<vmem>>, vector<2x32xf32>
    %c0_42 = arith.constant 0 : index
    %c0_43 = arith.constant 0 : index
    %87 = vector.load %arg3[%c0_42, %c0_43] : memref<32x128xf32, #tpu.memory_space<vmem>>, vector<32x128xf32>
    %cst_44 = arith.constant dense<0.000000e+00> : vector<2x128xf32>
    %88 = tpu.matmul %85, %87, %cst_44 {dimension_numbers = #tpu.dot_dimension_numbers<[1], [0], [0], [1], [0, 0, 1, 1], [], []>} : vector<2x32xf32>, vector<32x128xf32>, vector<2x128xf32> -> vector<2x128xf32>
    %89 = arith.addf %84, %88 : vector<2x128xf32>
    %90 = vector.extract_strided_slice %89 {offsets = [0, 0], sizes = [2, 32], strides = [1, 1]} : vector<2x128xf32> to vector<2x32xf32>
    %91 = arith.negf %90 : vector<2x32xf32>
    %92 = math.exp %91 : vector<2x32xf32>
    %cst_45 = arith.constant 1.000000e+00 : f32
    %93 = vector.broadcast %cst_45 : f32 to vector<2x32xf32>
    %94 = arith.addf %93, %92 : vector<2x32xf32>
    %95 = arith.divf %93, %94 : vector<2x32xf32>
    %96 = vector.extract_strided_slice %89 {offsets = [0, 32], sizes = [2, 32], strides = [1, 1]} : vector<2x128xf32> to vector<2x32xf32>
    %97 = arith.negf %96 : vector<2x32xf32>
    %98 = math.exp %97 : vector<2x32xf32>
    %cst_46 = arith.constant 1.000000e+00 : f32
    %99 = vector.broadcast %cst_46 : f32 to vector<2x32xf32>
    %100 = arith.addf %99, %98 : vector<2x32xf32>
    %101 = arith.divf %99, %100 : vector<2x32xf32>
    %102 = vector.extract_strided_slice %89 {offsets = [0, 64], sizes = [2, 32], strides = [1, 1]} : vector<2x128xf32> to vector<2x32xf32>
    %103 = math.tanh %102 : vector<2x32xf32>
    %104 = vector.extract_strided_slice %89 {offsets = [0, 96], sizes = [2, 32], strides = [1, 1]} : vector<2x128xf32> to vector<2x32xf32>
    %105 = arith.negf %104 : vector<2x32xf32>
    %106 = math.exp %105 : vector<2x32xf32>
    %cst_47 = arith.constant 1.000000e+00 : f32
    %107 = vector.broadcast %cst_47 : f32 to vector<2x32xf32>
    %108 = arith.addf %107, %106 : vector<2x32xf32>
    %109 = arith.divf %107, %108 : vector<2x32xf32>
    %110 = arith.mulf %101, %86 : vector<2x32xf32>
    %111 = arith.mulf %95, %103 : vector<2x32xf32>
    %112 = arith.addf %110, %111 : vector<2x32xf32>
    %113 = math.tanh %112 : vector<2x32xf32>
    %114 = arith.mulf %109, %113 : vector<2x32xf32>
    %c0_48 = arith.constant 0 : index
    %c0_49 = arith.constant 0 : index
    %115 = vector.load %arg7[%c0_48, %c0_49] : memref<2x32xf32, #tpu.memory_space<vmem>>, vector<2x32xf32>
    tpu.vector_store %arg7[%c0_48, %c0_49], %114 {strides = array<i32>} : memref<2x32xf32, #tpu.memory_space<vmem>>, vector<2x32xf32>,
    %c0_50 = arith.constant 0 : index
    %c0_51 = arith.constant 0 : index
    %116 = vector.load %arg8[%c0_50, %c0_51] : memref<2x32xf32, #tpu.memory_space<vmem>>, vector<2x32xf32>
    tpu.vector_store %arg8[%c0_50, %c0_51], %112 {strides = array<i32>} : memref<2x32xf32, #tpu.memory_space<vmem>>, vector<2x32xf32>,
    %117 = arith.index_cast %c1_i32 : i32 to index
    %c0_52 = arith.constant 0 : index
    %c0_53 = arith.constant 0 : index
    %118 = vector.load %arg5[%117, %c0_52, %c0_53] : memref<8x2x32xf32, #tpu.memory_space<vmem>>, vector<1x2x32xf32>
    %119 = vector.shape_cast %118 : vector<1x2x32xf32> to vector<2x32xf32>
    %120 = vector.shape_cast %114 : vector<2x32xf32> to vector<1x2x32xf32>
    tpu.vector_store %arg5[%117, %c0_52, %c0_53], %120 {strides = array<i32>} : memref<8x2x32xf32, #tpu.memory_space<vmem>>, vector<1x2x32xf32>,
    %c7_i32_54 = arith.constant 7 : i32
    %121 = arith.subi %c7_i32_54, %c1_i32 : i32
    %122 = arith.index_cast %121 : i32 to index
    %c0_55 = arith.constant 0 : index
    %c0_56 = arith.constant 0 : index
    %123 = vector.load %arg2[%122, %c0_55, %c0_56] : memref<8x2x128xf32, #tpu.memory_space<vmem>>, vector<1x2x128xf32>
    %124 = vector.shape_cast %123 : vector<1x2x128xf32> to vector<2x128xf32>
    %c0_57 = arith.constant 0 : index
    %c0_58 = arith.constant 0 : index
    %125 = vector.load %arg9[%c0_57, %c0_58] : memref<2x32xf32, #tpu.memory_space<vmem>>, vector<2x32xf32>
    %c0_59 = arith.constant 0 : index
    %c0_60 = arith.constant 0 : index
    %126 = vector.load %arg10[%c0_59, %c0_60] : memref<2x32xf32, #tpu.memory_space<vmem>>, vector<2x32xf32>
    %c0_61 = arith.constant 0 : index
    %c0_62 = arith.constant 0 : index
    %127 = vector.load %arg4[%c0_61, %c0_62] : memref<32x128xf32, #tpu.memory_space<vmem>>, vector<32x128xf32>
    %cst_63 = arith.constant dense<0.000000e+00> : vector<2x128xf32>
    %128 = tpu.matmul %125, %127, %cst_63 {dimension_numbers = #tpu.dot_dimension_numbers<[1], [0], [0], [1], [0, 0, 1, 1], [], []>} : vector<2x32xf32>, vector<32x128xf32>, vector<2x128xf32> -> vector<2x128xf32>
    %129 = arith.addf %124, %128 : vector<2x128xf32>
    %130 = vector.extract_strided_slice %129 {offsets = [0, 0], sizes = [2, 32], strides = [1, 1]} : vector<2x128xf32> to vector<2x32xf32>
    %131 = arith.negf %130 : vector<2x32xf32>
    %132 = math.exp %131 : vector<2x32xf32>
    %cst_64 = arith.constant 1.000000e+00 : f32
    %133 = vector.broadcast %cst_64 : f32 to vector<2x32xf32>
    %134 = arith.addf %133, %132 : vector<2x32xf32>
    %135 = arith.divf %133, %134 : vector<2x32xf32>
    %136 = vector.extract_strided_slice %129 {offsets = [0, 32], sizes = [2, 32], strides = [1, 1]} : vector<2x128xf32> to vector<2x32xf32>
    %137 = arith.negf %136 : vector<2x32xf32>
    %138 = math.exp %137 : vector<2x32xf32>
    %cst_65 = arith.constant 1.000000e+00 : f32
    %139 = vector.broadcast %cst_65 : f32 to vector<2x32xf32>
    %140 = arith.addf %139, %138 : vector<2x32xf32>
    %141 = arith.divf %139, %140 : vector<2x32xf32>
    %142 = vector.extract_strided_slice %129 {offsets = [0, 64], sizes = [2, 32], strides = [1, 1]} : vector<2x128xf32> to vector<2x32xf32>
    %143 = math.tanh %142 : vector<2x32xf32>
    %144 = vector.extract_strided_slice %129 {offsets = [0, 96], sizes = [2, 32], strides = [1, 1]} : vector<2x128xf32> to vector<2x32xf32>
    %145 = arith.negf %144 : vector<2x32xf32>
    %146 = math.exp %145 : vector<2x32xf32>
    %cst_66 = arith.constant 1.000000e+00 : f32
    %147 = vector.broadcast %cst_66 : f32 to vector<2x32xf32>
    %148 = arith.addf %147, %146 : vector<2x32xf32>
    %149 = arith.divf %147, %148 : vector<2x32xf32>
    %150 = arith.mulf %141, %126 : vector<2x32xf32>
    %151 = arith.mulf %135, %143 : vector<2x32xf32>
    %152 = arith.addf %150, %151 : vector<2x32xf32>
    %153 = math.tanh %152 : vector<2x32xf32>
    %154 = arith.mulf %149, %153 : vector<2x32xf32>
    %c0_67 = arith.constant 0 : index
    %c0_68 = arith.constant 0 : index
    %155 = vector.load %arg9[%c0_67, %c0_68] : memref<2x32xf32, #tpu.memory_space<vmem>>, vector<2x32xf32>
    tpu.vector_store %arg9[%c0_67, %c0_68], %154 {strides = array<i32>} : memref<2x32xf32, #tpu.memory_space<vmem>>, vector<2x32xf32>,
    %c0_69 = arith.constant 0 : index
    %c0_70 = arith.constant 0 : index
    %156 = vector.load %arg10[%c0_69, %c0_70] : memref<2x32xf32, #tpu.memory_space<vmem>>, vector<2x32xf32>
    tpu.vector_store %arg10[%c0_69, %c0_70], %152 {strides = array<i32>} : memref<2x32xf32, #tpu.memory_space<vmem>>, vector<2x32xf32>,
    %157 = arith.index_cast %121 : i32 to index
    %c0_71 = arith.constant 0 : index
    %c0_72 = arith.constant 0 : index
    %158 = vector.load %arg6[%157, %c0_71, %c0_72] : memref<8x2x32xf32, #tpu.memory_space<vmem>>, vector<1x2x32xf32>
    %159 = vector.shape_cast %158 : vector<1x2x32xf32> to vector<2x32xf32>
    %160 = vector.shape_cast %154 : vector<2x32xf32> to vector<1x2x32xf32>
    tpu.vector_store %arg6[%157, %c0_71, %c0_72], %160 {strides = array<i32>} : memref<8x2x32xf32, #tpu.memory_space<vmem>>, vector<1x2x32xf32>,
    %c2_i32 = arith.constant 2 : i32
    %161 = arith.index_cast %c2_i32 : i32 to index
    %c0_73 = arith.constant 0 : index
    %c0_74 = arith.constant 0 : index
    %162 = vector.load %arg1[%161, %c0_73, %c0_74] : memref<8x2x128xf32, #tpu.memory_space<vmem>>, vector<1x2x128xf32>
    %163 = vector.shape_cast %162 : vector<1x2x128xf32> to vector<2x128xf32>
    %c0_75 = arith.constant 0 : index
    %c0_76 = arith.constant 0 : index
    %164 = vector.load %arg7[%c0_75, %c0_76] : memref<2x32xf32, #tpu.memory_space<vmem>>, vector<2x32xf32>
    %c0_77 = arith.constant 0 : index
    %c0_78 = arith.constant 0 : index
    %165 = vector.load %arg8[%c0_77, %c0_78] : memref<2x32xf32, #tpu.memory_space<vmem>>, vector<2x32xf32>
    %c0_79 = arith.constant 0 : index
    %c0_80 = arith.constant 0 : index
    %166 = vector.load %arg3[%c0_79, %c0_80] : memref<32x128xf32, #tpu.memory_space<vmem>>, vector<32x128xf32>
    %cst_81 = arith.constant dense<0.000000e+00> : vector<2x128xf32>
    %167 = tpu.matmul %164, %166, %cst_81 {dimension_numbers = #tpu.dot_dimension_numbers<[1], [0], [0], [1], [0, 0, 1, 1], [], []>} : vector<2x32xf32>, vector<32x128xf32>, vector<2x128xf32> -> vector<2x128xf32>
    %168 = arith.addf %163, %167 : vector<2x128xf32>
    %169 = vector.extract_strided_slice %168 {offsets = [0, 0], sizes = [2, 32], strides = [1, 1]} : vector<2x128xf32> to vector<2x32xf32>
    %170 = arith.negf %169 : vector<2x32xf32>
    %171 = math.exp %170 : vector<2x32xf32>
    %cst_82 = arith.constant 1.000000e+00 : f32
    %172 = vector.broadcast %cst_82 : f32 to vector<2x32xf32>
    %173 = arith.addf %172, %171 : vector<2x32xf32>
    %174 = arith.divf %172, %173 : vector<2x32xf32>
    %175 = vector.extract_strided_slice %168 {offsets = [0, 32], sizes = [2, 32], strides = [1, 1]} : vector<2x128xf32> to vector<2x32xf32>
    %176 = arith.negf %175 : vector<2x32xf32>
    %177 = math.exp %176 : vector<2x32xf32>
    %cst_83 = arith.constant 1.000000e+00 : f32
    %178 = vector.broadcast %cst_83 : f32 to vector<2x32xf32>
    %179 = arith.addf %178, %177 : vector<2x32xf32>
    %180 = arith.divf %178, %179 : vector<2x32xf32>
    %181 = vector.extract_strided_slice %168 {offsets = [0, 64], sizes = [2, 32], strides = [1, 1]} : vector<2x128xf32> to vector<2x32xf32>
    %182 = math.tanh %181 : vector<2x32xf32>
    %183 = vector.extract_strided_slice %168 {offsets = [0, 96], sizes = [2, 32], strides = [1, 1]} : vector<2x128xf32> to vector<2x32xf32>
    %184 = arith.negf %183 : vector<2x32xf32>
    %185 = math.exp %184 : vector<2x32xf32>
    %cst_84 = arith.constant 1.000000e+00 : f32
    %186 = vector.broadcast %cst_84 : f32 to vector<2x32xf32>
    %187 = arith.addf %186, %185 : vector<2x32xf32>
    %188 = arith.divf %186, %187 : vector<2x32xf32>
    %189 = arith.mulf %180, %165 : vector<2x32xf32>
    %190 = arith.mulf %174, %182 : vector<2x32xf32>
    %191 = arith.addf %189, %190 : vector<2x32xf32>
    %192 = math.tanh %191 : vector<2x32xf32>
    %193 = arith.mulf %188, %192 : vector<2x32xf32>
    %c0_85 = arith.constant 0 : index
    %c0_86 = arith.constant 0 : index
    %194 = vector.load %arg7[%c0_85, %c0_86] : memref<2x32xf32, #tpu.memory_space<vmem>>, vector<2x32xf32>
    tpu.vector_store %arg7[%c0_85, %c0_86], %193 {strides = array<i32>} : memref<2x32xf32, #tpu.memory_space<vmem>>, vector<2x32xf32>,
    %c0_87 = arith.constant 0 : index
    %c0_88 = arith.constant 0 : index
    %195 = vector.load %arg8[%c0_87, %c0_88] : memref<2x32xf32, #tpu.memory_space<vmem>>, vector<2x32xf32>
    tpu.vector_store %arg8[%c0_87, %c0_88], %191 {strides = array<i32>} : memref<2x32xf32, #tpu.memory_space<vmem>>, vector<2x32xf32>,
    %196 = arith.index_cast %c2_i32 : i32 to index
    %c0_89 = arith.constant 0 : index
    %c0_90 = arith.constant 0 : index
    %197 = vector.load %arg5[%196, %c0_89, %c0_90] : memref<8x2x32xf32, #tpu.memory_space<vmem>>, vector<1x2x32xf32>
    %198 = vector.shape_cast %197 : vector<1x2x32xf32> to vector<2x32xf32>
    %199 = vector.shape_cast %193 : vector<2x32xf32> to vector<1x2x32xf32>
    tpu.vector_store %arg5[%196, %c0_89, %c0_90], %199 {strides = array<i32>} : memref<8x2x32xf32, #tpu.memory_space<vmem>>, vector<1x2x32xf32>,
    %c7_i32_91 = arith.constant 7 : i32
    %200 = arith.subi %c7_i32_91, %c2_i32 : i32
    %201 = arith.index_cast %200 : i32 to index
    %c0_92 = arith.constant 0 : index
    %c0_93 = arith.constant 0 : index
    %202 = vector.load %arg2[%201, %c0_92, %c0_93] : memref<8x2x128xf32, #tpu.memory_space<vmem>>, vector<1x2x128xf32>
    %203 = vector.shape_cast %202 : vector<1x2x128xf32> to vector<2x128xf32>
    %c0_94 = arith.constant 0 : index
    %c0_95 = arith.constant 0 : index
    %204 = vector.load %arg9[%c0_94, %c0_95] : memref<2x32xf32, #tpu.memory_space<vmem>>, vector<2x32xf32>
    %c0_96 = arith.constant 0 : index
    %c0_97 = arith.constant 0 : index
    %205 = vector.load %arg10[%c0_96, %c0_97] : memref<2x32xf32, #tpu.memory_space<vmem>>, vector<2x32xf32>
    %c0_98 = arith.constant 0 : index
    %c0_99 = arith.constant 0 : index
    %206 = vector.load %arg4[%c0_98, %c0_99] : memref<32x128xf32, #tpu.memory_space<vmem>>, vector<32x128xf32>
    %cst_100 = arith.constant dense<0.000000e+00> : vector<2x128xf32>
    %207 = tpu.matmul %204, %206, %cst_100 {dimension_numbers = #tpu.dot_dimension_numbers<[1], [0], [0], [1], [0, 0, 1, 1], [], []>} : vector<2x32xf32>, vector<32x128xf32>, vector<2x128xf32> -> vector<2x128xf32>
    %208 = arith.addf %203, %207 : vector<2x128xf32>
    %209 = vector.extract_strided_slice %208 {offsets = [0, 0], sizes = [2, 32], strides = [1, 1]} : vector<2x128xf32> to vector<2x32xf32>
    %210 = arith.negf %209 : vector<2x32xf32>
    %211 = math.exp %210 : vector<2x32xf32>
    %cst_101 = arith.constant 1.000000e+00 : f32
    %212 = vector.broadcast %cst_101 : f32 to vector<2x32xf32>
    %213 = arith.addf %212, %211 : vector<2x32xf32>
    %214 = arith.divf %212, %213 : vector<2x32xf32>
    %215 = vector.extract_strided_slice %208 {offsets = [0, 32], sizes = [2, 32], strides = [1, 1]} : vector<2x128xf32> to vector<2x32xf32>
    %216 = arith.negf %215 : vector<2x32xf32>
    %217 = math.exp %216 : vector<2x32xf32>
    %cst_102 = arith.constant 1.000000e+00 : f32
    %218 = vector.broadcast %cst_102 : f32 to vector<2x32xf32>
    %219 = arith.addf %218, %217 : vector<2x32xf32>
    %220 = arith.divf %218, %219 : vector<2x32xf32>
    %221 = vector.extract_strided_slice %208 {offsets = [0, 64], sizes = [2, 32], strides = [1, 1]} : vector<2x128xf32> to vector<2x32xf32>
    %222 = math.tanh %221 : vector<2x32xf32>
    %223 = vector.extract_strided_slice %208 {offsets = [0, 96], sizes = [2, 32], strides = [1, 1]} : vector<2x128xf32> to vector<2x32xf32>
    %224 = arith.negf %223 : vector<2x32xf32>
    %225 = math.exp %224 : vector<2x32xf32>
    %cst_103 = arith.constant 1.000000e+00 : f32
    %226 = vector.broadcast %cst_103 : f32 to vector<2x32xf32>
    %227 = arith.addf %226, %225 : vector<2x32xf32>
    %228 = arith.divf %226, %227 : vector<2x32xf32>
    %229 = arith.mulf %220, %205 : vector<2x32xf32>
    %230 = arith.mulf %214, %222 : vector<2x32xf32>
    %231 = arith.addf %229, %230 : vector<2x32xf32>
    %232 = math.tanh %231 : vector<2x32xf32>
    %233 = arith.mulf %228, %232 : vector<2x32xf32>
    %c0_104 = arith.constant 0 : index
    %c0_105 = arith.constant 0 : index
    %234 = vector.load %arg9[%c0_104, %c0_105] : memref<2x32xf32, #tpu.memory_space<vmem>>, vector<2x32xf32>
    tpu.vector_store %arg9[%c0_104, %c0_105], %233 {strides = array<i32>} : memref<2x32xf32, #tpu.memory_space<vmem>>, vector<2x32xf32>,
    %c0_106 = arith.constant 0 : index
    %c0_107 = arith.constant 0 : index
    %235 = vector.load %arg10[%c0_106, %c0_107] : memref<2x32xf32, #tpu.memory_space<vmem>>, vector<2x32xf32>
    tpu.vector_store %arg10[%c0_106, %c0_107], %231 {strides = array<i32>} : memref<2x32xf32, #tpu.memory_space<vmem>>, vector<2x32xf32>,
    %236 = arith.index_cast %200 : i32 to index
    %c0_108 = arith.constant 0 : index
    %c0_109 = arith.constant 0 : index
    %237 = vector.load %arg6[%236, %c0_108, %c0_109] : memref<8x2x32xf32, #tpu.memory_space<vmem>>, vector<1x2x32xf32>
    %238 = vector.shape_cast %237 : vector<1x2x32xf32> to vector<2x32xf32>
    %239 = vector.shape_cast %233 : vector<2x32xf32> to vector<1x2x32xf32>
    tpu.vector_store %arg6[%236, %c0_108, %c0_109], %239 {strides = array<i32>} : memref<8x2x32xf32, #tpu.memory_space<vmem>>, vector<1x2x32xf32>,
    %c3_i32 = arith.constant 3 : i32
    %240 = arith.index_cast %c3_i32 : i32 to index
    %c0_110 = arith.constant 0 : index
    %c0_111 = arith.constant 0 : index
    %241 = vector.load %arg1[%240, %c0_110, %c0_111] : memref<8x2x128xf32, #tpu.memory_space<vmem>>, vector<1x2x128xf32>
    %242 = vector.shape_cast %241 : vector<1x2x128xf32> to vector<2x128xf32>
    %c0_112 = arith.constant 0 : index
    %c0_113 = arith.constant 0 : index
    %243 = vector.load %arg7[%c0_112, %c0_113] : memref<2x32xf32, #tpu.memory_space<vmem>>, vector<2x32xf32>
    %c0_114 = arith.constant 0 : index
    %c0_115 = arith.constant 0 : index
    %244 = vector.load %arg8[%c0_114, %c0_115] : memref<2x32xf32, #tpu.memory_space<vmem>>, vector<2x32xf32>
    %c0_116 = arith.constant 0 : index
    %c0_117 = arith.constant 0 : index
    %245 = vector.load %arg3[%c0_116, %c0_117] : memref<32x128xf32, #tpu.memory_space<vmem>>, vector<32x128xf32>
    %cst_118 = arith.constant dense<0.000000e+00> : vector<2x128xf32>
    %246 = tpu.matmul %243, %245, %cst_118 {dimension_numbers = #tpu.dot_dimension_numbers<[1], [0], [0], [1], [0, 0, 1, 1], [], []>} : vector<2x32xf32>, vector<32x128xf32>, vector<2x128xf32> -> vector<2x128xf32>
    %247 = arith.addf %242, %246 : vector<2x128xf32>
    %248 = vector.extract_strided_slice %247 {offsets = [0, 0], sizes = [2, 32], strides = [1, 1]} : vector<2x128xf32> to vector<2x32xf32>
    %249 = arith.negf %248 : vector<2x32xf32>
    %250 = math.exp %249 : vector<2x32xf32>
    %cst_119 = arith.constant 1.000000e+00 : f32
    %251 = vector.broadcast %cst_119 : f32 to vector<2x32xf32>
    %252 = arith.addf %251, %250 : vector<2x32xf32>
    %253 = arith.divf %251, %252 : vector<2x32xf32>
    %254 = vector.extract_strided_slice %247 {offsets = [0, 32], sizes = [2, 32], strides = [1, 1]} : vector<2x128xf32> to vector<2x32xf32>
    %255 = arith.negf %254 : vector<2x32xf32>
    %256 = math.exp %255 : vector<2x32xf32>
    %cst_120 = arith.constant 1.000000e+00 : f32
    %257 = vector.broadcast %cst_120 : f32 to vector<2x32xf32>
    %258 = arith.addf %257, %256 : vector<2x32xf32>
    %259 = arith.divf %257, %258 : vector<2x32xf32>
    %260 = vector.extract_strided_slice %247 {offsets = [0, 64], sizes = [2, 32], strides = [1, 1]} : vector<2x128xf32> to vector<2x32xf32>
    %261 = math.tanh %260 : vector<2x32xf32>
    %262 = vector.extract_strided_slice %247 {offsets = [0, 96], sizes = [2, 32], strides = [1, 1]} : vector<2x128xf32> to vector<2x32xf32>
    %263 = arith.negf %262 : vector<2x32xf32>
    %264 = math.exp %263 : vector<2x32xf32>
    %cst_121 = arith.constant 1.000000e+00 : f32
    %265 = vector.broadcast %cst_121 : f32 to vector<2x32xf32>
    %266 = arith.addf %265, %264 : vector<2x32xf32>
    %267 = arith.divf %265, %266 : vector<2x32xf32>
    %268 = arith.mulf %259, %244 : vector<2x32xf32>
    %269 = arith.mulf %253, %261 : vector<2x32xf32>
    %270 = arith.addf %268, %269 : vector<2x32xf32>
    %271 = math.tanh %270 : vector<2x32xf32>
    %272 = arith.mulf %267, %271 : vector<2x32xf32>
    %c0_122 = arith.constant 0 : index
    %c0_123 = arith.constant 0 : index
    %273 = vector.load %arg7[%c0_122, %c0_123] : memref<2x32xf32, #tpu.memory_space<vmem>>, vector<2x32xf32>
    tpu.vector_store %arg7[%c0_122, %c0_123], %272 {strides = array<i32>} : memref<2x32xf32, #tpu.memory_space<vmem>>, vector<2x32xf32>,
    %c0_124 = arith.constant 0 : index
    %c0_125 = arith.constant 0 : index
    %274 = vector.load %arg8[%c0_124, %c0_125] : memref<2x32xf32, #tpu.memory_space<vmem>>, vector<2x32xf32>
    tpu.vector_store %arg8[%c0_124, %c0_125], %270 {strides = array<i32>} : memref<2x32xf32, #tpu.memory_space<vmem>>, vector<2x32xf32>,
    %275 = arith.index_cast %c3_i32 : i32 to index
    %c0_126 = arith.constant 0 : index
    %c0_127 = arith.constant 0 : index
    %276 = vector.load %arg5[%275, %c0_126, %c0_127] : memref<8x2x32xf32, #tpu.memory_space<vmem>>, vector<1x2x32xf32>
    %277 = vector.shape_cast %276 : vector<1x2x32xf32> to vector<2x32xf32>
    %278 = vector.shape_cast %272 : vector<2x32xf32> to vector<1x2x32xf32>
    tpu.vector_store %arg5[%275, %c0_126, %c0_127], %278 {strides = array<i32>} : memref<8x2x32xf32, #tpu.memory_space<vmem>>, vector<1x2x32xf32>,
    %c7_i32_128 = arith.constant 7 : i32
    %279 = arith.subi %c7_i32_128, %c3_i32 : i32
    %280 = arith.index_cast %279 : i32 to index
    %c0_129 = arith.constant 0 : index
    %c0_130 = arith.constant 0 : index
    %281 = vector.load %arg2[%280, %c0_129, %c0_130] : memref<8x2x128xf32, #tpu.memory_space<vmem>>, vector<1x2x128xf32>
    %282 = vector.shape_cast %281 : vector<1x2x128xf32> to vector<2x128xf32>
    %c0_131 = arith.constant 0 : index
    %c0_132 = arith.constant 0 : index
    %283 = vector.load %arg9[%c0_131, %c0_132] : memref<2x32xf32, #tpu.memory_space<vmem>>, vector<2x32xf32>
    %c0_133 = arith.constant 0 : index
    %c0_134 = arith.constant 0 : index
    %284 = vector.load %arg10[%c0_133, %c0_134] : memref<2x32xf32, #tpu.memory_space<vmem>>, vector<2x32xf32>
    %c0_135 = arith.constant 0 : index
    %c0_136 = arith.constant 0 : index
    %285 = vector.load %arg4[%c0_135, %c0_136] : memref<32x128xf32, #tpu.memory_space<vmem>>, vector<32x128xf32>
    %cst_137 = arith.constant dense<0.000000e+00> : vector<2x128xf32>
    %286 = tpu.matmul %283, %285, %cst_137 {dimension_numbers = #tpu.dot_dimension_numbers<[1], [0], [0], [1], [0, 0, 1, 1], [], []>} : vector<2x32xf32>, vector<32x128xf32>, vector<2x128xf32> -> vector<2x128xf32>
    %287 = arith.addf %282, %286 : vector<2x128xf32>
    %288 = vector.extract_strided_slice %287 {offsets = [0, 0], sizes = [2, 32], strides = [1, 1]} : vector<2x128xf32> to vector<2x32xf32>
    %289 = arith.negf %288 : vector<2x32xf32>
    %290 = math.exp %289 : vector<2x32xf32>
    %cst_138 = arith.constant 1.000000e+00 : f32
    %291 = vector.broadcast %cst_138 : f32 to vector<2x32xf32>
    %292 = arith.addf %291, %290 : vector<2x32xf32>
    %293 = arith.divf %291, %292 : vector<2x32xf32>
    %294 = vector.extract_strided_slice %287 {offsets = [0, 32], sizes = [2, 32], strides = [1, 1]} : vector<2x128xf32> to vector<2x32xf32>
    %295 = arith.negf %294 : vector<2x32xf32>
    %296 = math.exp %295 : vector<2x32xf32>
    %cst_139 = arith.constant 1.000000e+00 : f32
    %297 = vector.broadcast %cst_139 : f32 to vector<2x32xf32>
    %298 = arith.addf %297, %296 : vector<2x32xf32>
    %299 = arith.divf %297, %298 : vector<2x32xf32>
    %300 = vector.extract_strided_slice %287 {offsets = [0, 64], sizes = [2, 32], strides = [1, 1]} : vector<2x128xf32> to vector<2x32xf32>
    %301 = math.tanh %300 : vector<2x32xf32>
    %302 = vector.extract_strided_slice %287 {offsets = [0, 96], sizes = [2, 32], strides = [1, 1]} : vector<2x128xf32> to vector<2x32xf32>
    %303 = arith.negf %302 : vector<2x32xf32>
    %304 = math.exp %303 : vector<2x32xf32>
    %cst_140 = arith.constant 1.000000e+00 : f32
    %305 = vector.broadcast %cst_140 : f32 to vector<2x32xf32>
    %306 = arith.addf %305, %304 : vector<2x32xf32>
    %307 = arith.divf %305, %306 : vector<2x32xf32>
    %308 = arith.mulf %299, %284 : vector<2x32xf32>
    %309 = arith.mulf %293, %301 : vector<2x32xf32>
    %310 = arith.addf %308, %309 : vector<2x32xf32>
    %311 = math.tanh %310 : vector<2x32xf32>
    %312 = arith.mulf %307, %311 : vector<2x32xf32>
    %c0_141 = arith.constant 0 : index
    %c0_142 = arith.constant 0 : index
    %313 = vector.load %arg9[%c0_141, %c0_142] : memref<2x32xf32, #tpu.memory_space<vmem>>, vector<2x32xf32>
    tpu.vector_store %arg9[%c0_141, %c0_142], %312 {strides = array<i32>} : memref<2x32xf32, #tpu.memory_space<vmem>>, vector<2x32xf32>,
    %c0_143 = arith.constant 0 : index
    %c0_144 = arith.constant 0 : index
    %314 = vector.load %arg10[%c0_143, %c0_144] : memref<2x32xf32, #tpu.memory_space<vmem>>, vector<2x32xf32>
    tpu.vector_store %arg10[%c0_143, %c0_144], %310 {strides = array<i32>} : memref<2x32xf32, #tpu.memory_space<vmem>>, vector<2x32xf32>,
    %315 = arith.index_cast %279 : i32 to index
    %c0_145 = arith.constant 0 : index
    %c0_146 = arith.constant 0 : index
    %316 = vector.load %arg6[%315, %c0_145, %c0_146] : memref<8x2x32xf32, #tpu.memory_space<vmem>>, vector<1x2x32xf32>
    %317 = vector.shape_cast %316 : vector<1x2x32xf32> to vector<2x32xf32>
    %318 = vector.shape_cast %312 : vector<2x32xf32> to vector<1x2x32xf32>
    tpu.vector_store %arg6[%315, %c0_145, %c0_146], %318 {strides = array<i32>} : memref<8x2x32xf32, #tpu.memory_space<vmem>>, vector<1x2x32xf32>,
    %c4_i32 = arith.constant 4 : i32
    %319 = arith.index_cast %c4_i32 : i32 to index
    %c0_147 = arith.constant 0 : index
    %c0_148 = arith.constant 0 : index
    %320 = vector.load %arg1[%319, %c0_147, %c0_148] : memref<8x2x128xf32, #tpu.memory_space<vmem>>, vector<1x2x128xf32>
    %321 = vector.shape_cast %320 : vector<1x2x128xf32> to vector<2x128xf32>
    %c0_149 = arith.constant 0 : index
    %c0_150 = arith.constant 0 : index
    %322 = vector.load %arg7[%c0_149, %c0_150] : memref<2x32xf32, #tpu.memory_space<vmem>>, vector<2x32xf32>
    %c0_151 = arith.constant 0 : index
    %c0_152 = arith.constant 0 : index
    %323 = vector.load %arg8[%c0_151, %c0_152] : memref<2x32xf32, #tpu.memory_space<vmem>>, vector<2x32xf32>
    %c0_153 = arith.constant 0 : index
    %c0_154 = arith.constant 0 : index
    %324 = vector.load %arg3[%c0_153, %c0_154] : memref<32x128xf32, #tpu.memory_space<vmem>>, vector<32x128xf32>
    %cst_155 = arith.constant dense<0.000000e+00> : vector<2x128xf32>
    %325 = tpu.matmul %322, %324, %cst_155 {dimension_numbers = #tpu.dot_dimension_numbers<[1], [0], [0], [1], [0, 0, 1, 1], [], []>} : vector<2x32xf32>, vector<32x128xf32>, vector<2x128xf32> -> vector<2x128xf32>
    %326 = arith.addf %321, %325 : vector<2x128xf32>
    %327 = vector.extract_strided_slice %326 {offsets = [0, 0], sizes = [2, 32], strides = [1, 1]} : vector<2x128xf32> to vector<2x32xf32>
    %328 = arith.negf %327 : vector<2x32xf32>
    %329 = math.exp %328 : vector<2x32xf32>
    %cst_156 = arith.constant 1.000000e+00 : f32
    %330 = vector.broadcast %cst_156 : f32 to vector<2x32xf32>
    %331 = arith.addf %330, %329 : vector<2x32xf32>
    %332 = arith.divf %330, %331 : vector<2x32xf32>
    %333 = vector.extract_strided_slice %326 {offsets = [0, 32], sizes = [2, 32], strides = [1, 1]} : vector<2x128xf32> to vector<2x32xf32>
    %334 = arith.negf %333 : vector<2x32xf32>
    %335 = math.exp %334 : vector<2x32xf32>
    %cst_157 = arith.constant 1.000000e+00 : f32
    %336 = vector.broadcast %cst_157 : f32 to vector<2x32xf32>
    %337 = arith.addf %336, %335 : vector<2x32xf32>
    %338 = arith.divf %336, %337 : vector<2x32xf32>
    %339 = vector.extract_strided_slice %326 {offsets = [0, 64], sizes = [2, 32], strides = [1, 1]} : vector<2x128xf32> to vector<2x32xf32>
    %340 = math.tanh %339 : vector<2x32xf32>
    %341 = vector.extract_strided_slice %326 {offsets = [0, 96], sizes = [2, 32], strides = [1, 1]} : vector<2x128xf32> to vector<2x32xf32>
    %342 = arith.negf %341 : vector<2x32xf32>
    %343 = math.exp %342 : vector<2x32xf32>
    %cst_158 = arith.constant 1.000000e+00 : f32
    %344 = vector.broadcast %cst_158 : f32 to vector<2x32xf32>
    %345 = arith.addf %344, %343 : vector<2x32xf32>
    %346 = arith.divf %344, %345 : vector<2x32xf32>
    %347 = arith.mulf %338, %323 : vector<2x32xf32>
    %348 = arith.mulf %332, %340 : vector<2x32xf32>
    %349 = arith.addf %347, %348 : vector<2x32xf32>
    %350 = math.tanh %349 : vector<2x32xf32>
    %351 = arith.mulf %346, %350 : vector<2x32xf32>
    %c0_159 = arith.constant 0 : index
    %c0_160 = arith.constant 0 : index
    %352 = vector.load %arg7[%c0_159, %c0_160] : memref<2x32xf32, #tpu.memory_space<vmem>>, vector<2x32xf32>
    tpu.vector_store %arg7[%c0_159, %c0_160], %351 {strides = array<i32>} : memref<2x32xf32, #tpu.memory_space<vmem>>, vector<2x32xf32>,
    %c0_161 = arith.constant 0 : index
    %c0_162 = arith.constant 0 : index
    %353 = vector.load %arg8[%c0_161, %c0_162] : memref<2x32xf32, #tpu.memory_space<vmem>>, vector<2x32xf32>
    tpu.vector_store %arg8[%c0_161, %c0_162], %349 {strides = array<i32>} : memref<2x32xf32, #tpu.memory_space<vmem>>, vector<2x32xf32>,
    %354 = arith.index_cast %c4_i32 : i32 to index
    %c0_163 = arith.constant 0 : index
    %c0_164 = arith.constant 0 : index
    %355 = vector.load %arg5[%354, %c0_163, %c0_164] : memref<8x2x32xf32, #tpu.memory_space<vmem>>, vector<1x2x32xf32>
    %356 = vector.shape_cast %355 : vector<1x2x32xf32> to vector<2x32xf32>
    %357 = vector.shape_cast %351 : vector<2x32xf32> to vector<1x2x32xf32>
    tpu.vector_store %arg5[%354, %c0_163, %c0_164], %357 {strides = array<i32>} : memref<8x2x32xf32, #tpu.memory_space<vmem>>, vector<1x2x32xf32>,
    %c7_i32_165 = arith.constant 7 : i32
    %358 = arith.subi %c7_i32_165, %c4_i32 : i32
    %359 = arith.index_cast %358 : i32 to index
    %c0_166 = arith.constant 0 : index
    %c0_167 = arith.constant 0 : index
    %360 = vector.load %arg2[%359, %c0_166, %c0_167] : memref<8x2x128xf32, #tpu.memory_space<vmem>>, vector<1x2x128xf32>
    %361 = vector.shape_cast %360 : vector<1x2x128xf32> to vector<2x128xf32>
    %c0_168 = arith.constant 0 : index
    %c0_169 = arith.constant 0 : index
    %362 = vector.load %arg9[%c0_168, %c0_169] : memref<2x32xf32, #tpu.memory_space<vmem>>, vector<2x32xf32>
    %c0_170 = arith.constant 0 : index
    %c0_171 = arith.constant 0 : index
    %363 = vector.load %arg10[%c0_170, %c0_171] : memref<2x32xf32, #tpu.memory_space<vmem>>, vector<2x32xf32>
    %c0_172 = arith.constant 0 : index
    %c0_173 = arith.constant 0 : index
    %364 = vector.load %arg4[%c0_172, %c0_173] : memref<32x128xf32, #tpu.memory_space<vmem>>, vector<32x128xf32>
    %cst_174 = arith.constant dense<0.000000e+00> : vector<2x128xf32>
    %365 = tpu.matmul %362, %364, %cst_174 {dimension_numbers = #tpu.dot_dimension_numbers<[1], [0], [0], [1], [0, 0, 1, 1], [], []>} : vector<2x32xf32>, vector<32x128xf32>, vector<2x128xf32> -> vector<2x128xf32>
    %366 = arith.addf %361, %365 : vector<2x128xf32>
    %367 = vector.extract_strided_slice %366 {offsets = [0, 0], sizes = [2, 32], strides = [1, 1]} : vector<2x128xf32> to vector<2x32xf32>
    %368 = arith.negf %367 : vector<2x32xf32>
    %369 = math.exp %368 : vector<2x32xf32>
    %cst_175 = arith.constant 1.000000e+00 : f32
    %370 = vector.broadcast %cst_175 : f32 to vector<2x32xf32>
    %371 = arith.addf %370, %369 : vector<2x32xf32>
    %372 = arith.divf %370, %371 : vector<2x32xf32>
    %373 = vector.extract_strided_slice %366 {offsets = [0, 32], sizes = [2, 32], strides = [1, 1]} : vector<2x128xf32> to vector<2x32xf32>
    %374 = arith.negf %373 : vector<2x32xf32>
    %375 = math.exp %374 : vector<2x32xf32>
    %cst_176 = arith.constant 1.000000e+00 : f32
    %376 = vector.broadcast %cst_176 : f32 to vector<2x32xf32>
    %377 = arith.addf %376, %375 : vector<2x32xf32>
    %378 = arith.divf %376, %377 : vector<2x32xf32>
    %379 = vector.extract_strided_slice %366 {offsets = [0, 64], sizes = [2, 32], strides = [1, 1]} : vector<2x128xf32> to vector<2x32xf32>
    %380 = math.tanh %379 : vector<2x32xf32>
    %381 = vector.extract_strided_slice %366 {offsets = [0, 96], sizes = [2, 32], strides = [1, 1]} : vector<2x128xf32> to vector<2x32xf32>
    %382 = arith.negf %381 : vector<2x32xf32>
    %383 = math.exp %382 : vector<2x32xf32>
    %cst_177 = arith.constant 1.000000e+00 : f32
    %384 = vector.broadcast %cst_177 : f32 to vector<2x32xf32>
    %385 = arith.addf %384, %383 : vector<2x32xf32>
    %386 = arith.divf %384, %385 : vector<2x32xf32>
    %387 = arith.mulf %378, %363 : vector<2x32xf32>
    %388 = arith.mulf %372, %380 : vector<2x32xf32>
    %389 = arith.addf %387, %388 : vector<2x32xf32>
    %390 = math.tanh %389 : vector<2x32xf32>
    %391 = arith.mulf %386, %390 : vector<2x32xf32>
    %c0_178 = arith.constant 0 : index
    %c0_179 = arith.constant 0 : index
    %392 = vector.load %arg9[%c0_178, %c0_179] : memref<2x32xf32, #tpu.memory_space<vmem>>, vector<2x32xf32>
    tpu.vector_store %arg9[%c0_178, %c0_179], %391 {strides = array<i32>} : memref<2x32xf32, #tpu.memory_space<vmem>>, vector<2x32xf32>,
    %c0_180 = arith.constant 0 : index
    %c0_181 = arith.constant 0 : index
    %393 = vector.load %arg10[%c0_180, %c0_181] : memref<2x32xf32, #tpu.memory_space<vmem>>, vector<2x32xf32>
    tpu.vector_store %arg10[%c0_180, %c0_181], %389 {strides = array<i32>} : memref<2x32xf32, #tpu.memory_space<vmem>>, vector<2x32xf32>,
    %394 = arith.index_cast %358 : i32 to index
    %c0_182 = arith.constant 0 : index
    %c0_183 = arith.constant 0 : index
    %395 = vector.load %arg6[%394, %c0_182, %c0_183] : memref<8x2x32xf32, #tpu.memory_space<vmem>>, vector<1x2x32xf32>
    %396 = vector.shape_cast %395 : vector<1x2x32xf32> to vector<2x32xf32>
    %397 = vector.shape_cast %391 : vector<2x32xf32> to vector<1x2x32xf32>
    tpu.vector_store %arg6[%394, %c0_182, %c0_183], %397 {strides = array<i32>} : memref<8x2x32xf32, #tpu.memory_space<vmem>>, vector<1x2x32xf32>,
    %c5_i32 = arith.constant 5 : i32
    %398 = arith.index_cast %c5_i32 : i32 to index
    %c0_184 = arith.constant 0 : index
    %c0_185 = arith.constant 0 : index
    %399 = vector.load %arg1[%398, %c0_184, %c0_185] : memref<8x2x128xf32, #tpu.memory_space<vmem>>, vector<1x2x128xf32>
    %400 = vector.shape_cast %399 : vector<1x2x128xf32> to vector<2x128xf32>
    %c0_186 = arith.constant 0 : index
    %c0_187 = arith.constant 0 : index
    %401 = vector.load %arg7[%c0_186, %c0_187] : memref<2x32xf32, #tpu.memory_space<vmem>>, vector<2x32xf32>
    %c0_188 = arith.constant 0 : index
    %c0_189 = arith.constant 0 : index
    %402 = vector.load %arg8[%c0_188, %c0_189] : memref<2x32xf32, #tpu.memory_space<vmem>>, vector<2x32xf32>
    %c0_190 = arith.constant 0 : index
    %c0_191 = arith.constant 0 : index
    %403 = vector.load %arg3[%c0_190, %c0_191] : memref<32x128xf32, #tpu.memory_space<vmem>>, vector<32x128xf32>
    %cst_192 = arith.constant dense<0.000000e+00> : vector<2x128xf32>
    %404 = tpu.matmul %401, %403, %cst_192 {dimension_numbers = #tpu.dot_dimension_numbers<[1], [0], [0], [1], [0, 0, 1, 1], [], []>} : vector<2x32xf32>, vector<32x128xf32>, vector<2x128xf32> -> vector<2x128xf32>
    %405 = arith.addf %400, %404 : vector<2x128xf32>
    %406 = vector.extract_strided_slice %405 {offsets = [0, 0], sizes = [2, 32], strides = [1, 1]} : vector<2x128xf32> to vector<2x32xf32>
    %407 = arith.negf %406 : vector<2x32xf32>
    %408 = math.exp %407 : vector<2x32xf32>
    %cst_193 = arith.constant 1.000000e+00 : f32
    %409 = vector.broadcast %cst_193 : f32 to vector<2x32xf32>
    %410 = arith.addf %409, %408 : vector<2x32xf32>
    %411 = arith.divf %409, %410 : vector<2x32xf32>
    %412 = vector.extract_strided_slice %405 {offsets = [0, 32], sizes = [2, 32], strides = [1, 1]} : vector<2x128xf32> to vector<2x32xf32>
    %413 = arith.negf %412 : vector<2x32xf32>
    %414 = math.exp %413 : vector<2x32xf32>
    %cst_194 = arith.constant 1.000000e+00 : f32
    %415 = vector.broadcast %cst_194 : f32 to vector<2x32xf32>
    %416 = arith.addf %415, %414 : vector<2x32xf32>
    %417 = arith.divf %415, %416 : vector<2x32xf32>
    %418 = vector.extract_strided_slice %405 {offsets = [0, 64], sizes = [2, 32], strides = [1, 1]} : vector<2x128xf32> to vector<2x32xf32>
    %419 = math.tanh %418 : vector<2x32xf32>
    %420 = vector.extract_strided_slice %405 {offsets = [0, 96], sizes = [2, 32], strides = [1, 1]} : vector<2x128xf32> to vector<2x32xf32>
    %421 = arith.negf %420 : vector<2x32xf32>
    %422 = math.exp %421 : vector<2x32xf32>
    %cst_195 = arith.constant 1.000000e+00 : f32
    %423 = vector.broadcast %cst_195 : f32 to vector<2x32xf32>
    %424 = arith.addf %423, %422 : vector<2x32xf32>
    %425 = arith.divf %423, %424 : vector<2x32xf32>
    %426 = arith.mulf %417, %402 : vector<2x32xf32>
    %427 = arith.mulf %411, %419 : vector<2x32xf32>
    %428 = arith.addf %426, %427 : vector<2x32xf32>
    %429 = math.tanh %428 : vector<2x32xf32>
    %430 = arith.mulf %425, %429 : vector<2x32xf32>
    %c0_196 = arith.constant 0 : index
    %c0_197 = arith.constant 0 : index
    %431 = vector.load %arg7[%c0_196, %c0_197] : memref<2x32xf32, #tpu.memory_space<vmem>>, vector<2x32xf32>
    tpu.vector_store %arg7[%c0_196, %c0_197], %430 {strides = array<i32>} : memref<2x32xf32, #tpu.memory_space<vmem>>, vector<2x32xf32>,
    %c0_198 = arith.constant 0 : index
    %c0_199 = arith.constant 0 : index
    %432 = vector.load %arg8[%c0_198, %c0_199] : memref<2x32xf32, #tpu.memory_space<vmem>>, vector<2x32xf32>
    tpu.vector_store %arg8[%c0_198, %c0_199], %428 {strides = array<i32>} : memref<2x32xf32, #tpu.memory_space<vmem>>, vector<2x32xf32>,
    %433 = arith.index_cast %c5_i32 : i32 to index
    %c0_200 = arith.constant 0 : index
    %c0_201 = arith.constant 0 : index
    %434 = vector.load %arg5[%433, %c0_200, %c0_201] : memref<8x2x32xf32, #tpu.memory_space<vmem>>, vector<1x2x32xf32>
    %435 = vector.shape_cast %434 : vector<1x2x32xf32> to vector<2x32xf32>
    %436 = vector.shape_cast %430 : vector<2x32xf32> to vector<1x2x32xf32>
    tpu.vector_store %arg5[%433, %c0_200, %c0_201], %436 {strides = array<i32>} : memref<8x2x32xf32, #tpu.memory_space<vmem>>, vector<1x2x32xf32>,
    %c7_i32_202 = arith.constant 7 : i32
    %437 = arith.subi %c7_i32_202, %c5_i32 : i32
    %438 = arith.index_cast %437 : i32 to index
    %c0_203 = arith.constant 0 : index
    %c0_204 = arith.constant 0 : index
    %439 = vector.load %arg2[%438, %c0_203, %c0_204] : memref<8x2x128xf32, #tpu.memory_space<vmem>>, vector<1x2x128xf32>
    %440 = vector.shape_cast %439 : vector<1x2x128xf32> to vector<2x128xf32>
    %c0_205 = arith.constant 0 : index
    %c0_206 = arith.constant 0 : index
    %441 = vector.load %arg9[%c0_205, %c0_206] : memref<2x32xf32, #tpu.memory_space<vmem>>, vector<2x32xf32>
    %c0_207 = arith.constant 0 : index
    %c0_208 = arith.constant 0 : index
    %442 = vector.load %arg10[%c0_207, %c0_208] : memref<2x32xf32, #tpu.memory_space<vmem>>, vector<2x32xf32>
    %c0_209 = arith.constant 0 : index
    %c0_210 = arith.constant 0 : index
    %443 = vector.load %arg4[%c0_209, %c0_210] : memref<32x128xf32, #tpu.memory_space<vmem>>, vector<32x128xf32>
    %cst_211 = arith.constant dense<0.000000e+00> : vector<2x128xf32>
    %444 = tpu.matmul %441, %443, %cst_211 {dimension_numbers = #tpu.dot_dimension_numbers<[1], [0], [0], [1], [0, 0, 1, 1], [], []>} : vector<2x32xf32>, vector<32x128xf32>, vector<2x128xf32> -> vector<2x128xf32>
    %445 = arith.addf %440, %444 : vector<2x128xf32>
    %446 = vector.extract_strided_slice %445 {offsets = [0, 0], sizes = [2, 32], strides = [1, 1]} : vector<2x128xf32> to vector<2x32xf32>
    %447 = arith.negf %446 : vector<2x32xf32>
    %448 = math.exp %447 : vector<2x32xf32>
    %cst_212 = arith.constant 1.000000e+00 : f32
    %449 = vector.broadcast %cst_212 : f32 to vector<2x32xf32>
    %450 = arith.addf %449, %448 : vector<2x32xf32>
    %451 = arith.divf %449, %450 : vector<2x32xf32>
    %452 = vector.extract_strided_slice %445 {offsets = [0, 32], sizes = [2, 32], strides = [1, 1]} : vector<2x128xf32> to vector<2x32xf32>
    %453 = arith.negf %452 : vector<2x32xf32>
    %454 = math.exp %453 : vector<2x32xf32>
    %cst_213 = arith.constant 1.000000e+00 : f32
    %455 = vector.broadcast %cst_213 : f32 to vector<2x32xf32>
    %456 = arith.addf %455, %454 : vector<2x32xf32>
    %457 = arith.divf %455, %456 : vector<2x32xf32>
    %458 = vector.extract_strided_slice %445 {offsets = [0, 64], sizes = [2, 32], strides = [1, 1]} : vector<2x128xf32> to vector<2x32xf32>
    %459 = math.tanh %458 : vector<2x32xf32>
    %460 = vector.extract_strided_slice %445 {offsets = [0, 96], sizes = [2, 32], strides = [1, 1]} : vector<2x128xf32> to vector<2x32xf32>
    %461 = arith.negf %460 : vector<2x32xf32>
    %462 = math.exp %461 : vector<2x32xf32>
    %cst_214 = arith.constant 1.000000e+00 : f32
    %463 = vector.broadcast %cst_214 : f32 to vector<2x32xf32>
    %464 = arith.addf %463, %462 : vector<2x32xf32>
    %465 = arith.divf %463, %464 : vector<2x32xf32>
    %466 = arith.mulf %457, %442 : vector<2x32xf32>
    %467 = arith.mulf %451, %459 : vector<2x32xf32>
    %468 = arith.addf %466, %467 : vector<2x32xf32>
    %469 = math.tanh %468 : vector<2x32xf32>
    %470 = arith.mulf %465, %469 : vector<2x32xf32>
    %c0_215 = arith.constant 0 : index
    %c0_216 = arith.constant 0 : index
    %471 = vector.load %arg9[%c0_215, %c0_216] : memref<2x32xf32, #tpu.memory_space<vmem>>, vector<2x32xf32>
    tpu.vector_store %arg9[%c0_215, %c0_216], %470 {strides = array<i32>} : memref<2x32xf32, #tpu.memory_space<vmem>>, vector<2x32xf32>,
    %c0_217 = arith.constant 0 : index
    %c0_218 = arith.constant 0 : index
    %472 = vector.load %arg10[%c0_217, %c0_218] : memref<2x32xf32, #tpu.memory_space<vmem>>, vector<2x32xf32>
    tpu.vector_store %arg10[%c0_217, %c0_218], %468 {strides = array<i32>} : memref<2x32xf32, #tpu.memory_space<vmem>>, vector<2x32xf32>,
    %473 = arith.index_cast %437 : i32 to index
    %c0_219 = arith.constant 0 : index
    %c0_220 = arith.constant 0 : index
    %474 = vector.load %arg6[%473, %c0_219, %c0_220] : memref<8x2x32xf32, #tpu.memory_space<vmem>>, vector<1x2x32xf32>
    %475 = vector.shape_cast %474 : vector<1x2x32xf32> to vector<2x32xf32>
    %476 = vector.shape_cast %470 : vector<2x32xf32> to vector<1x2x32xf32>
    tpu.vector_store %arg6[%473, %c0_219, %c0_220], %476 {strides = array<i32>} : memref<8x2x32xf32, #tpu.memory_space<vmem>>, vector<1x2x32xf32>,
    %c6_i32 = arith.constant 6 : i32
    %477 = arith.index_cast %c6_i32 : i32 to index
    %c0_221 = arith.constant 0 : index
    %c0_222 = arith.constant 0 : index
    %478 = vector.load %arg1[%477, %c0_221, %c0_222] : memref<8x2x128xf32, #tpu.memory_space<vmem>>, vector<1x2x128xf32>
    %479 = vector.shape_cast %478 : vector<1x2x128xf32> to vector<2x128xf32>
    %c0_223 = arith.constant 0 : index
    %c0_224 = arith.constant 0 : index
    %480 = vector.load %arg7[%c0_223, %c0_224] : memref<2x32xf32, #tpu.memory_space<vmem>>, vector<2x32xf32>
    %c0_225 = arith.constant 0 : index
    %c0_226 = arith.constant 0 : index
    %481 = vector.load %arg8[%c0_225, %c0_226] : memref<2x32xf32, #tpu.memory_space<vmem>>, vector<2x32xf32>
    %c0_227 = arith.constant 0 : index
    %c0_228 = arith.constant 0 : index
    %482 = vector.load %arg3[%c0_227, %c0_228] : memref<32x128xf32, #tpu.memory_space<vmem>>, vector<32x128xf32>
    %cst_229 = arith.constant dense<0.000000e+00> : vector<2x128xf32>
    %483 = tpu.matmul %480, %482, %cst_229 {dimension_numbers = #tpu.dot_dimension_numbers<[1], [0], [0], [1], [0, 0, 1, 1], [], []>} : vector<2x32xf32>, vector<32x128xf32>, vector<2x128xf32> -> vector<2x128xf32>
    %484 = arith.addf %479, %483 : vector<2x128xf32>
    %485 = vector.extract_strided_slice %484 {offsets = [0, 0], sizes = [2, 32], strides = [1, 1]} : vector<2x128xf32> to vector<2x32xf32>
    %486 = arith.negf %485 : vector<2x32xf32>
    %487 = math.exp %486 : vector<2x32xf32>
    %cst_230 = arith.constant 1.000000e+00 : f32
    %488 = vector.broadcast %cst_230 : f32 to vector<2x32xf32>
    %489 = arith.addf %488, %487 : vector<2x32xf32>
    %490 = arith.divf %488, %489 : vector<2x32xf32>
    %491 = vector.extract_strided_slice %484 {offsets = [0, 32], sizes = [2, 32], strides = [1, 1]} : vector<2x128xf32> to vector<2x32xf32>
    %492 = arith.negf %491 : vector<2x32xf32>
    %493 = math.exp %492 : vector<2x32xf32>
    %cst_231 = arith.constant 1.000000e+00 : f32
    %494 = vector.broadcast %cst_231 : f32 to vector<2x32xf32>
    %495 = arith.addf %494, %493 : vector<2x32xf32>
    %496 = arith.divf %494, %495 : vector<2x32xf32>
    %497 = vector.extract_strided_slice %484 {offsets = [0, 64], sizes = [2, 32], strides = [1, 1]} : vector<2x128xf32> to vector<2x32xf32>
    %498 = math.tanh %497 : vector<2x32xf32>
    %499 = vector.extract_strided_slice %484 {offsets = [0, 96], sizes = [2, 32], strides = [1, 1]} : vector<2x128xf32> to vector<2x32xf32>
    %500 = arith.negf %499 : vector<2x32xf32>
    %501 = math.exp %500 : vector<2x32xf32>
    %cst_232 = arith.constant 1.000000e+00 : f32
    %502 = vector.broadcast %cst_232 : f32 to vector<2x32xf32>
    %503 = arith.addf %502, %501 : vector<2x32xf32>
    %504 = arith.divf %502, %503 : vector<2x32xf32>
    %505 = arith.mulf %496, %481 : vector<2x32xf32>
    %506 = arith.mulf %490, %498 : vector<2x32xf32>
    %507 = arith.addf %505, %506 : vector<2x32xf32>
    %508 = math.tanh %507 : vector<2x32xf32>
    %509 = arith.mulf %504, %508 : vector<2x32xf32>
    %c0_233 = arith.constant 0 : index
    %c0_234 = arith.constant 0 : index
    %510 = vector.load %arg7[%c0_233, %c0_234] : memref<2x32xf32, #tpu.memory_space<vmem>>, vector<2x32xf32>
    tpu.vector_store %arg7[%c0_233, %c0_234], %509 {strides = array<i32>} : memref<2x32xf32, #tpu.memory_space<vmem>>, vector<2x32xf32>,
    %c0_235 = arith.constant 0 : index
    %c0_236 = arith.constant 0 : index
    %511 = vector.load %arg8[%c0_235, %c0_236] : memref<2x32xf32, #tpu.memory_space<vmem>>, vector<2x32xf32>
    tpu.vector_store %arg8[%c0_235, %c0_236], %507 {strides = array<i32>} : memref<2x32xf32, #tpu.memory_space<vmem>>, vector<2x32xf32>,
    %512 = arith.index_cast %c6_i32 : i32 to index
    %c0_237 = arith.constant 0 : index
    %c0_238 = arith.constant 0 : index
    %513 = vector.load %arg5[%512, %c0_237, %c0_238] : memref<8x2x32xf32, #tpu.memory_space<vmem>>, vector<1x2x32xf32>
    %514 = vector.shape_cast %513 : vector<1x2x32xf32> to vector<2x32xf32>
    %515 = vector.shape_cast %509 : vector<2x32xf32> to vector<1x2x32xf32>
    tpu.vector_store %arg5[%512, %c0_237, %c0_238], %515 {strides = array<i32>} : memref<8x2x32xf32, #tpu.memory_space<vmem>>, vector<1x2x32xf32>,
    %c7_i32_239 = arith.constant 7 : i32
    %516 = arith.subi %c7_i32_239, %c6_i32 : i32
    %517 = arith.index_cast %516 : i32 to index
    %c0_240 = arith.constant 0 : index
    %c0_241 = arith.constant 0 : index
    %518 = vector.load %arg2[%517, %c0_240, %c0_241] : memref<8x2x128xf32, #tpu.memory_space<vmem>>, vector<1x2x128xf32>
    %519 = vector.shape_cast %518 : vector<1x2x128xf32> to vector<2x128xf32>
    %c0_242 = arith.constant 0 : index
    %c0_243 = arith.constant 0 : index
    %520 = vector.load %arg9[%c0_242, %c0_243] : memref<2x32xf32, #tpu.memory_space<vmem>>, vector<2x32xf32>
    %c0_244 = arith.constant 0 : index
    %c0_245 = arith.constant 0 : index
    %521 = vector.load %arg10[%c0_244, %c0_245] : memref<2x32xf32, #tpu.memory_space<vmem>>, vector<2x32xf32>
    %c0_246 = arith.constant 0 : index
    %c0_247 = arith.constant 0 : index
    %522 = vector.load %arg4[%c0_246, %c0_247] : memref<32x128xf32, #tpu.memory_space<vmem>>, vector<32x128xf32>
    %cst_248 = arith.constant dense<0.000000e+00> : vector<2x128xf32>
    %523 = tpu.matmul %520, %522, %cst_248 {dimension_numbers = #tpu.dot_dimension_numbers<[1], [0], [0], [1], [0, 0, 1, 1], [], []>} : vector<2x32xf32>, vector<32x128xf32>, vector<2x128xf32> -> vector<2x128xf32>
    %524 = arith.addf %519, %523 : vector<2x128xf32>
    %525 = vector.extract_strided_slice %524 {offsets = [0, 0], sizes = [2, 32], strides = [1, 1]} : vector<2x128xf32> to vector<2x32xf32>
    %526 = arith.negf %525 : vector<2x32xf32>
    %527 = math.exp %526 : vector<2x32xf32>
    %cst_249 = arith.constant 1.000000e+00 : f32
    %528 = vector.broadcast %cst_249 : f32 to vector<2x32xf32>
    %529 = arith.addf %528, %527 : vector<2x32xf32>
    %530 = arith.divf %528, %529 : vector<2x32xf32>
    %531 = vector.extract_strided_slice %524 {offsets = [0, 32], sizes = [2, 32], strides = [1, 1]} : vector<2x128xf32> to vector<2x32xf32>
    %532 = arith.negf %531 : vector<2x32xf32>
    %533 = math.exp %532 : vector<2x32xf32>
    %cst_250 = arith.constant 1.000000e+00 : f32
    %534 = vector.broadcast %cst_250 : f32 to vector<2x32xf32>
    %535 = arith.addf %534, %533 : vector<2x32xf32>
    %536 = arith.divf %534, %535 : vector<2x32xf32>
    %537 = vector.extract_strided_slice %524 {offsets = [0, 64], sizes = [2, 32], strides = [1, 1]} : vector<2x128xf32> to vector<2x32xf32>
    %538 = math.tanh %537 : vector<2x32xf32>
    %539 = vector.extract_strided_slice %524 {offsets = [0, 96], sizes = [2, 32], strides = [1, 1]} : vector<2x128xf32> to vector<2x32xf32>
    %540 = arith.negf %539 : vector<2x32xf32>
    %541 = math.exp %540 : vector<2x32xf32>
    %cst_251 = arith.constant 1.000000e+00 : f32
    %542 = vector.broadcast %cst_251 : f32 to vector<2x32xf32>
    %543 = arith.addf %542, %541 : vector<2x32xf32>
    %544 = arith.divf %542, %543 : vector<2x32xf32>
    %545 = arith.mulf %536, %521 : vector<2x32xf32>
    %546 = arith.mulf %530, %538 : vector<2x32xf32>
    %547 = arith.addf %545, %546 : vector<2x32xf32>
    %548 = math.tanh %547 : vector<2x32xf32>
    %549 = arith.mulf %544, %548 : vector<2x32xf32>
    %c0_252 = arith.constant 0 : index
    %c0_253 = arith.constant 0 : index
    %550 = vector.load %arg9[%c0_252, %c0_253] : memref<2x32xf32, #tpu.memory_space<vmem>>, vector<2x32xf32>
    tpu.vector_store %arg9[%c0_252, %c0_253], %549 {strides = array<i32>} : memref<2x32xf32, #tpu.memory_space<vmem>>, vector<2x32xf32>,
    %c0_254 = arith.constant 0 : index
    %c0_255 = arith.constant 0 : index
    %551 = vector.load %arg10[%c0_254, %c0_255] : memref<2x32xf32, #tpu.memory_space<vmem>>, vector<2x32xf32>
    tpu.vector_store %arg10[%c0_254, %c0_255], %547 {strides = array<i32>} : memref<2x32xf32, #tpu.memory_space<vmem>>, vector<2x32xf32>,
    %552 = arith.index_cast %516 : i32 to index
    %c0_256 = arith.constant 0 : index
    %c0_257 = arith.constant 0 : index
    %553 = vector.load %arg6[%552, %c0_256, %c0_257] : memref<8x2x32xf32, #tpu.memory_space<vmem>>, vector<1x2x32xf32>
    %554 = vector.shape_cast %553 : vector<1x2x32xf32> to vector<2x32xf32>
    %555 = vector.shape_cast %549 : vector<2x32xf32> to vector<1x2x32xf32>
    tpu.vector_store %arg6[%552, %c0_256, %c0_257], %555 {strides = array<i32>} : memref<8x2x32xf32, #tpu.memory_space<vmem>>, vector<1x2x32xf32>,
    %c7_i32_258 = arith.constant 7 : i32
    %556 = arith.index_cast %c7_i32_258 : i32 to index
    %c0_259 = arith.constant 0 : index
    %c0_260 = arith.constant 0 : index
    %557 = vector.load %arg1[%556, %c0_259, %c0_260] : memref<8x2x128xf32, #tpu.memory_space<vmem>>, vector<1x2x128xf32>
    %558 = vector.shape_cast %557 : vector<1x2x128xf32> to vector<2x128xf32>
    %c0_261 = arith.constant 0 : index
    %c0_262 = arith.constant 0 : index
    %559 = vector.load %arg7[%c0_261, %c0_262] : memref<2x32xf32, #tpu.memory_space<vmem>>, vector<2x32xf32>
    %c0_263 = arith.constant 0 : index
    %c0_264 = arith.constant 0 : index
    %560 = vector.load %arg8[%c0_263, %c0_264] : memref<2x32xf32, #tpu.memory_space<vmem>>, vector<2x32xf32>
    %c0_265 = arith.constant 0 : index
    %c0_266 = arith.constant 0 : index
    %561 = vector.load %arg3[%c0_265, %c0_266] : memref<32x128xf32, #tpu.memory_space<vmem>>, vector<32x128xf32>
    %cst_267 = arith.constant dense<0.000000e+00> : vector<2x128xf32>
    %562 = tpu.matmul %559, %561, %cst_267 {dimension_numbers = #tpu.dot_dimension_numbers<[1], [0], [0], [1], [0, 0, 1, 1], [], []>} : vector<2x32xf32>, vector<32x128xf32>, vector<2x128xf32> -> vector<2x128xf32>
    %563 = arith.addf %558, %562 : vector<2x128xf32>
    %564 = vector.extract_strided_slice %563 {offsets = [0, 0], sizes = [2, 32], strides = [1, 1]} : vector<2x128xf32> to vector<2x32xf32>
    %565 = arith.negf %564 : vector<2x32xf32>
    %566 = math.exp %565 : vector<2x32xf32>
    %cst_268 = arith.constant 1.000000e+00 : f32
    %567 = vector.broadcast %cst_268 : f32 to vector<2x32xf32>
    %568 = arith.addf %567, %566 : vector<2x32xf32>
    %569 = arith.divf %567, %568 : vector<2x32xf32>
    %570 = vector.extract_strided_slice %563 {offsets = [0, 32], sizes = [2, 32], strides = [1, 1]} : vector<2x128xf32> to vector<2x32xf32>
    %571 = arith.negf %570 : vector<2x32xf32>
    %572 = math.exp %571 : vector<2x32xf32>
    %cst_269 = arith.constant 1.000000e+00 : f32
    %573 = vector.broadcast %cst_269 : f32 to vector<2x32xf32>
    %574 = arith.addf %573, %572 : vector<2x32xf32>
    %575 = arith.divf %573, %574 : vector<2x32xf32>
    %576 = vector.extract_strided_slice %563 {offsets = [0, 64], sizes = [2, 32], strides = [1, 1]} : vector<2x128xf32> to vector<2x32xf32>
    %577 = math.tanh %576 : vector<2x32xf32>
    %578 = vector.extract_strided_slice %563 {offsets = [0, 96], sizes = [2, 32], strides = [1, 1]} : vector<2x128xf32> to vector<2x32xf32>
    %579 = arith.negf %578 : vector<2x32xf32>
    %580 = math.exp %579 : vector<2x32xf32>
    %cst_270 = arith.constant 1.000000e+00 : f32
    %581 = vector.broadcast %cst_270 : f32 to vector<2x32xf32>
    %582 = arith.addf %581, %580 : vector<2x32xf32>
    %583 = arith.divf %581, %582 : vector<2x32xf32>
    %584 = arith.mulf %575, %560 : vector<2x32xf32>
    %585 = arith.mulf %569, %577 : vector<2x32xf32>
    %586 = arith.addf %584, %585 : vector<2x32xf32>
    %587 = math.tanh %586 : vector<2x32xf32>
    %588 = arith.mulf %583, %587 : vector<2x32xf32>
    %c0_271 = arith.constant 0 : index
    %c0_272 = arith.constant 0 : index
    %589 = vector.load %arg7[%c0_271, %c0_272] : memref<2x32xf32, #tpu.memory_space<vmem>>, vector<2x32xf32>
    tpu.vector_store %arg7[%c0_271, %c0_272], %588 {strides = array<i32>} : memref<2x32xf32, #tpu.memory_space<vmem>>, vector<2x32xf32>,
    %c0_273 = arith.constant 0 : index
    %c0_274 = arith.constant 0 : index
    %590 = vector.load %arg8[%c0_273, %c0_274] : memref<2x32xf32, #tpu.memory_space<vmem>>, vector<2x32xf32>
    tpu.vector_store %arg8[%c0_273, %c0_274], %586 {strides = array<i32>} : memref<2x32xf32, #tpu.memory_space<vmem>>, vector<2x32xf32>,
    %591 = arith.index_cast %c7_i32_258 : i32 to index
    %c0_275 = arith.constant 0 : index
    %c0_276 = arith.constant 0 : index
    %592 = vector.load %arg5[%591, %c0_275, %c0_276] : memref<8x2x32xf32, #tpu.memory_space<vmem>>, vector<1x2x32xf32>
    %593 = vector.shape_cast %592 : vector<1x2x32xf32> to vector<2x32xf32>
    %594 = vector.shape_cast %588 : vector<2x32xf32> to vector<1x2x32xf32>
    tpu.vector_store %arg5[%591, %c0_275, %c0_276], %594 {strides = array<i32>} : memref<8x2x32xf32, #tpu.memory_space<vmem>>, vector<1x2x32xf32>,
    %c7_i32_277 = arith.constant 7 : i32
    %595 = arith.subi %c7_i32_277, %c7_i32_258 : i32
    %596 = arith.index_cast %595 : i32 to index
    %c0_278 = arith.constant 0 : index
    %c0_279 = arith.constant 0 : index
    %597 = vector.load %arg2[%596, %c0_278, %c0_279] : memref<8x2x128xf32, #tpu.memory_space<vmem>>, vector<1x2x128xf32>
    %598 = vector.shape_cast %597 : vector<1x2x128xf32> to vector<2x128xf32>
    %c0_280 = arith.constant 0 : index
    %c0_281 = arith.constant 0 : index
    %599 = vector.load %arg9[%c0_280, %c0_281] : memref<2x32xf32, #tpu.memory_space<vmem>>, vector<2x32xf32>
    %c0_282 = arith.constant 0 : index
    %c0_283 = arith.constant 0 : index
    %600 = vector.load %arg10[%c0_282, %c0_283] : memref<2x32xf32, #tpu.memory_space<vmem>>, vector<2x32xf32>
    %c0_284 = arith.constant 0 : index
    %c0_285 = arith.constant 0 : index
    %601 = vector.load %arg4[%c0_284, %c0_285] : memref<32x128xf32, #tpu.memory_space<vmem>>, vector<32x128xf32>
    %cst_286 = arith.constant dense<0.000000e+00> : vector<2x128xf32>
    %602 = tpu.matmul %599, %601, %cst_286 {dimension_numbers = #tpu.dot_dimension_numbers<[1], [0], [0], [1], [0, 0, 1, 1], [], []>} : vector<2x32xf32>, vector<32x128xf32>, vector<2x128xf32> -> vector<2x128xf32>
    %603 = arith.addf %598, %602 : vector<2x128xf32>
    %604 = vector.extract_strided_slice %603 {offsets = [0, 0], sizes = [2, 32], strides = [1, 1]} : vector<2x128xf32> to vector<2x32xf32>
    %605 = arith.negf %604 : vector<2x32xf32>
    %606 = math.exp %605 : vector<2x32xf32>
    %cst_287 = arith.constant 1.000000e+00 : f32
    %607 = vector.broadcast %cst_287 : f32 to vector<2x32xf32>
    %608 = arith.addf %607, %606 : vector<2x32xf32>
    %609 = arith.divf %607, %608 : vector<2x32xf32>
    %610 = vector.extract_strided_slice %603 {offsets = [0, 32], sizes = [2, 32], strides = [1, 1]} : vector<2x128xf32> to vector<2x32xf32>
    %611 = arith.negf %610 : vector<2x32xf32>
    %612 = math.exp %611 : vector<2x32xf32>
    %cst_288 = arith.constant 1.000000e+00 : f32
    %613 = vector.broadcast %cst_288 : f32 to vector<2x32xf32>
    %614 = arith.addf %613, %612 : vector<2x32xf32>
    %615 = arith.divf %613, %614 : vector<2x32xf32>
    %616 = vector.extract_strided_slice %603 {offsets = [0, 64], sizes = [2, 32], strides = [1, 1]} : vector<2x128xf32> to vector<2x32xf32>
    %617 = math.tanh %616 : vector<2x32xf32>
    %618 = vector.extract_strided_slice %603 {offsets = [0, 96], sizes = [2, 32], strides = [1, 1]} : vector<2x128xf32> to vector<2x32xf32>
    %619 = arith.negf %618 : vector<2x32xf32>
    %620 = math.exp %619 : vector<2x32xf32>
    %cst_289 = arith.constant 1.000000e+00 : f32
    %621 = vector.broadcast %cst_289 : f32 to vector<2x32xf32>
    %622 = arith.addf %621, %620 : vector<2x32xf32>
    %623 = arith.divf %621, %622 : vector<2x32xf32>
    %624 = arith.mulf %615, %600 : vector<2x32xf32>
    %625 = arith.mulf %609, %617 : vector<2x32xf32>
    %626 = arith.addf %624, %625 : vector<2x32xf32>
    %627 = math.tanh %626 : vector<2x32xf32>
    %628 = arith.mulf %623, %627 : vector<2x32xf32>
    %c0_290 = arith.constant 0 : index
    %c0_291 = arith.constant 0 : index
    %629 = vector.load %arg9[%c0_290, %c0_291] : memref<2x32xf32, #tpu.memory_space<vmem>>, vector<2x32xf32>
    tpu.vector_store %arg9[%c0_290, %c0_291], %628 {strides = array<i32>} : memref<2x32xf32, #tpu.memory_space<vmem>>, vector<2x32xf32>,
    %c0_292 = arith.constant 0 : index
    %c0_293 = arith.constant 0 : index
    %630 = vector.load %arg10[%c0_292, %c0_293] : memref<2x32xf32, #tpu.memory_space<vmem>>, vector<2x32xf32>
    tpu.vector_store %arg10[%c0_292, %c0_293], %626 {strides = array<i32>} : memref<2x32xf32, #tpu.memory_space<vmem>>, vector<2x32xf32>,
    %631 = arith.index_cast %595 : i32 to index
    %c0_294 = arith.constant 0 : index
    %c0_295 = arith.constant 0 : index
    %632 = vector.load %arg6[%631, %c0_294, %c0_295] : memref<8x2x32xf32, #tpu.memory_space<vmem>>, vector<1x2x32xf32>
    %633 = vector.shape_cast %632 : vector<1x2x32xf32> to vector<2x32xf32>
    %634 = vector.shape_cast %628 : vector<2x32xf32> to vector<1x2x32xf32>
    tpu.vector_store %arg6[%631, %c0_294, %c0_295], %634 {strides = array<i32>} : memref<8x2x32xf32, #tpu.memory_space<vmem>>, vector<1x2x32xf32>,
    %c8_i32 = arith.constant 8 : i32
    return
  }
  func.func @transform_0(%arg0: i32) -> (i32, i32, i32) {
    %c0_i32 = arith.constant 0 : i32
    %c0_i32_0 = arith.constant 0 : i32
    %c0_i32_1 = arith.constant 0 : i32
    return %arg0, %c0_i32, %c0_i32_0 : i32, i32, i32
  }
  func.func @transform_1(%arg0: i32) -> (i32, i32, i32) {
    %c0_i32 = arith.constant 0 : i32
    %0 = arith.subi %c0_i32, %arg0 : i32
    %c0_i32_0 = arith.constant 0 : i32
    %c1_i32 = arith.constant 1 : i32
    %c0_i32_1 = arith.constant 0 : i32
    return %0, %c0_i32_0, %c1_i32 : i32, i32, i32
  }
  func.func @transform_2(%arg0: i32) -> (i32, i32) {
    %c0_i32 = arith.constant 0 : i32
    %c0_i32_0 = arith.constant 0 : i32
    %c0_i32_1 = arith.constant 0 : i32
    return %c0_i32, %c0_i32_0 : i32, i32
  }
  func.func @transform_3(%arg0: i32) -> (i32, i32) {
    %c0_i32 = arith.constant 0 : i32
    %c0_i32_0 = arith.constant 0 : i32
    %c0_i32_1 = arith.constant 0 : i32
    return %c0_i32, %c0_i32_0 : i32, i32
  }
  func.func @transform_4(%arg0: i32) -> (i32, i32, i32) {
    %c0_i32 = arith.constant 0 : i32
    %c0_i32_0 = arith.constant 0 : i32
    %c0_i32_1 = arith.constant 0 : i32
    return %arg0, %c0_i32, %c0_i32_0 : i32, i32, i32
  }
  func.func @transform_5(%arg0: i32) -> (i32, i32, i32) {
    %c0_i32 = arith.constant 0 : i32
    %0 = arith.subi %c0_i32, %arg0 : i32
    %c0_i32_0 = arith.constant 0 : i32
    %c0_i32_1 = arith.constant 0 : i32
    %c0_i32_2 = arith.constant 0 : i32
    return %0, %c0_i32_0, %c0_i32_1 : i32, i32, i32
  }
}

</mosaic_0001>

<llo_original>
// kernel: tpu_custom_call.1
$region0: #{tpu_custom_call.1}
  #allocation0 [shape = 'u32[]', space=smem, size = 0x4, offset = 0x4, fixed_abs, tag = 'smem constant byte address 0x4 - core index']
  #allocation1 [shape = 'u32[144,128]{1,0:T(1,128)}', space=vmem, size = 0x12000, scoped, tag = 'internal scratch']
  #allocation2 [shape = 'f32[2,32]{1,0:T(2,128)}', space=vmem, size = 0x400, scoped, tag = 'scratch operand']
  #allocation3 [shape = 'f32[2,32]{1,0:T(2,128)}', space=vmem, size = 0x400, scoped, tag = 'scratch operand']
  #allocation4 [shape = 'f32[2,32]{1,0:T(2,128)}', space=vmem, size = 0x400, scoped, tag = 'scratch operand']
  #allocation5 [shape = 'f32[2,32]{1,0:T(2,128)}', space=vmem, size = 0x400, scoped, tag = 'scratch operand']
  %s0 = inlined_call_operand.hbm [shape: f32[8,2,256], index: 0, kind: input, shape index: {}]
  %s1 = inlined_call_operand.hbm [shape: f32[8,2,256], index: 1, kind: input, shape index: {}]
  %s2 = inlined_call_operand.hbm [shape: f32[32,128], index: 2, kind: input, shape index: {}]
  %s3 = inlined_call_operand.hbm [shape: f32[32,128], index: 3, kind: input, shape index: {}]
  %s4 = inlined_call_operand.hbm [shape: f32[8,2,32], index: 4, kind: output, shape index: {0}]
  %s5 = inlined_call_operand.hbm [shape: f32[8,2,32], index: 5, kind: output, shape index: {1}]
  %6 = xla_tuple %s4, %s5
  %s7 = sld [smem:[#allocation0]]
  $region54: #{tpu_custom_call.1} parent=0
    _
  %s9 = ssub.s32 1, %s7
  %s10 = scalar_select 0, %s9, %s7
  $region1: #{tpu_custom_call.1} parent=0
    #allocation6 [shape = 'u8[8192]{0}', space=vmem, size = 0x2000, scoped, tag = 'input window, operand 0, single buffered']
    #allocation7 [shape = 's32[1]{0}', space=sflag, size = 0x4, scoped, tag = 'scoped memory for tpu_custom_call.1']
    #allocation8 [shape = 's32[1]{0}', space=sflag, size = 0x4, scoped, tag = 'scoped memory for tpu_custom_call.1']
    #allocation9 [shape = 'u8[8192]{0}', space=vmem, size = 0x2000, scoped, tag = 'input window, operand 1, single buffered']
    #allocation10 [shape = 's32[1]{0}', space=sflag, size = 0x4, scoped, tag = 'scoped memory for tpu_custom_call.1']
    #allocation11 [shape = 'u8[16384]{0}', space=vmem, size = 0x4000, scoped, tag = 'input window, operand 2, single buffered']
    #allocation12 [shape = 'u8[16384]{0}', space=vmem, size = 0x4000, scoped, tag = 'input window, operand 3, single buffered']
    #allocation13 [shape = 's32[1]{0}', space=sflag, size = 0x4, scoped, tag = 'scoped memory for tpu_custom_call.1']
    #allocation14 [shape = 'u8[8192]{0}', space=vmem, size = 0x2000, scoped, tag = 'output window, operand 0, single buffered']
    #allocation15 [shape = 'u8[8192]{0}', space=vmem, size = 0x2000, scoped, tag = 'output window, operand 1, single buffered']
    #allocation16 [shape = 's32[1]{0}', space=sflag, size = 0x4, scoped, tag = 'scoped memory for tpu_custom_call.1']
    %11 = vsyncpa [#allocation7], 0
    %12 = vsyncpa [#allocation10], 0
    %13 = vsyncpa [#allocation13], 0
    %14 = vsyncpa [#allocation8], 0
    %15 = vsyncpa [#allocation16], 0
    // Predicated region
    $region2: #{tpu_custom_call.1} parent=1 // pred_check
      _
    $region3: #{tpu_custom_call.1} parent=1 // pred_check_branch
      %17 = sbr.rel (0) target = $region5
    $region4: #{tpu_custom_call.1} parent=1 // pred_region
      %s19 = ssub.s32 256, 256
      %20 = vsyncadd [#allocation7], %s19
      %s21 = sshll.u32 [#allocation6], 4
      %s22 = int_to_ptr.vmem [resolvable:$true] %s21
      %27 = dma.hbm_to_vmem [thread:$0]  %s0, 256, %s22, [#allocation7], 64, 32, 2
    $region5: #{tpu_custom_call.1} parent=1 // pred_fallthru
      _
    // Predicated region
    $region6: #{tpu_custom_call.1} parent=1 // pred_check
      _
    $region7: #{tpu_custom_call.1} parent=1 // pred_check_branch
      %29 = sbr.rel (0) target = $region9
    $region8: #{tpu_custom_call.1} parent=1 // pred_region
      %s30 = ssub.s32 0, 0
      %s31 = smul.u32 8, %s30
      %s33 = ssub.s32 256, 256
      %34 = vsyncadd [#allocation10], %s33
      %s35 = smul.addr %s31, 2
      %s36 = sadd.s32 1, %s35
      %s37 = smul.addr %s36, 32
      %s38 = scalar_lea.hbm %s1, %s37
      %s39 = sshll.u32 [#allocation9], 4
      %s40 = int_to_ptr.vmem [resolvable:$true] %s39
      %45 = dma.hbm_to_vmem [thread:$0]  %s38, 256, %s40, [#allocation10], 64, 32, 2
    $region9: #{tpu_custom_call.1} parent=1 // pred_fallthru
      _
    // Predicated region
    $region10: #{tpu_custom_call.1} parent=1 // pred_check
      _
    $region11: #{tpu_custom_call.1} parent=1 // pred_check_branch
      %47 = sbr.rel (0) target = $region13
    $region12: #{tpu_custom_call.1} parent=1 // pred_region
      %s49 = ssub.s32 512, 512
      %50 = vsyncadd [#allocation10], %s49
      %s51 = sshll.u32 [#allocation11], 4
      %s52 = int_to_ptr.vmem [resolvable:$true] %s51
      %57 = dma.hbm_to_vmem [thread:$0]  %s2, 512, %s52, [#allocation10], 128, 128, 8
    $region13: #{tpu_custom_call.1} parent=1 // pred_fallthru
      _
    // Predicated region
    $region14: #{tpu_custom_call.1} parent=1 // pred_check
      _
    $region15: #{tpu_custom_call.1} parent=1 // pred_check_branch
      %59 = sbr.rel (0) target = $region17
    $region16: #{tpu_custom_call.1} parent=1 // pred_region
      %s61 = ssub.s32 512, 512
      %62 = vsyncadd [#allocation13], %s61
      %s63 = sshll.u32 [#allocation12], 4
      %s64 = int_to_ptr.vmem [resolvable:$true] %s63
      %69 = dma.hbm_to_vmem [thread:$0]  %s3, 512, %s64, [#allocation13], 128, 128, 8
    $region17: #{tpu_custom_call.1} parent=1 // pred_fallthru
      _
    // Predicated region
    $region18: #{tpu_custom_call.1} parent=1 // pred_check
      _
    $region19: #{tpu_custom_call.1} parent=1 // pred_check_branch
      %71 = sbr.rel (0) target = $region21
    $region20: #{tpu_custom_call.1} parent=1 // pred_region
      %72 = dma.done [#allocation7], 256
    $region21: #{tpu_custom_call.1} parent=1 // pred_fallthru
      _
    // Predicated region
    $region22: #{tpu_custom_call.1} parent=1 // pred_check
      _
    $region23: #{tpu_custom_call.1} parent=1 // pred_check_branch
      %74 = sbr.rel (0) target = $region25
    $region24: #{tpu_custom_call.1} parent=1 // pred_region
      %75 = dma.done [#allocation10], 256
    $region25: #{tpu_custom_call.1} parent=1 // pred_fallthru
      _
    // Predicated region
    $region26: #{tpu_custom_call.1} parent=1 // pred_check
      _
    $region27: #{tpu_custom_call.1} parent=1 // pred_check_branch
      %77 = sbr.rel (0) target = $region29
    $region28: #{tpu_custom_call.1} parent=1 // pred_region
      %78 = dma.done [#allocation10], 512
    $region29: #{tpu_custom_call.1} parent=1 // pred_fallthru
      _
    // Predicated region
    $region30: #{tpu_custom_call.1} parent=1 // pred_check
      _
    $region31: #{tpu_custom_call.1} parent=1 // pred_check_branch
      %80 = sbr.rel (0) target = $region33
    $region32: #{tpu_custom_call.1} parent=1 // pred_region
      %81 = dma.done [#allocation13], 512
    $region33: #{tpu_custom_call.1} parent=1 // pred_fallthru
      _
    %s82 = ssub.s32 0, 0
    %s83 = smul.u32 8, %s82
    %s84 = ssub.s32 0, 0
    %s85 = smul.u32 8, %s84
    %p86 = scmp.eq.s32.totalorder 0, 0
    // Predicated region
    $region34: #{tpu_custom_call.1} parent=1 // pred_check
      %p87 = pneg %p86
    $region35: #{tpu_custom_call.1} parent=1 // pred_check_branch
      %89 = sbr.rel (%p87) target = $region37
    $region36: #{tpu_custom_call.1} parent=1 // pred_region
      %vm90 = vcmask 254976
      %91 = vst.msk [vmem:[#allocation2] sm:$0x3] %vm90, 0.0
      %92 = vst.msk [vmem:[#allocation3] sm:$0x3] %vm90, 0.0
      %93 = vst.msk [vmem:[#allocation4] sm:$0x3] %vm90, 0.0
      %94 = vst.msk [vmem:[#allocation5] sm:$0x3] %vm90, 0.0
    $region37: #{tpu_custom_call.1} parent=1 // pred_fallthru
      _
    %v95 = vld [vmem:[#allocation6] sm:$0x3]
    %v96 = vld [vmem:[#allocation2] sm:$0x3]
    %v97 = vld [vmem:[#allocation3] sm:$0x3]
    %v98 = vld [vmem:[#allocation11] sm:$0xff]
    %v99 = vld [vmem:[#allocation11 + $0x8] sm:$0xff]
    %v100 = vld [vmem:[#allocation11 + $0x10] sm:$0xff]
    %v101 = vld [vmem:[#allocation11 + $0x18] sm:$0xff]
    %vm102 = vcmask 261120
    %v104 = vsel %vm102, %v96, 0
    %106 = vmatprep.subr.mxu0 0.0
    %107 = vmatpush1.msra.mxu0 0.0
    %108 = vmatprep.subr.mxu0 0.0
    %109 = vmatpush1.msra.mxu0 0.0
    %110 = vmatprep.subr.mxu0 0.0
    %111 = vmatpush1.msra.mxu0 0.0
    %112 = vmatprep.subr.mxu0 0.0
    %113 = vmatpush1.msra.mxu0 0.0
    %114 = vmatprep.subr.mxu0 0.0
    %115 = vmatpush1.msra.mxu0 0.0
    %116 = vmatprep.subr.mxu0 0.0
    %117 = vmatpush1.msra.mxu0 0.0
    %118 = vmatprep.subr.mxu0 0.0
    %119 = vmatpush1.msra.mxu0 0.0
    %120 = vmatprep.subr.mxu0 0.0
    %121 = vmatpush1.msra.mxu0 0.0
    %122 = vmatprep.subr.mxu0 0.0
    %123 = vmatpush1.msra.mxu0 0.0
    %124 = vmatprep.subr.mxu0 0.0
    %125 = vmatpush1.msra.mxu0 0.0
    %126 = vmatprep.subr.mxu0 0.0
    %127 = vmatpush1.msra.mxu0 0.0
    %128 = vmatprep.subr.mxu0 0.0
    %129 = vmatpush1.msra.mxu0 0.0
    %130 = vmatprep.subr.mxu0 0.0
    %131 = vmatpush1.msra.mxu0 %v101
    %132 = vmatprep.subr.mxu0 0.0
    %133 = vmatpush1.msra.mxu0 %v100
    %134 = vmatprep.subr.mxu0 0.0
    %135 = vmatpush1.msra.mxu0 %v99
    %136 = vmatprep.subr.mxu0 0.0
    %137 = vmatpush1.msra.mxu0 %v98
    %138 = vmatprep.subr.mxu0 0.0
    %139 = vmatpush2.msra.mxu0 0.0
    %140 = vmatprep.subr.mxu0 0.0
    %141 = vmatpush2.msra.mxu0 0.0
    %142 = vmatprep.subr.mxu0 0.0
    %143 = vmatpush2.msra.mxu0 0.0
    %144 = vmatprep.subr.mxu0 0.0
    %145 = vmatpush2.msra.mxu0 0.0
    %146 = vmatprep.subr.mxu0 0.0
    %147 = vmatpush2.msra.mxu0 0.0
    %148 = vmatprep.subr.mxu0 0.0
    %149 = vmatpush2.msra.mxu0 0.0
    %150 = vmatprep.subr.mxu0 0.0
    %151 = vmatpush2.msra.mxu0 0.0
    %152 = vmatprep.subr.mxu0 0.0
    %153 = vmatpush2.msra.mxu0 0.0
    %154 = vmatprep.subr.mxu0 0.0
    %155 = vmatpush2.msra.mxu0 0.0
    %156 = vmatprep.subr.mxu0 0.0
    %157 = vmatpush2.msra.mxu0 0.0
    %158 = vmatprep.subr.mxu0 0.0
    %159 = vmatpush2.msra.mxu0 0.0
    %160 = vmatprep.subr.mxu0 0.0
    %161 = vmatpush2.msra.mxu0 0.0
    %162 = vmatprep.subr.mxu0 0.0
    %163 = vmatpush2.msra.mxu0 0.0
    %164 = vmatprep.subr.mxu0 0.0
    %165 = vmatpush2.msra.mxu0 0.0
    %166 = vmatprep.subr.mxu0 0.0
    %167 = vmatpush2.msra.mxu0 0.0
    %168 = vmatprep.subr.mxu0 0.0
    %169 = vmatpush2.msra.mxu0 0.0
    %170 = vmatprep.mubr.f32.mxu0 0.0
    %171 = vmatmul.mubr.f32.gmra.mxu0 %v104
    %v172 = vpop.f32.mrf.mxu0
    %v173 = vadd.f32 0.0, %v172
    %v174 = vpop.f32.mrf.mxu0
    %175 = vdwg.mxu0
    %v176 = vadd.f32 %v95, %v173
    %v177 = vxor.u32 %v176, 2147483648
    %v178 = vmul.f32 %v177, 1.442695
    %v179 = vpow.pop %v178
    %v180 = vadd.f32 %v179, 1.0
    %v181 = vrcp.pop %v180
    %v182 = vmul.f32 1.0, %v181
    %v183 = vtanh.pop %v176
    %185 = vrot.lane.b32.xlu0 %v97, 32
    %v186 = vpop.permute.xlu0 %185
    %v188 = vmul.f32 %v182, %v186
    %190 = vrot.lane.b32.xlu0 %v183, 64
    %v191 = vpop.permute.xlu0 %190
    %v193 = vmul.f32 %v182, %v191
    %195 = vrot.lane.b32.xlu0 %v193, 32
    %v196 = vpop.permute.xlu0 %195
    %v198 = vadd.f32 %v188, %v196
    %v199 = vtanh.pop %v198
    %201 = vrot.lane.b32.xlu0 %v199, 64
    %v202 = vpop.permute.xlu0 %201
    %v204 = vmul.f32 %v182, %v202
    %206 = vrot.lane.b32.xlu0 %v204, 32
    %v207 = vpop.permute.xlu0 %206
    %vm209 = vcmask 254976
    %210 = vst.msk [vmem:[#allocation2] sm:$0x3] %vm209, %v207
    %212 = vrot.lane.b32.xlu0 %v198, 96
    %v213 = vpop.permute.xlu0 %212
    %215 = vst.msk [vmem:[#allocation3] sm:$0x3] %vm209, %v213
    %216 = vst.msk [vmem:[#allocation14] sm:$0x3] %vm209, %v207
    %s217 = scalar_lea.vmem [#allocation9], 14
    %v218 = vld [vmem:[%s217] sm:$0x3]
    %v219 = vld [vmem:[#allocation4] sm:$0x3]
    %v220 = vld [vmem:[#allocation5] sm:$0x3]
    %v221 = vld [vmem:[#allocation12] sm:$0xff]
    %v222 = vld [vmem:[#allocation12 + $0x8] sm:$0xff]
    %v223 = vld [vmem:[#allocation12 + $0x10] sm:$0xff]
    %v224 = vld [vmem:[#allocation12 + $0x18] sm:$0xff]
    %v226 = vsel %vm102, %v219, 0
    %228 = vmatprep.subr.mxu0 0.0
    %229 = vmatpush1.msra.mxu0 0.0
    %230 = vmatprep.subr.mxu0 0.0
    %231 = vmatpush1.msra.mxu0 0.0
    %232 = vmatprep.subr.mxu0 0.0
    %233 = vmatpush1.msra.mxu0 0.0
    %234 = vmatprep.subr.mxu0 0.0
    %235 = vmatpush1.msra.mxu0 0.0
    %236 = vmatprep.subr.mxu0 0.0
    %237 = vmatpush1.msra.mxu0 0.0
    %238 = vmatprep.subr.mxu0 0.0
    %239 = vmatpush1.msra.mxu0 0.0
    %240 = vmatprep.subr.mxu0 0.0
    %241 = vmatpush1.msra.mxu0 0.0
    %242 = vmatprep.subr.mxu0 0.0
    %243 = vmatpush1.msra.mxu0 0.0
    %244 = vmatprep.subr.mxu0 0.0
    %245 = vmatpush1.msra.mxu0 0.0
    %246 = vmatprep.subr.mxu0 0.0
    %247 = vmatpush1.msra.mxu0 0.0
    %248 = vmatprep.subr.mxu0 0.0
    %249 = vmatpush1.msra.mxu0 0.0
    %250 = vmatprep.subr.mxu0 0.0
    %251 = vmatpush1.msra.mxu0 0.0
    %252 = vmatprep.subr.mxu0 0.0
    %253 = vmatpush1.msra.mxu0 %v224
    %254 = vmatprep.subr.mxu0 0.0
    %255 = vmatpush1.msra.mxu0 %v223
    %256 = vmatprep.subr.mxu0 0.0
    %257 = vmatpush1.msra.mxu0 %v222
    %258 = vmatprep.subr.mxu0 0.0
    %259 = vmatpush1.msra.mxu0 %v221
    %260 = vmatprep.subr.mxu0 0.0
    %261 = vmatpush2.msra.mxu0 0.0
    %262 = vmatprep.subr.mxu0 0.0
    %263 = vmatpush2.msra.mxu0 0.0
    %264 = vmatprep.subr.mxu0 0.0
    %265 = vmatpush2.msra.mxu0 0.0
    %266 = vmatprep.subr.mxu0 0.0
    %267 = vmatpush2.msra.mxu0 0.0
    %268 = vmatprep.subr.mxu0 0.0
    %269 = vmatpush2.msra.mxu0 0.0
    %270 = vmatprep.subr.mxu0 0.0
    %271 = vmatpush2.msra.mxu0 0.0
    %272 = vmatprep.subr.mxu0 0.0
    %273 = vmatpush2.msra.mxu0 0.0
    %274 = vmatprep.subr.mxu0 0.0
    %275 = vmatpush2.msra.mxu0 0.0
    %276 = vmatprep.subr.mxu0 0.0
    %277 = vmatpush2.msra.mxu0 0.0
    %278 = vmatprep.subr.mxu0 0.0
    %279 = vmatpush2.msra.mxu0 0.0
    %280 = vmatprep.subr.mxu0 0.0
    %281 = vmatpush2.msra.mxu0 0.0
    %282 = vmatprep.subr.mxu0 0.0
    %283 = vmatpush2.msra.mxu0 0.0
    %284 = vmatprep.subr.mxu0 0.0
    %285 = vmatpush2.msra.mxu0 0.0
    %286 = vmatprep.subr.mxu0 0.0
    %287 = vmatpush2.msra.mxu0 0.0
    %288 = vmatprep.subr.mxu0 0.0
    %289 = vmatpush2.msra.mxu0 0.0
    %290 = vmatprep.subr.mxu0 0.0
    %291 = vmatpush2.msra.mxu0 0.0
    %292 = vmatprep.mubr.f32.mxu0 0.0
    %293 = vmatmul.mubr.f32.gmra.mxu0 %v226
    %v294 = vpop.f32.mrf.mxu0
    %v295 = vadd.f32 0.0, %v294
    %v296 = vpop.f32.mrf.mxu0
    %297 = vdwg.mxu0
    %v298 = vadd.f32 %v218, %v295
    %v299 = vxor.u32 %v298, 2147483648
    %v300 = vmul.f32 %v299, 1.442695
    %v301 = vpow.pop %v300
    %v302 = vadd.f32 %v301, 1.0
    %v303 = vrcp.pop %v302
    %v304 = vmul.f32 1.0, %v303
    %v305 = vtanh.pop %v298
    %307 = vrot.lane.b32.xlu0 %v220, 32
    %v308 = vpop.permute.xlu0 %307
    %v310 = vmul.f32 %v304, %v308
    %312 = vrot.lane.b32.xlu0 %v305, 64
    %v313 = vpop.permute.xlu0 %312
    %v315 = vmul.f32 %v304, %v313
    %317 = vrot.lane.b32.xlu0 %v315, 32
    %v318 = vpop.permute.xlu0 %317
    %v320 = vadd.f32 %v310, %v318
    %v321 = vtanh.pop %v320
    %323 = vrot.lane.b32.xlu0 %v321, 64
    %v324 = vpop.permute.xlu0 %323
    %v326 = vmul.f32 %v304, %v324
    %328 = vrot.lane.b32.xlu0 %v326, 32
    %v329 = vpop.permute.xlu0 %328
    %331 = vst.msk [vmem:[#allocation4] sm:$0x3] %vm209, %v329
    %333 = vrot.lane.b32.xlu0 %v320, 96
    %v334 = vpop.permute.xlu0 %333
    %336 = vst.msk [vmem:[#allocation5] sm:$0x3] %vm209, %v334
    %s337 = scalar_lea.vmem [#allocation15], 14
    %338 = vst.msk [vmem:[%s337] sm:$0x3] %vm209, %v329
    %s339 = scalar_lea.vmem [#allocation6], 2
    %v340 = vld [vmem:[%s339] sm:$0x3]
    %v341 = vld [vmem:[#allocation2] sm:$0x3]
    %v342 = vld [vmem:[#allocation3] sm:$0x3]
    %v343 = vld [vmem:[#allocation11] sm:$0xff]
    %v344 = vld [vmem:[#allocation11 + $0x8] sm:$0xff]
    %v345 = vld [vmem:[#allocation11 + $0x10] sm:$0xff]
    %v346 = vld [vmem:[#allocation11 + $0x18] sm:$0xff]
    %v348 = vsel %vm102, %v341, 0
    %350 = vmatprep.subr.mxu0 0.0
    %351 = vmatpush1.msra.mxu0 0.0
    %352 = vmatprep.subr.mxu0 0.0
    %353 = vmatpush1.msra.mxu0 0.0
    %354 = vmatprep.subr.mxu0 0.0
    %355 = vmatpush1.msra.mxu0 0.0
    %356 = vmatprep.subr.mxu0 0.0
    %357 = vmatpush1.msra.mxu0 0.0
    %358 = vmatprep.subr.mxu0 0.0
    %359 = vmatpush1.msra.mxu0 0.0
    %360 = vmatprep.subr.mxu0 0.0
    %361 = vmatpush1.msra.mxu0 0.0
    %362 = vmatprep.subr.mxu0 0.0
    %363 = vmatpush1.msra.mxu0 0.0
    %364 = vmatprep.subr.mxu0 0.0
    %365 = vmatpush1.msra.mxu0 0.0
    %366 = vmatprep.subr.mxu0 0.0
    %367 = vmatpush1.msra.mxu0 0.0
    %368 = vmatprep.subr.mxu0 0.0
    %369 = vmatpush1.msra.mxu0 0.0
    %370 = vmatprep.subr.mxu0 0.0
    %371 = vmatpush1.msra.mxu0 0.0
    %372 = vmatprep.subr.mxu0 0.0
    %373 = vmatpush1.msra.mxu0 0.0
    %374 = vmatprep.subr.mxu0 0.0
    %375 = vmatpush1.msra.mxu0 %v346
    %376 = vmatprep.subr.mxu0 0.0
    %377 = vmatpush1.msra.mxu0 %v345
    %378 = vmatprep.subr.mxu0 0.0
    %379 = vmatpush1.msra.mxu0 %v344
    %380 = vmatprep.subr.mxu0 0.0
    %381 = vmatpush1.msra.mxu0 %v343
    %382 = vmatprep.subr.mxu0 0.0
    %383 = vmatpush2.msra.mxu0 0.0
    %384 = vmatprep.subr.mxu0 0.0
    %385 = vmatpush2.msra.mxu0 0.0
    %386 = vmatprep.subr.mxu0 0.0
    %387 = vmatpush2.msra.mxu0 0.0
    %388 = vmatprep.subr.mxu0 0.0
    %389 = vmatpush2.msra.mxu0 0.0
    %390 = vmatprep.subr.mxu0 0.0
    %391 = vmatpush2.msra.mxu0 0.0
    %392 = vmatprep.subr.mxu0 0.0
    %393 = vmatpush2.msra.mxu0 0.0
    %394 = vmatprep.subr.mxu0 0.0
    %395 = vmatpush2.msra.mxu0 0.0
    %396 = vmatprep.subr.mxu0 0.0
    %397 = vmatpush2.msra.mxu0 0.0
    %398 = vmatprep.subr.mxu0 0.0
    %399 = vmatpush2.msra.mxu0 0.0
    %400 = vmatprep.subr.mxu0 0.0
    %401 = vmatpush2.msra.mxu0 0.0
    %402 = vmatprep.subr.mxu0 0.0
    %403 = vmatpush2.msra.mxu0 0.0
    %404 = vmatprep.subr.mxu0 0.0
    %405 = vmatpush2.msra.mxu0 0.0
    %406 = vmatprep.subr.mxu0 0.0
    %407 = vmatpush2.msra.mxu0 0.0
    %408 = vmatprep.subr.mxu0 0.0
    %409 = vmatpush2.msra.mxu0 0.0
    %410 = vmatprep.subr.mxu0 0.0
    %411 = vmatpush2.msra.mxu0 0.0
    %412 = vmatprep.subr.mxu0 0.0
    %413 = vmatpush2.msra.mxu0 0.0
    %414 = vmatprep.mubr.f32.mxu0 0.0
    %415 = vmatmul.mubr.f32.gmra.mxu0 %v348
    %v416 = vpop.f32.mrf.mxu0
    %v417 = vadd.f32 0.0, %v416
    %v418 = vpop.f32.mrf.mxu0
    %419 = vdwg.mxu0
    %v420 = vadd.f32 %v340, %v417
    %v421 = vxor.u32 %v420, 2147483648
    %v422 = vmul.f32 %v421, 1.442695
    %v423 = vpow.pop %v422
    %v424 = vadd.f32 %v423, 1.0
    %v425 = vrcp.pop %v424
    %v426 = vmul.f32 1.0, %v425
    %v427 = vtanh.pop %v420
    %429 = vrot.lane.b32.xlu0 %v342, 32
    %v430 = vpop.permute.xlu0 %429
    %v432 = vmul.f32 %v426, %v430
    %434 = vrot.lane.b32.xlu0 %v427, 64
    %v435 = vpop.permute.xlu0 %434
    %v437 = vmul.f32 %v426, %v435
    %439 = vrot.lane.b32.xlu0 %v437, 32
    %v440 = vpop.permute.xlu0 %439
    %v442 = vadd.f32 %v432, %v440
    %v443 = vtanh.pop %v442
    %445 = vrot.lane.b32.xlu0 %v443, 64
    %v446 = vpop.permute.xlu0 %445
    %v448 = vmul.f32 %v426, %v446
    %450 = vrot.lane.b32.xlu0 %v448, 32
    %v451 = vpop.permute.xlu0 %450
    %453 = vst.msk [vmem:[#allocation2] sm:$0x3] %vm209, %v451
    %455 = vrot.lane.b32.xlu0 %v442, 96
    %v456 = vpop.permute.xlu0 %455
    %458 = vst.msk [vmem:[#allocation3] sm:$0x3] %vm209, %v456
    %s459 = scalar_lea.vmem [#allocation14], 2
    %460 = vst.msk [vmem:[%s459] sm:$0x3] %vm209, %v451
    %s461 = scalar_lea.vmem [#allocation9], 12
    %v462 = vld [vmem:[%s461] sm:$0x3]
    %v463 = vld [vmem:[#allocation4] sm:$0x3]
    %v464 = vld [vmem:[#allocation5] sm:$0x3]
    %v465 = vld [vmem:[#allocation12] sm:$0xff]
    %v466 = vld [vmem:[#allocation12 + $0x8] sm:$0xff]
    %v467 = vld [vmem:[#allocation12 + $0x10] sm:$0xff]
    %v468 = vld [vmem:[#allocation12 + $0x18] sm:$0xff]
    %v470 = vsel %vm102, %v463, 0
    %472 = vmatprep.subr.mxu0 0.0
    %473 = vmatpush1.msra.mxu0 0.0
    %474 = vmatprep.subr.mxu0 0.0
    %475 = vmatpush1.msra.mxu0 0.0
    %476 = vmatprep.subr.mxu0 0.0
    %477 = vmatpush1.msra.mxu0 0.0
    %478 = vmatprep.subr.mxu0 0.0
    %479 = vmatpush1.msra.mxu0 0.0
    %480 = vmatprep.subr.mxu0 0.0
    %481 = vmatpush1.msra.mxu0 0.0
    %482 = vmatprep.subr.mxu0 0.0
    %483 = vmatpush1.msra.mxu0 0.0
    %484 = vmatprep.subr.mxu0 0.0
    %485 = vmatpush1.msra.mxu0 0.0
    %486 = vmatprep.subr.mxu0 0.0
    %487 = vmatpush1.msra.mxu0 0.0
    %488 = vmatprep.subr.mxu0 0.0
    %489 = vmatpush1.msra.mxu0 0.0
    %490 = vmatprep.subr.mxu0 0.0
    %491 = vmatpush1.msra.mxu0 0.0
    %492 = vmatprep.subr.mxu0 0.0
    %493 = vmatpush1.msra.mxu0 0.0
    %494 = vmatprep.subr.mxu0 0.0
    %495 = vmatpush1.msra.mxu0 0.0
    %496 = vmatprep.subr.mxu0 0.0
    %497 = vmatpush1.msra.mxu0 %v468
    %498 = vmatprep.subr.mxu0 0.0
    %499 = vmatpush1.msra.mxu0 %v467
    %500 = vmatprep.subr.mxu0 0.0
    %501 = vmatpush1.msra.mxu0 %v466
    %502 = vmatprep.subr.mxu0 0.0
    %503 = vmatpush1.msra.mxu0 %v465
    %504 = vmatprep.subr.mxu0 0.0
    %505 = vmatpush2.msra.mxu0 0.0
    %506 = vmatprep.subr.mxu0 0.0
    %507 = vmatpush2.msra.mxu0 0.0
    %508 = vmatprep.subr.mxu0 0.0
    %509 = vmatpush2.msra.mxu0 0.0
    %510 = vmatprep.subr.mxu0 0.0
    %511 = vmatpush2.msra.mxu0 0.0
    %512 = vmatprep.subr.mxu0 0.0
    %513 = vmatpush2.msra.mxu0 0.0
    %514 = vmatprep.subr.mxu0 0.0
    %515 = vmatpush2.msra.mxu0 0.0
    %516 = vmatprep.subr.mxu0 0.0
    %517 = vmatpush2.msra.mxu0 0.0
    %518 = vmatprep.subr.mxu0 0.0
    %519 = vmatpush2.msra.mxu0 0.0
    %520 = vmatprep.subr.mxu0 0.0
    %521 = vmatpush2.msra.mxu0 0.0
    %522 = vmatprep.subr.mxu0 0.0
    %523 = vmatpush2.msra.mxu0 0.0
    %524 = vmatprep.subr.mxu0 0.0
    %525 = vmatpush2.msra.mxu0 0.0
    %526 = vmatprep.subr.mxu0 0.0
    %527 = vmatpush2.msra.mxu0 0.0
    %528 = vmatprep.subr.mxu0 0.0
    %529 = vmatpush2.msra.mxu0 0.0
    %530 = vmatprep.subr.mxu0 0.0
    %531 = vmatpush2.msra.mxu0 0.0
    %532 = vmatprep.subr.mxu0 0.0
    %533 = vmatpush2.msra.mxu0 0.0
    %534 = vmatprep.subr.mxu0 0.0
    %535 = vmatpush2.msra.mxu0 0.0
    %536 = vmatprep.mubr.f32.mxu0 0.0
    %537 = vmatmul.mubr.f32.gmra.mxu0 %v470
    %v538 = vpop.f32.mrf.mxu0
    %v539 = vadd.f32 0.0, %v538
    %v540 = vpop.f32.mrf.mxu0
    %541 = vdwg.mxu0
    %v542 = vadd.f32 %v462, %v539
    %v543 = vxor.u32 %v542, 2147483648
    %v544 = vmul.f32 %v543, 1.442695
    %v545 = vpow.pop %v544
    %v546 = vadd.f32 %v545, 1.0
    %v547 = vrcp.pop %v546
    %v548 = vmul.f32 1.0, %v547
    %v549 = vtanh.pop %v542
    %551 = vrot.lane.b32.xlu0 %v464, 32
    %v552 = vpop.permute.xlu0 %551
    %v554 = vmul.f32 %v548, %v552
    %556 = vrot.lane.b32.xlu0 %v549, 64
    %v557 = vpop.permute.xlu0 %556
    %v559 = vmul.f32 %v548, %v557
    %561 = vrot.lane.b32.xlu0 %v559, 32
    %v562 = vpop.permute.xlu0 %561
    %v564 = vadd.f32 %v554, %v562
    %v565 = vtanh.pop %v564
    %567 = vrot.lane.b32.xlu0 %v565, 64
    %v568 = vpop.permute.xlu0 %567
    %v570 = vmul.f32 %v548, %v568
    %572 = vrot.lane.b32.xlu0 %v570, 32
    %v573 = vpop.permute.xlu0 %572
    %575 = vst.msk [vmem:[#allocation4] sm:$0x3] %vm209, %v573
    %577 = vrot.lane.b32.xlu0 %v564, 96
    %v578 = vpop.permute.xlu0 %577
    %580 = vst.msk [vmem:[#allocation5] sm:$0x3] %vm209, %v578
    %s581 = scalar_lea.vmem [#allocation15], 12
    %582 = vst.msk [vmem:[%s581] sm:$0x3] %vm209, %v573
    %s583 = scalar_lea.vmem [#allocation6], 4
    %v584 = vld [vmem:[%s583] sm:$0x3]
    %v585 = vld [vmem:[#allocation2] sm:$0x3]
    %v586 = vld [vmem:[#allocation3] sm:$0x3]
    %v587 = vld [vmem:[#allocation11] sm:$0xff]
    %v588 = vld [vmem:[#allocation11 + $0x8] sm:$0xff]
    %v589 = vld [vmem:[#allocation11 + $0x10] sm:$0xff]
    %v590 = vld [vmem:[#allocation11 + $0x18] sm:$0xff]
    %v592 = vsel %vm102, %v585, 0
    %594 = vmatprep.subr.mxu0 0.0
    %595 = vmatpush1.msra.mxu0 0.0
    %596 = vmatprep.subr.mxu0 0.0
    %597 = vmatpush1.msra.mxu0 0.0
    %598 = vmatprep.subr.mxu0 0.0
    %599 = vmatpush1.msra.mxu0 0.0
    %600 = vmatprep.subr.mxu0 0.0
    %601 = vmatpush1.msra.mxu0 0.0
    %602 = vmatprep.subr.mxu0 0.0
    %603 = vmatpush1.msra.mxu0 0.0
    %604 = vmatprep.subr.mxu0 0.0
    %605 = vmatpush1.msra.mxu0 0.0
    %606 = vmatprep.subr.mxu0 0.0
    %607 = vmatpush1.msra.mxu0 0.0
    %608 = vmatprep.subr.mxu0 0.0
    %609 = vmatpush1.msra.mxu0 0.0
    %610 = vmatprep.subr.mxu0 0.0
    %611 = vmatpush1.msra.mxu0 0.0
    %612 = vmatprep.subr.mxu0 0.0
    %613 = vmatpush1.msra.mxu0 0.0
    %614 = vmatprep.subr.mxu0 0.0
    %615 = vmatpush1.msra.mxu0 0.0
    %616 = vmatprep.subr.mxu0 0.0
    %617 = vmatpush1.msra.mxu0 0.0
    %618 = vmatprep.subr.mxu0 0.0
    %619 = vmatpush1.msra.mxu0 %v590
    %620 = vmatprep.subr.mxu0 0.0
    %621 = vmatpush1.msra.mxu0 %v589
    %622 = vmatprep.subr.mxu0 0.0
    %623 = vmatpush1.msra.mxu0 %v588
    %624 = vmatprep.subr.mxu0 0.0
    %625 = vmatpush1.msra.mxu0 %v587
    %626 = vmatprep.subr.mxu0 0.0
    %627 = vmatpush2.msra.mxu0 0.0
    %628 = vmatprep.subr.mxu0 0.0
    %629 = vmatpush2.msra.mxu0 0.0
    %630 = vmatprep.subr.mxu0 0.0
    %631 = vmatpush2.msra.mxu0 0.0
    %632 = vmatprep.subr.mxu0 0.0
    %633 = vmatpush2.msra.mxu0 0.0
    %634 = vmatprep.subr.mxu0 0.0
    %635 = vmatpush2.msra.mxu0 0.0
    %636 = vmatprep.subr.mxu0 0.0
    %637 = vmatpush2.msra.mxu0 0.0
    %638 = vmatprep.subr.mxu0 0.0
    %639 = vmatpush2.msra.mxu0 0.0
    %640 = vmatprep.subr.mxu0 0.0
    %641 = vmatpush2.msra.mxu0 0.0
    %642 = vmatprep.subr.mxu0 0.0
    %643 = vmatpush2.msra.mxu0 0.0
    %644 = vmatprep.subr.mxu0 0.0
    %645 = vmatpush2.msra.mxu0 0.0
    %646 = vmatprep.subr.mxu0 0.0
    %647 = vmatpush2.msra.mxu0 0.0
    %648 = vmatprep.subr.mxu0 0.0
    %649 = vmatpush2.msra.mxu0 0.0
    %650 = vmatprep.subr.mxu0 0.0
    %651 = vmatpush2.msra.mxu0 0.0
    %652 = vmatprep.subr.mxu0 0.0
    %653 = vmatpush2.msra.mxu0 0.0
    %654 = vmatprep.subr.mxu0 0.0
    %655 = vmatpush2.msra.mxu0 0.0
    %656 = vmatprep.subr.mxu0 0.0
    %657 = vmatpush2.msra.mxu0 0.0
    %658 = vmatprep.mubr.f32.mxu0 0.0
    %659 = vmatmul.mubr.f32.gmra.mxu0 %v592
    %v660 = vpop.f32.mrf.mxu0
    %v661 = vadd.f32 0.0, %v660
    %v662 = vpop.f32.mrf.mxu0
    %663 = vdwg.mxu0
    %v664 = vadd.f32 %v584, %v661
    %v665 = vxor.u32 %v664, 2147483648
    %v666 = vmul.f32 %v665, 1.442695
    %v667 = vpow.pop %v666
    %v668 = vadd.f32 %v667, 1.0
    %v669 = vrcp.pop %v668
    %v670 = vmul.f32 1.0, %v669
    %v671 = vtanh.pop %v664
    %673 = vrot.lane.b32.xlu0 %v586, 32
    %v674 = vpop.permute.xlu0 %673
    %v676 = vmul.f32 %v670, %v674
    %678 = vrot.lane.b32.xlu0 %v671, 64
    %v679 = vpop.permute.xlu0 %678
    %v681 = vmul.f32 %v670, %v679
    %683 = vrot.lane.b32.xlu0 %v681, 32
    %v684 = vpop.permute.xlu0 %683
    %v686 = vadd.f32 %v676, %v684
    %v687 = vtanh.pop %v686
    %689 = vrot.lane.b32.xlu0 %v687, 64
    %v690 = vpop.permute.xlu0 %689
    %v692 = vmul.f32 %v670, %v690
    %694 = vrot.lane.b32.xlu0 %v692, 32
    %v695 = vpop.permute.xlu0 %694
    %697 = vst.msk [vmem:[#allocation2] sm:$0x3] %vm209, %v695
    %699 = vrot.lane.b32.xlu0 %v686, 96
    %v700 = vpop.permute.xlu0 %699
    %702 = vst.msk [vmem:[#allocation3] sm:$0x3] %vm209, %v700
    %s703 = scalar_lea.vmem [#allocation14], 4
    %704 = vst.msk [vmem:[%s703] sm:$0x3] %vm209, %v695
    %s705 = scalar_lea.vmem [#allocation9], 10
    %v706 = vld [vmem:[%s705] sm:$0x3]
    %v707 = vld [vmem:[#allocation4] sm:$0x3]
    %v708 = vld [vmem:[#allocation5] sm:$0x3]
    %v709 = vld [vmem:[#allocation12] sm:$0xff]
    %v710 = vld [vmem:[#allocation12 + $0x8] sm:$0xff]
    %v711 = vld [vmem:[#allocation12 + $0x10] sm:$0xff]
    %v712 = vld [vmem:[#allocation12 + $0x18] sm:$0xff]
    %v714 = vsel %vm102, %v707, 0
    %716 = vmatprep.subr.mxu0 0.0
    %717 = vmatpush1.msra.mxu0 0.0
    %718 = vmatprep.subr.mxu0 0.0
    %719 = vmatpush1.msra.mxu0 0.0
    %720 = vmatprep.subr.mxu0 0.0
    %721 = vmatpush1.msra.mxu0 0.0
    %722 = vmatprep.subr.mxu0 0.0
    %723 = vmatpush1.msra.mxu0 0.0
    %724 = vmatprep.subr.mxu0 0.0
    %725 = vmatpush1.msra.mxu0 0.0
    %726 = vmatprep.subr.mxu0 0.0
    %727 = vmatpush1.msra.mxu0 0.0
    %728 = vmatprep.subr.mxu0 0.0
    %729 = vmatpush1.msra.mxu0 0.0
    %730 = vmatprep.subr.mxu0 0.0
    %731 = vmatpush1.msra.mxu0 0.0
    %732 = vmatprep.subr.mxu0 0.0
    %733 = vmatpush1.msra.mxu0 0.0
    %734 = vmatprep.subr.mxu0 0.0
    %735 = vmatpush1.msra.mxu0 0.0
    %736 = vmatprep.subr.mxu0 0.0
    %737 = vmatpush1.msra.mxu0 0.0
    %738 = vmatprep.subr.mxu0 0.0
    %739 = vmatpush1.msra.mxu0 0.0
    %740 = vmatprep.subr.mxu0 0.0
    %741 = vmatpush1.msra.mxu0 %v712
    %742 = vmatprep.subr.mxu0 0.0
    %743 = vmatpush1.msra.mxu0 %v711
    %744 = vmatprep.subr.mxu0 0.0
    %745 = vmatpush1.msra.mxu0 %v710
    %746 = vmatprep.subr.mxu0 0.0
    %747 = vmatpush1.msra.mxu0 %v709
    %748 = vmatprep.subr.mxu0 0.0
    %749 = vmatpush2.msra.mxu0 0.0
    %750 = vmatprep.subr.mxu0 0.0
    %751 = vmatpush2.msra.mxu0 0.0
    %752 = vmatprep.subr.mxu0 0.0
    %753 = vmatpush2.msra.mxu0 0.0
    %754 = vmatprep.subr.mxu0 0.0
    %755 = vmatpush2.msra.mxu0 0.0
    %756 = vmatprep.subr.mxu0 0.0
    %757 = vmatpush2.msra.mxu0 0.0
    %758 = vmatprep.subr.mxu0 0.0
    %759 = vmatpush2.msra.mxu0 0.0
    %760 = vmatprep.subr.mxu0 0.0
    %761 = vmatpush2.msra.mxu0 0.0
    %762 = vmatprep.subr.mxu0 0.0
    %763 = vmatpush2.msra.mxu0 0.0
    %764 = vmatprep.subr.mxu0 0.0
    %765 = vmatpush2.msra.mxu0 0.0
    %766 = vmatprep.subr.mxu0 0.0
    %767 = vmatpush2.msra.mxu0 0.0
    %768 = vmatprep.subr.mxu0 0.0
    %769 = vmatpush2.msra.mxu0 0.0
    %770 = vmatprep.subr.mxu0 0.0
    %771 = vmatpush2.msra.mxu0 0.0
    %772 = vmatprep.subr.mxu0 0.0
    %773 = vmatpush2.msra.mxu0 0.0
    %774 = vmatprep.subr.mxu0 0.0
    %775 = vmatpush2.msra.mxu0 0.0
    %776 = vmatprep.subr.mxu0 0.0
    %777 = vmatpush2.msra.mxu0 0.0
    %778 = vmatprep.subr.mxu0 0.0
    %779 = vmatpush2.msra.mxu0 0.0
    %780 = vmatprep.mubr.f32.mxu0 0.0
    %781 = vmatmul.mubr.f32.gmra.mxu0 %v714
    %v782 = vpop.f32.mrf.mxu0
    %v783 = vadd.f32 0.0, %v782
    %v784 = vpop.f32.mrf.mxu0
    %785 = vdwg.mxu0
    %v786 = vadd.f32 %v706, %v783
    %v787 = vxor.u32 %v786, 2147483648
    %v788 = vmul.f32 %v787, 1.442695
    %v789 = vpow.pop %v788
    %v790 = vadd.f32 %v789, 1.0
    %v791 = vrcp.pop %v790
    %v792 = vmul.f32 1.0, %v791
    %v793 = vtanh.pop %v786
    %795 = vrot.lane.b32.xlu0 %v708, 32
    %v796 = vpop.permute.xlu0 %795
    %v798 = vmul.f32 %v792, %v796
    %800 = vrot.lane.b32.xlu0 %v793, 64
    %v801 = vpop.permute.xlu0 %800
    %v803 = vmul.f32 %v792, %v801
    %805 = vrot.lane.b32.xlu0 %v803, 32
    %v806 = vpop.permute.xlu0 %805
    %v808 = vadd.f32 %v798, %v806
    %v809 = vtanh.pop %v808
    %811 = vrot.lane.b32.xlu0 %v809, 64
    %v812 = vpop.permute.xlu0 %811
    %v814 = vmul.f32 %v792, %v812
    %816 = vrot.lane.b32.xlu0 %v814, 32
    %v817 = vpop.permute.xlu0 %816
    %819 = vst.msk [vmem:[#allocation4] sm:$0x3] %vm209, %v817
    %821 = vrot.lane.b32.xlu0 %v808, 96
    %v822 = vpop.permute.xlu0 %821
    %824 = vst.msk [vmem:[#allocation5] sm:$0x3] %vm209, %v822
    %s825 = scalar_lea.vmem [#allocation15], 10
    %826 = vst.msk [vmem:[%s825] sm:$0x3] %vm209, %v817
    %s827 = scalar_lea.vmem [#allocation6], 6
    %v828 = vld [vmem:[%s827] sm:$0x3]
    %v829 = vld [vmem:[#allocation2] sm:$0x3]
    %v830 = vld [vmem:[#allocation3] sm:$0x3]
    %v831 = vld [vmem:[#allocation11] sm:$0xff]
    %v832 = vld [vmem:[#allocation11 + $0x8] sm:$0xff]
    %v833 = vld [vmem:[#allocation11 + $0x10] sm:$0xff]
    %v834 = vld [vmem:[#allocation11 + $0x18] sm:$0xff]
    %v836 = vsel %vm102, %v829, 0
    %838 = vmatprep.subr.mxu0 0.0
    %839 = vmatpush1.msra.mxu0 0.0
    %840 = vmatprep.subr.mxu0 0.0
    %841 = vmatpush1.msra.mxu0 0.0
    %842 = vmatprep.subr.mxu0 0.0
    %843 = vmatpush1.msra.mxu0 0.0
    %844 = vmatprep.subr.mxu0 0.0
    %845 = vmatpush1.msra.mxu0 0.0
    %846 = vmatprep.subr.mxu0 0.0
    %847 = vmatpush1.msra.mxu0 0.0
    %848 = vmatprep.subr.mxu0 0.0
    %849 = vmatpush1.msra.mxu0 0.0
    %850 = vmatprep.subr.mxu0 0.0
    %851 = vmatpush1.msra.mxu0 0.0
    %852 = vmatprep.subr.mxu0 0.0
    %853 = vmatpush1.msra.mxu0 0.0
    %854 = vmatprep.subr.mxu0 0.0
    %855 = vmatpush1.msra.mxu0 0.0
    %856 = vmatprep.subr.mxu0 0.0
    %857 = vmatpush1.msra.mxu0 0.0
    %858 = vmatprep.subr.mxu0 0.0
    %859 = vmatpush1.msra.mxu0 0.0
    %860 = vmatprep.subr.mxu0 0.0
    %861 = vmatpush1.msra.mxu0 0.0
    %862 = vmatprep.subr.mxu0 0.0
    %863 = vmatpush1.msra.mxu0 %v834
    %864 = vmatprep.subr.mxu0 0.0
    %865 = vmatpush1.msra.mxu0 %v833
    %866 = vmatprep.subr.mxu0 0.0
    %867 = vmatpush1.msra.mxu0 %v832
    %868 = vmatprep.subr.mxu0 0.0
    %869 = vmatpush1.msra.mxu0 %v831
    %870 = vmatprep.subr.mxu0 0.0
    %871 = vmatpush2.msra.mxu0 0.0
    %872 = vmatprep.subr.mxu0 0.0
    %873 = vmatpush2.msra.mxu0 0.0
    %874 = vmatprep.subr.mxu0 0.0
    %875 = vmatpush2.msra.mxu0 0.0
    %876 = vmatprep.subr.mxu0 0.0
    %877 = vmatpush2.msra.mxu0 0.0
    %878 = vmatprep.subr.mxu0 0.0
    %879 = vmatpush2.msra.mxu0 0.0
    %880 = vmatprep.subr.mxu0 0.0
    %881 = vmatpush2.msra.mxu0 0.0
    %882 = vmatprep.subr.mxu0 0.0
    %883 = vmatpush2.msra.mxu0 0.0
    %884 = vmatprep.subr.mxu0 0.0
    %885 = vmatpush2.msra.mxu0 0.0
    %886 = vmatprep.subr.mxu0 0.0
    %887 = vmatpush2.msra.mxu0 0.0
    %888 = vmatprep.subr.mxu0 0.0
    %889 = vmatpush2.msra.mxu0 0.0
    %890 = vmatprep.subr.mxu0 0.0
    %891 = vmatpush2.msra.mxu0 0.0
    %892 = vmatprep.subr.mxu0 0.0
    %893 = vmatpush2.msra.mxu0 0.0
    %894 = vmatprep.subr.mxu0 0.0
    %895 = vmatpush2.msra.mxu0 0.0
    %896 = vmatprep.subr.mxu0 0.0
    %897 = vmatpush2.msra.mxu0 0.0
    %898 = vmatprep.subr.mxu0 0.0
    %899 = vmatpush2.msra.mxu0 0.0
    %900 = vmatprep.subr.mxu0 0.0
    %901 = vmatpush2.msra.mxu0 0.0
    %902 = vmatprep.mubr.f32.mxu0 0.0
    %903 = vmatmul.mubr.f32.gmra.mxu0 %v836
    %v904 = vpop.f32.mrf.mxu0
    %v905 = vadd.f32 0.0, %v904
    %v906 = vpop.f32.mrf.mxu0
    %907 = vdwg.mxu0
    %v908 = vadd.f32 %v828, %v905
    %v909 = vxor.u32 %v908, 2147483648
    %v910 = vmul.f32 %v909, 1.442695
    %v911 = vpow.pop %v910
    %v912 = vadd.f32 %v911, 1.0
    %v913 = vrcp.pop %v912
    %v914 = vmul.f32 1.0, %v913
    %v915 = vtanh.pop %v908
    %917 = vrot.lane.b32.xlu0 %v830, 32
    %v918 = vpop.permute.xlu0 %917
    %v920 = vmul.f32 %v914, %v918
    %922 = vrot.lane.b32.xlu0 %v915, 64
    %v923 = vpop.permute.xlu0 %922
    %v925 = vmul.f32 %v914, %v923
    %927 = vrot.lane.b32.xlu0 %v925, 32
    %v928 = vpop.permute.xlu0 %927
    %v930 = vadd.f32 %v920, %v928
    %v931 = vtanh.pop %v930
    %933 = vrot.lane.b32.xlu0 %v931, 64
    %v934 = vpop.permute.xlu0 %933
    %v936 = vmul.f32 %v914, %v934
    %938 = vrot.lane.b32.xlu0 %v936, 32
    %v939 = vpop.permute.xlu0 %938
    %941 = vst.msk [vmem:[#allocation2] sm:$0x3] %vm209, %v939
    %943 = vrot.lane.b32.xlu0 %v930, 96
    %v944 = vpop.permute.xlu0 %943
    %946 = vst.msk [vmem:[#allocation3] sm:$0x3] %vm209, %v944
    %s947 = scalar_lea.vmem [#allocation14], 6
    %948 = vst.msk [vmem:[%s947] sm:$0x3] %vm209, %v939
    %s949 = scalar_lea.vmem [#allocation9], 8
    %v950 = vld [vmem:[%s949] sm:$0x3]
    %v951 = vld [vmem:[#allocation4] sm:$0x3]
    %v952 = vld [vmem:[#allocation5] sm:$0x3]
    %v953 = vld [vmem:[#allocation12] sm:$0xff]
    %v954 = vld [vmem:[#allocation12 + $0x8] sm:$0xff]
    %v955 = vld [vmem:[#allocation12 + $0x10] sm:$0xff]
    %v956 = vld [vmem:[#allocation12 + $0x18] sm:$0xff]
    %v958 = vsel %vm102, %v951, 0
    %960 = vmatprep.subr.mxu0 0.0
    %961 = vmatpush1.msra.mxu0 0.0
    %962 = vmatprep.subr.mxu0 0.0
    %963 = vmatpush1.msra.mxu0 0.0
    %964 = vmatprep.subr.mxu0 0.0
    %965 = vmatpush1.msra.mxu0 0.0
    %966 = vmatprep.subr.mxu0 0.0
    %967 = vmatpush1.msra.mxu0 0.0
    %968 = vmatprep.subr.mxu0 0.0
    %969 = vmatpush1.msra.mxu0 0.0
    %970 = vmatprep.subr.mxu0 0.0
    %971 = vmatpush1.msra.mxu0 0.0
    %972 = vmatprep.subr.mxu0 0.0
    %973 = vmatpush1.msra.mxu0 0.0
    %974 = vmatprep.subr.mxu0 0.0
    %975 = vmatpush1.msra.mxu0 0.0
    %976 = vmatprep.subr.mxu0 0.0
    %977 = vmatpush1.msra.mxu0 0.0
    %978 = vmatprep.subr.mxu0 0.0
    %979 = vmatpush1.msra.mxu0 0.0
    %980 = vmatprep.subr.mxu0 0.0
    %981 = vmatpush1.msra.mxu0 0.0
    %982 = vmatprep.subr.mxu0 0.0
    %983 = vmatpush1.msra.mxu0 0.0
    %984 = vmatprep.subr.mxu0 0.0
    %985 = vmatpush1.msra.mxu0 %v956
    %986 = vmatprep.subr.mxu0 0.0
    %987 = vmatpush1.msra.mxu0 %v955
    %988 = vmatprep.subr.mxu0 0.0
    %989 = vmatpush1.msra.mxu0 %v954
    %990 = vmatprep.subr.mxu0 0.0
    %991 = vmatpush1.msra.mxu0 %v953
    %992 = vmatprep.subr.mxu0 0.0
    %993 = vmatpush2.msra.mxu0 0.0
    %994 = vmatprep.subr.mxu0 0.0
    %995 = vmatpush2.msra.mxu0 0.0
    %996 = vmatprep.subr.mxu0 0.0
    %997 = vmatpush2.msra.mxu0 0.0
    %998 = vmatprep.subr.mxu0 0.0
    %999 = vmatpush2.msra.mxu0 0.0
    %1000 = vmatprep.subr.mxu0 0.0
    %1001 = vmatpush2.msra.mxu0 0.0
    %1002 = vmatprep.subr.mxu0 0.0
    %1003 = vmatpush2.msra.mxu0 0.0
    %1004 = vmatprep.subr.mxu0 0.0
    %1005 = vmatpush2.msra.mxu0 0.0
    %1006 = vmatprep.subr.mxu0 0.0
    %1007 = vmatpush2.msra.mxu0 0.0
    %1008 = vmatprep.subr.mxu0 0.0
    %1009 = vmatpush2.msra.mxu0 0.0
    %1010 = vmatprep.subr.mxu0 0.0
    %1011 = vmatpush2.msra.mxu0 0.0
    %1012 = vmatprep.subr.mxu0 0.0
    %1013 = vmatpush2.msra.mxu0 0.0
    %1014 = vmatprep.subr.mxu0 0.0
    %1015 = vmatpush2.msra.mxu0 0.0
    %1016 = vmatprep.subr.mxu0 0.0
    %1017 = vmatpush2.msra.mxu0 0.0
    %1018 = vmatprep.subr.mxu0 0.0
    %1019 = vmatpush2.msra.mxu0 0.0
    %1020 = vmatprep.subr.mxu0 0.0
    %1021 = vmatpush2.msra.mxu0 0.0
    %1022 = vmatprep.subr.mxu0 0.0
    %1023 = vmatpush2.msra.mxu0 0.0
    %1024 = vmatprep.mubr.f32.mxu0 0.0
    %1025 = vmatmul.mubr.f32.gmra.mxu0 %v958
    %v1026 = vpop.f32.mrf.mxu0
    %v1027 = vadd.f32 0.0, %v1026
    %v1028 = vpop.f32.mrf.mxu0
    %1029 = vdwg.mxu0
    %v1030 = vadd.f32 %v950, %v1027
    %v1031 = vxor.u32 %v1030, 2147483648
    %v1032 = vmul.f32 %v1031, 1.442695
    %v1033 = vpow.pop %v1032
    %v1034 = vadd.f32 %v1033, 1.0
    %v1035 = vrcp.pop %v1034
    %v1036 = vmul.f32 1.0, %v1035
    %v1037 = vtanh.pop %v1030
    %1039 = vrot.lane.b32.xlu0 %v952, 32
    %v1040 = vpop.permute.xlu0 %1039
    %v1042 = vmul.f32 %v1036, %v1040
    %1044 = vrot.lane.b32.xlu0 %v1037, 64
    %v1045 = vpop.permute.xlu0 %1044
    %v1047 = vmul.f32 %v1036, %v1045
    %1049 = vrot.lane.b32.xlu0 %v1047, 32
    %v1050 = vpop.permute.xlu0 %1049
    %v1052 = vadd.f32 %v1042, %v1050
    %v1053 = vtanh.pop %v1052
    %1055 = vrot.lane.b32.xlu0 %v1053, 64
    %v1056 = vpop.permute.xlu0 %1055
    %v1058 = vmul.f32 %v1036, %v1056
    %1060 = vrot.lane.b32.xlu0 %v1058, 32
    %v1061 = vpop.permute.xlu0 %1060
    %1063 = vst.msk [vmem:[#allocation4] sm:$0x3] %vm209, %v1061
    %1065 = vrot.lane.b32.xlu0 %v1052, 96
    %v1066 = vpop.permute.xlu0 %1065
    %1068 = vst.msk [vmem:[#allocation5] sm:$0x3] %vm209, %v1066
    %s1069 = scalar_lea.vmem [#allocation15], 8
    %1070 = vst.msk [vmem:[%s1069] sm:$0x3] %vm209, %v1061
    %s1071 = scalar_lea.vmem [#allocation6], 8
    %v1072 = vld [vmem:[%s1071] sm:$0x3]
    %v1073 = vld [vmem:[#allocation2] sm:$0x3]
    %v1074 = vld [vmem:[#allocation3] sm:$0x3]
    %v1075 = vld [vmem:[#allocation11] sm:$0xff]
    %v1076 = vld [vmem:[#allocation11 + $0x8] sm:$0xff]
    %v1077 = vld [vmem:[#allocation11 + $0x10] sm:$0xff]
    %v1078 = vld [vmem:[#allocation11 + $0x18] sm:$0xff]
    %v1080 = vsel %vm102, %v1073, 0
    %1082 = vmatprep.subr.mxu0 0.0
    %1083 = vmatpush1.msra.mxu0 0.0
    %1084 = vmatprep.subr.mxu0 0.0
    %1085 = vmatpush1.msra.mxu0 0.0
    %1086 = vmatprep.subr.mxu0 0.0
    %1087 = vmatpush1.msra.mxu0 0.0
    %1088 = vmatprep.subr.mxu0 0.0
    %1089 = vmatpush1.msra.mxu0 0.0
    %1090 = vmatprep.subr.mxu0 0.0
    %1091 = vmatpush1.msra.mxu0 0.0
    %1092 = vmatprep.subr.mxu0 0.0
    %1093 = vmatpush1.msra.mxu0 0.0
    %1094 = vmatprep.subr.mxu0 0.0
    %1095 = vmatpush1.msra.mxu0 0.0
    %1096 = vmatprep.subr.mxu0 0.0
    %1097 = vmatpush1.msra.mxu0 0.0
    %1098 = vmatprep.subr.mxu0 0.0
    %1099 = vmatpush1.msra.mxu0 0.0
    %1100 = vmatprep.subr.mxu0 0.0
    %1101 = vmatpush1.msra.mxu0 0.0
    %1102 = vmatprep.subr.mxu0 0.0
    %1103 = vmatpush1.msra.mxu0 0.0
    %1104 = vmatprep.subr.mxu0 0.0
    %1105 = vmatpush1.msra.mxu0 0.0
    %1106 = vmatprep.subr.mxu0 0.0
    %1107 = vmatpush1.msra.mxu0 %v1078
    %1108 = vmatprep.subr.mxu0 0.0
    %1109 = vmatpush1.msra.mxu0 %v1077
    %1110 = vmatprep.subr.mxu0 0.0
    %1111 = vmatpush1.msra.mxu0 %v1076
    %1112 = vmatprep.subr.mxu0 0.0
    %1113 = vmatpush1.msra.mxu0 %v1075
    %1114 = vmatprep.subr.mxu0 0.0
    %1115 = vmatpush2.msra.mxu0 0.0
    %1116 = vmatprep.subr.mxu0 0.0
    %1117 = vmatpush2.msra.mxu0 0.0
    %1118 = vmatprep.subr.mxu0 0.0
    %1119 = vmatpush2.msra.mxu0 0.0
    %1120 = vmatprep.subr.mxu0 0.0
    %1121 = vmatpush2.msra.mxu0 0.0
    %1122 = vmatprep.subr.mxu0 0.0
    %1123 = vmatpush2.msra.mxu0 0.0
    %1124 = vmatprep.subr.mxu0 0.0
    %1125 = vmatpush2.msra.mxu0 0.0
    %1126 = vmatprep.subr.mxu0 0.0
    %1127 = vmatpush2.msra.mxu0 0.0
    %1128 = vmatprep.subr.mxu0 0.0
    %1129 = vmatpush2.msra.mxu0 0.0
    %1130 = vmatprep.subr.mxu0 0.0
    %1131 = vmatpush2.msra.mxu0 0.0
    %1132 = vmatprep.subr.mxu0 0.0
    %1133 = vmatpush2.msra.mxu0 0.0
    %1134 = vmatprep.subr.mxu0 0.0
    %1135 = vmatpush2.msra.mxu0 0.0
    %1136 = vmatprep.subr.mxu0 0.0
    %1137 = vmatpush2.msra.mxu0 0.0
    %1138 = vmatprep.subr.mxu0 0.0
    %1139 = vmatpush2.msra.mxu0 0.0
    %1140 = vmatprep.subr.mxu0 0.0
    %1141 = vmatpush2.msra.mxu0 0.0
    %1142 = vmatprep.subr.mxu0 0.0
    %1143 = vmatpush2.msra.mxu0 0.0
    %1144 = vmatprep.subr.mxu0 0.0
    %1145 = vmatpush2.msra.mxu0 0.0
    %1146 = vmatprep.mubr.f32.mxu0 0.0
    %1147 = vmatmul.mubr.f32.gmra.mxu0 %v1080
    %v1148 = vpop.f32.mrf.mxu0
    %v1149 = vadd.f32 0.0, %v1148
    %v1150 = vpop.f32.mrf.mxu0
    %1151 = vdwg.mxu0
    %v1152 = vadd.f32 %v1072, %v1149
    %v1153 = vxor.u32 %v1152, 2147483648
    %v1154 = vmul.f32 %v1153, 1.442695
    %v1155 = vpow.pop %v1154
    %v1156 = vadd.f32 %v1155, 1.0
    %v1157 = vrcp.pop %v1156
    %v1158 = vmul.f32 1.0, %v1157
    %v1159 = vtanh.pop %v1152
    %1161 = vrot.lane.b32.xlu0 %v1074, 32
    %v1162 = vpop.permute.xlu0 %1161
    %v1164 = vmul.f32 %v1158, %v1162
    %1166 = vrot.lane.b32.xlu0 %v1159, 64
    %v1167 = vpop.permute.xlu0 %1166
    %v1169 = vmul.f32 %v1158, %v1167
    %1171 = vrot.lane.b32.xlu0 %v1169, 32
    %v1172 = vpop.permute.xlu0 %1171
    %v1174 = vadd.f32 %v1164, %v1172
    %v1175 = vtanh.pop %v1174
    %1177 = vrot.lane.b32.xlu0 %v1175, 64
    %v1178 = vpop.permute.xlu0 %1177
    %v1180 = vmul.f32 %v1158, %v1178
    %1182 = vrot.lane.b32.xlu0 %v1180, 32
    %v1183 = vpop.permute.xlu0 %1182
    %1185 = vst.msk [vmem:[#allocation2] sm:$0x3] %vm209, %v1183
    %1187 = vrot.lane.b32.xlu0 %v1174, 96
    %v1188 = vpop.permute.xlu0 %1187
    %1190 = vst.msk [vmem:[#allocation3] sm:$0x3] %vm209, %v1188
    %s1191 = scalar_lea.vmem [#allocation14], 8
    %1192 = vst.msk [vmem:[%s1191] sm:$0x3] %vm209, %v1183
    %s1193 = scalar_lea.vmem [#allocation9], 6
    %v1194 = vld [vmem:[%s1193] sm:$0x3]
    %v1195 = vld [vmem:[#allocation4] sm:$0x3]
    %v1196 = vld [vmem:[#allocation5] sm:$0x3]
    %v1197 = vld [vmem:[#allocation12] sm:$0xff]
    %v1198 = vld [vmem:[#allocation12 + $0x8] sm:$0xff]
    %v1199 = vld [vmem:[#allocation12 + $0x10] sm:$0xff]
    %v1200 = vld [vmem:[#allocation12 + $0x18] sm:$0xff]
    %v1202 = vsel %vm102, %v1195, 0
    %1204 = vmatprep.subr.mxu0 0.0
    %1205 = vmatpush1.msra.mxu0 0.0
    %1206 = vmatprep.subr.mxu0 0.0
    %1207 = vmatpush1.msra.mxu0 0.0
    %1208 = vmatprep.subr.mxu0 0.0
    %1209 = vmatpush1.msra.mxu0 0.0
    %1210 = vmatprep.subr.mxu0 0.0
    %1211 = vmatpush1.msra.mxu0 0.0
    %1212 = vmatprep.subr.mxu0 0.0
    %1213 = vmatpush1.msra.mxu0 0.0
    %1214 = vmatprep.subr.mxu0 0.0
    %1215 = vmatpush1.msra.mxu0 0.0
    %1216 = vmatprep.subr.mxu0 0.0
    %1217 = vmatpush1.msra.mxu0 0.0
    %1218 = vmatprep.subr.mxu0 0.0
    %1219 = vmatpush1.msra.mxu0 0.0
    %1220 = vmatprep.subr.mxu0 0.0
    %1221 = vmatpush1.msra.mxu0 0.0
    %1222 = vmatprep.subr.mxu0 0.0
    %1223 = vmatpush1.msra.mxu0 0.0
    %1224 = vmatprep.subr.mxu0 0.0
    %1225 = vmatpush1.msra.mxu0 0.0
    %1226 = vmatprep.subr.mxu0 0.0
    %1227 = vmatpush1.msra.mxu0 0.0
    %1228 = vmatprep.subr.mxu0 0.0
    %1229 = vmatpush1.msra.mxu0 %v1200
    %1230 = vmatprep.subr.mxu0 0.0
    %1231 = vmatpush1.msra.mxu0 %v1199
    %1232 = vmatprep.subr.mxu0 0.0
    %1233 = vmatpush1.msra.mxu0 %v1198
    %1234 = vmatprep.subr.mxu0 0.0
    %1235 = vmatpush1.msra.mxu0 %v1197
    %1236 = vmatprep.subr.mxu0 0.0
    %1237 = vmatpush2.msra.mxu0 0.0
    %1238 = vmatprep.subr.mxu0 0.0
    %1239 = vmatpush2.msra.mxu0 0.0
    %1240 = vmatprep.subr.mxu0 0.0
    %1241 = vmatpush2.msra.mxu0 0.0
    %1242 = vmatprep.subr.mxu0 0.0
    %1243 = vmatpush2.msra.mxu0 0.0
    %1244 = vmatprep.subr.mxu0 0.0
    %1245 = vmatpush2.msra.mxu0 0.0
    %1246 = vmatprep.subr.mxu0 0.0
    %1247 = vmatpush2.msra.mxu0 0.0
    %1248 = vmatprep.subr.mxu0 0.0
    %1249 = vmatpush2.msra.mxu0 0.0
    %1250 = vmatprep.subr.mxu0 0.0
    %1251 = vmatpush2.msra.mxu0 0.0
    %1252 = vmatprep.subr.mxu0 0.0
    %1253 = vmatpush2.msra.mxu0 0.0
    %1254 = vmatprep.subr.mxu0 0.0
    %1255 = vmatpush2.msra.mxu0 0.0
    %1256 = vmatprep.subr.mxu0 0.0
    %1257 = vmatpush2.msra.mxu0 0.0
    %1258 = vmatprep.subr.mxu0 0.0
    %1259 = vmatpush2.msra.mxu0 0.0
    %1260 = vmatprep.subr.mxu0 0.0
    %1261 = vmatpush2.msra.mxu0 0.0
    %1262 = vmatprep.subr.mxu0 0.0
    %1263 = vmatpush2.msra.mxu0 0.0
    %1264 = vmatprep.subr.mxu0 0.0
    %1265 = vmatpush2.msra.mxu0 0.0
    %1266 = vmatprep.subr.mxu0 0.0
    %1267 = vmatpush2.msra.mxu0 0.0
    %1268 = vmatprep.mubr.f32.mxu0 0.0
    %1269 = vmatmul.mubr.f32.gmra.mxu0 %v1202
    %v1270 = vpop.f32.mrf.mxu0
    %v1271 = vadd.f32 0.0, %v1270
    %v1272 = vpop.f32.mrf.mxu0
    %1273 = vdwg.mxu0
    %v1274 = vadd.f32 %v1194, %v1271
    %v1275 = vxor.u32 %v1274, 2147483648
    %v1276 = vmul.f32 %v1275, 1.442695
    %v1277 = vpow.pop %v1276
    %v1278 = vadd.f32 %v1277, 1.0
    %v1279 = vrcp.pop %v1278
    %v1280 = vmul.f32 1.0, %v1279
    %v1281 = vtanh.pop %v1274
    %1283 = vrot.lane.b32.xlu0 %v1196, 32
    %v1284 = vpop.permute.xlu0 %1283
    %v1286 = vmul.f32 %v1280, %v1284
    %1288 = vrot.lane.b32.xlu0 %v1281, 64
    %v1289 = vpop.permute.xlu0 %1288
    %v1291 = vmul.f32 %v1280, %v1289
    %1293 = vrot.lane.b32.xlu0 %v1291, 32
    %v1294 = vpop.permute.xlu0 %1293
    %v1296 = vadd.f32 %v1286, %v1294
    %v1297 = vtanh.pop %v1296
    %1299 = vrot.lane.b32.xlu0 %v1297, 64
    %v1300 = vpop.permute.xlu0 %1299
    %v1302 = vmul.f32 %v1280, %v1300
    %1304 = vrot.lane.b32.xlu0 %v1302, 32
    %v1305 = vpop.permute.xlu0 %1304
    %1307 = vst.msk [vmem:[#allocation4] sm:$0x3] %vm209, %v1305
    %1309 = vrot.lane.b32.xlu0 %v1296, 96
    %v1310 = vpop.permute.xlu0 %1309
    %1312 = vst.msk [vmem:[#allocation5] sm:$0x3] %vm209, %v1310
    %s1313 = scalar_lea.vmem [#allocation15], 6
    %1314 = vst.msk [vmem:[%s1313] sm:$0x3] %vm209, %v1305
    %s1315 = scalar_lea.vmem [#allocation6], 10
    %v1316 = vld [vmem:[%s1315] sm:$0x3]
    %v1317 = vld [vmem:[#allocation2] sm:$0x3]
    %v1318 = vld [vmem:[#allocation3] sm:$0x3]
    %v1319 = vld [vmem:[#allocation11] sm:$0xff]
    %v1320 = vld [vmem:[#allocation11 + $0x8] sm:$0xff]
    %v1321 = vld [vmem:[#allocation11 + $0x10] sm:$0xff]
    %v1322 = vld [vmem:[#allocation11 + $0x18] sm:$0xff]
    %v1324 = vsel %vm102, %v1317, 0
    %1326 = vmatprep.subr.mxu0 0.0
    %1327 = vmatpush1.msra.mxu0 0.0
    %1328 = vmatprep.subr.mxu0 0.0
    %1329 = vmatpush1.msra.mxu0 0.0
    %1330 = vmatprep.subr.mxu0 0.0
    %1331 = vmatpush1.msra.mxu0 0.0
    %1332 = vmatprep.subr.mxu0 0.0
    %1333 = vmatpush1.msra.mxu0 0.0
    %1334 = vmatprep.subr.mxu0 0.0
    %1335 = vmatpush1.msra.mxu0 0.0
    %1336 = vmatprep.subr.mxu0 0.0
    %1337 = vmatpush1.msra.mxu0 0.0
    %1338 = vmatprep.subr.mxu0 0.0
    %1339 = vmatpush1.msra.mxu0 0.0
    %1340 = vmatprep.subr.mxu0 0.0
    %1341 = vmatpush1.msra.mxu0 0.0
    %1342 = vmatprep.subr.mxu0 0.0
    %1343 = vmatpush1.msra.mxu0 0.0
    %1344 = vmatprep.subr.mxu0 0.0
    %1345 = vmatpush1.msra.mxu0 0.0
    %1346 = vmatprep.subr.mxu0 0.0
    %1347 = vmatpush1.msra.mxu0 0.0
    %1348 = vmatprep.subr.mxu0 0.0
    %1349 = vmatpush1.msra.mxu0 0.0
    %1350 = vmatprep.subr.mxu0 0.0
    %1351 = vmatpush1.msra.mxu0 %v1322
    %1352 = vmatprep.subr.mxu0 0.0
    %1353 = vmatpush1.msra.mxu0 %v1321
    %1354 = vmatprep.subr.mxu0 0.0
    %1355 = vmatpush1.msra.mxu0 %v1320
    %1356 = vmatprep.subr.mxu0 0.0
    %1357 = vmatpush1.msra.mxu0 %v1319
    %1358 = vmatprep.subr.mxu0 0.0
    %1359 = vmatpush2.msra.mxu0 0.0
    %1360 = vmatprep.subr.mxu0 0.0
    %1361 = vmatpush2.msra.mxu0 0.0
    %1362 = vmatprep.subr.mxu0 0.0
    %1363 = vmatpush2.msra.mxu0 0.0
    %1364 = vmatprep.subr.mxu0 0.0
    %1365 = vmatpush2.msra.mxu0 0.0
    %1366 = vmatprep.subr.mxu0 0.0
    %1367 = vmatpush2.msra.mxu0 0.0
    %1368 = vmatprep.subr.mxu0 0.0
    %1369 = vmatpush2.msra.mxu0 0.0
    %1370 = vmatprep.subr.mxu0 0.0
    %1371 = vmatpush2.msra.mxu0 0.0
    %1372 = vmatprep.subr.mxu0 0.0
    %1373 = vmatpush2.msra.mxu0 0.0
    %1374 = vmatprep.subr.mxu0 0.0
    %1375 = vmatpush2.msra.mxu0 0.0
    %1376 = vmatprep.subr.mxu0 0.0
    %1377 = vmatpush2.msra.mxu0 0.0
    %1378 = vmatprep.subr.mxu0 0.0
    %1379 = vmatpush2.msra.mxu0 0.0
    %1380 = vmatprep.subr.mxu0 0.0
    %1381 = vmatpush2.msra.mxu0 0.0
    %1382 = vmatprep.subr.mxu0 0.0
    %1383 = vmatpush2.msra.mxu0 0.0
    %1384 = vmatprep.subr.mxu0 0.0
    %1385 = vmatpush2.msra.mxu0 0.0
    %1386 = vmatprep.subr.mxu0 0.0
    %1387 = vmatpush2.msra.mxu0 0.0
    %1388 = vmatprep.subr.mxu0 0.0
    %1389 = vmatpush2.msra.mxu0 0.0
    %1390 = vmatprep.mubr.f32.mxu0 0.0
    %1391 = vmatmul.mubr.f32.gmra.mxu0 %v1324
    %v1392 = vpop.f32.mrf.mxu0
    %v1393 = vadd.f32 0.0, %v1392
    %v1394 = vpop.f32.mrf.mxu0
    %1395 = vdwg.mxu0
    %v1396 = vadd.f32 %v1316, %v1393
    %v1397 = vxor.u32 %v1396, 2147483648
    %v1398 = vmul.f32 %v1397, 1.442695
    %v1399 = vpow.pop %v1398
    %v1400 = vadd.f32 %v1399, 1.0
    %v1401 = vrcp.pop %v1400
    %v1402 = vmul.f32 1.0, %v1401
    %v1403 = vtanh.pop %v1396
    %1405 = vrot.lane.b32.xlu0 %v1318, 32
    %v1406 = vpop.permute.xlu0 %1405
    %v1408 = vmul.f32 %v1402, %v1406
    %1410 = vrot.lane.b32.xlu0 %v1403, 64
    %v1411 = vpop.permute.xlu0 %1410
    %v1413 = vmul.f32 %v1402, %v1411
    %1415 = vrot.lane.b32.xlu0 %v1413, 32
    %v1416 = vpop.permute.xlu0 %1415
    %v1418 = vadd.f32 %v1408, %v1416
    %v1419 = vtanh.pop %v1418
    %1421 = vrot.lane.b32.xlu0 %v1419, 64
    %v1422 = vpop.permute.xlu0 %1421
    %v1424 = vmul.f32 %v1402, %v1422
    %1426 = vrot.lane.b32.xlu0 %v1424, 32
    %v1427 = vpop.permute.xlu0 %1426
    %1429 = vst.msk [vmem:[#allocation2] sm:$0x3] %vm209, %v1427
    %1431 = vrot.lane.b32.xlu0 %v1418, 96
    %v1432 = vpop.permute.xlu0 %1431
    %1434 = vst.msk [vmem:[#allocation3] sm:$0x3] %vm209, %v1432
    %s1435 = scalar_lea.vmem [#allocation14], 10
    %1436 = vst.msk [vmem:[%s1435] sm:$0x3] %vm209, %v1427
    %s1437 = scalar_lea.vmem [#allocation9], 4
    %v1438 = vld [vmem:[%s1437] sm:$0x3]
    %v1439 = vld [vmem:[#allocation4] sm:$0x3]
    %v1440 = vld [vmem:[#allocation5] sm:$0x3]
    %v1441 = vld [vmem:[#allocation12] sm:$0xff]
    %v1442 = vld [vmem:[#allocation12 + $0x8] sm:$0xff]
    %v1443 = vld [vmem:[#allocation12 + $0x10] sm:$0xff]
    %v1444 = vld [vmem:[#allocation12 + $0x18] sm:$0xff]
    %v1446 = vsel %vm102, %v1439, 0
    %1448 = vmatprep.subr.mxu0 0.0
    %1449 = vmatpush1.msra.mxu0 0.0
    %1450 = vmatprep.subr.mxu0 0.0
    %1451 = vmatpush1.msra.mxu0 0.0
    %1452 = vmatprep.subr.mxu0 0.0
    %1453 = vmatpush1.msra.mxu0 0.0
    %1454 = vmatprep.subr.mxu0 0.0
    %1455 = vmatpush1.msra.mxu0 0.0
    %1456 = vmatprep.subr.mxu0 0.0
    %1457 = vmatpush1.msra.mxu0 0.0
    %1458 = vmatprep.subr.mxu0 0.0
    %1459 = vmatpush1.msra.mxu0 0.0
    %1460 = vmatprep.subr.mxu0 0.0
    %1461 = vmatpush1.msra.mxu0 0.0
    %1462 = vmatprep.subr.mxu0 0.0
    %1463 = vmatpush1.msra.mxu0 0.0
    %1464 = vmatprep.subr.mxu0 0.0
    %1465 = vmatpush1.msra.mxu0 0.0
    %1466 = vmatprep.subr.mxu0 0.0
    %1467 = vmatpush1.msra.mxu0 0.0
    %1468 = vmatprep.subr.mxu0 0.0
    %1469 = vmatpush1.msra.mxu0 0.0
    %1470 = vmatprep.subr.mxu0 0.0
    %1471 = vmatpush1.msra.mxu0 0.0
    %1472 = vmatprep.subr.mxu0 0.0
    %1473 = vmatpush1.msra.mxu0 %v1444
    %1474 = vmatprep.subr.mxu0 0.0
    %1475 = vmatpush1.msra.mxu0 %v1443
    %1476 = vmatprep.subr.mxu0 0.0
    %1477 = vmatpush1.msra.mxu0 %v1442
    %1478 = vmatprep.subr.mxu0 0.0
    %1479 = vmatpush1.msra.mxu0 %v1441
    %1480 = vmatprep.subr.mxu0 0.0
    %1481 = vmatpush2.msra.mxu0 0.0
    %1482 = vmatprep.subr.mxu0 0.0
    %1483 = vmatpush2.msra.mxu0 0.0
    %1484 = vmatprep.subr.mxu0 0.0
    %1485 = vmatpush2.msra.mxu0 0.0
    %1486 = vmatprep.subr.mxu0 0.0
    %1487 = vmatpush2.msra.mxu0 0.0
    %1488 = vmatprep.subr.mxu0 0.0
    %1489 = vmatpush2.msra.mxu0 0.0
    %1490 = vmatprep.subr.mxu0 0.0
    %1491 = vmatpush2.msra.mxu0 0.0
    %1492 = vmatprep.subr.mxu0 0.0
    %1493 = vmatpush2.msra.mxu0 0.0
    %1494 = vmatprep.subr.mxu0 0.0
    %1495 = vmatpush2.msra.mxu0 0.0
    %1496 = vmatprep.subr.mxu0 0.0
    %1497 = vmatpush2.msra.mxu0 0.0
    %1498 = vmatprep.subr.mxu0 0.0
    %1499 = vmatpush2.msra.mxu0 0.0
    %1500 = vmatprep.subr.mxu0 0.0
    %1501 = vmatpush2.msra.mxu0 0.0
    %1502 = vmatprep.subr.mxu0 0.0
    %1503 = vmatpush2.msra.mxu0 0.0
    %1504 = vmatprep.subr.mxu0 0.0
    %1505 = vmatpush2.msra.mxu0 0.0
    %1506 = vmatprep.subr.mxu0 0.0
    %1507 = vmatpush2.msra.mxu0 0.0
    %1508 = vmatprep.subr.mxu0 0.0
    %1509 = vmatpush2.msra.mxu0 0.0
    %1510 = vmatprep.subr.mxu0 0.0
    %1511 = vmatpush2.msra.mxu0 0.0
    %1512 = vmatprep.mubr.f32.mxu0 0.0
    %1513 = vmatmul.mubr.f32.gmra.mxu0 %v1446
    %v1514 = vpop.f32.mrf.mxu0
    %v1515 = vadd.f32 0.0, %v1514
    %v1516 = vpop.f32.mrf.mxu0
    %1517 = vdwg.mxu0
    %v1518 = vadd.f32 %v1438, %v1515
    %v1519 = vxor.u32 %v1518, 2147483648
    %v1520 = vmul.f32 %v1519, 1.442695
    %v1521 = vpow.pop %v1520
    %v1522 = vadd.f32 %v1521, 1.0
    %v1523 = vrcp.pop %v1522
    %v1524 = vmul.f32 1.0, %v1523
    %v1525 = vtanh.pop %v1518
    %1527 = vrot.lane.b32.xlu0 %v1440, 32
    %v1528 = vpop.permute.xlu0 %1527
    %v1530 = vmul.f32 %v1524, %v1528
    %1532 = vrot.lane.b32.xlu0 %v1525, 64
    %v1533 = vpop.permute.xlu0 %1532
    %v1535 = vmul.f32 %v1524, %v1533
    %1537 = vrot.lane.b32.xlu0 %v1535, 32
    %v1538 = vpop.permute.xlu0 %1537
    %v1540 = vadd.f32 %v1530, %v1538
    %v1541 = vtanh.pop %v1540
    %1543 = vrot.lane.b32.xlu0 %v1541, 64
    %v1544 = vpop.permute.xlu0 %1543
    %v1546 = vmul.f32 %v1524, %v1544
    %1548 = vrot.lane.b32.xlu0 %v1546, 32
    %v1549 = vpop.permute.xlu0 %1548
    %1551 = vst.msk [vmem:[#allocation4] sm:$0x3] %vm209, %v1549
    %1553 = vrot.lane.b32.xlu0 %v1540, 96
    %v1554 = vpop.permute.xlu0 %1553
    %1556 = vst.msk [vmem:[#allocation5] sm:$0x3] %vm209, %v1554
    %s1557 = scalar_lea.vmem [#allocation15], 4
    %1558 = vst.msk [vmem:[%s1557] sm:$0x3] %vm209, %v1549
    %s1559 = scalar_lea.vmem [#allocation6], 12
    %v1560 = vld [vmem:[%s1559] sm:$0x3]
    %v1561 = vld [vmem:[#allocation2] sm:$0x3]
    %v1562 = vld [vmem:[#allocation3] sm:$0x3]
    %v1563 = vld [vmem:[#allocation11] sm:$0xff]
    %v1564 = vld [vmem:[#allocation11 + $0x8] sm:$0xff]
    %v1565 = vld [vmem:[#allocation11 + $0x10] sm:$0xff]
    %v1566 = vld [vmem:[#allocation11 + $0x18] sm:$0xff]
    %v1568 = vsel %vm102, %v1561, 0
    %1570 = vmatprep.subr.mxu0 0.0
    %1571 = vmatpush1.msra.mxu0 0.0
    %1572 = vmatprep.subr.mxu0 0.0
    %1573 = vmatpush1.msra.mxu0 0.0
    %1574 = vmatprep.subr.mxu0 0.0
    %1575 = vmatpush1.msra.mxu0 0.0
    %1576 = vmatprep.subr.mxu0 0.0
    %1577 = vmatpush1.msra.mxu0 0.0
    %1578 = vmatprep.subr.mxu0 0.0
    %1579 = vmatpush1.msra.mxu0 0.0
    %1580 = vmatprep.subr.mxu0 0.0
    %1581 = vmatpush1.msra.mxu0 0.0
    %1582 = vmatprep.subr.mxu0 0.0
    %1583 = vmatpush1.msra.mxu0 0.0
    %1584 = vmatprep.subr.mxu0 0.0
    %1585 = vmatpush1.msra.mxu0 0.0
    %1586 = vmatprep.subr.mxu0 0.0
    %1587 = vmatpush1.msra.mxu0 0.0
    %1588 = vmatprep.subr.mxu0 0.0
    %1589 = vmatpush1.msra.mxu0 0.0
    %1590 = vmatprep.subr.mxu0 0.0
    %1591 = vmatpush1.msra.mxu0 0.0
    %1592 = vmatprep.subr.mxu0 0.0
    %1593 = vmatpush1.msra.mxu0 0.0
    %1594 = vmatprep.subr.mxu0 0.0
    %1595 = vmatpush1.msra.mxu0 %v1566
    %1596 = vmatprep.subr.mxu0 0.0
    %1597 = vmatpush1.msra.mxu0 %v1565
    %1598 = vmatprep.subr.mxu0 0.0
    %1599 = vmatpush1.msra.mxu0 %v1564
    %1600 = vmatprep.subr.mxu0 0.0
    %1601 = vmatpush1.msra.mxu0 %v1563
    %1602 = vmatprep.subr.mxu0 0.0
    %1603 = vmatpush2.msra.mxu0 0.0
    %1604 = vmatprep.subr.mxu0 0.0
    %1605 = vmatpush2.msra.mxu0 0.0
    %1606 = vmatprep.subr.mxu0 0.0
    %1607 = vmatpush2.msra.mxu0 0.0
    %1608 = vmatprep.subr.mxu0 0.0
    %1609 = vmatpush2.msra.mxu0 0.0
    %1610 = vmatprep.subr.mxu0 0.0
    %1611 = vmatpush2.msra.mxu0 0.0
    %1612 = vmatprep.subr.mxu0 0.0
    %1613 = vmatpush2.msra.mxu0 0.0
    %1614 = vmatprep.subr.mxu0 0.0
    %1615 = vmatpush2.msra.mxu0 0.0
    %1616 = vmatprep.subr.mxu0 0.0
    %1617 = vmatpush2.msra.mxu0 0.0
    %1618 = vmatprep.subr.mxu0 0.0
    %1619 = vmatpush2.msra.mxu0 0.0
    %1620 = vmatprep.subr.mxu0 0.0
    %1621 = vmatpush2.msra.mxu0 0.0
    %1622 = vmatprep.subr.mxu0 0.0
    %1623 = vmatpush2.msra.mxu0 0.0
    %1624 = vmatprep.subr.mxu0 0.0
    %1625 = vmatpush2.msra.mxu0 0.0
    %1626 = vmatprep.subr.mxu0 0.0
    %1627 = vmatpush2.msra.mxu0 0.0
    %1628 = vmatprep.subr.mxu0 0.0
    %1629 = vmatpush2.msra.mxu0 0.0
    %1630 = vmatprep.subr.mxu0 0.0
    %1631 = vmatpush2.msra.mxu0 0.0
    %1632 = vmatprep.subr.mxu0 0.0
    %1633 = vmatpush2.msra.mxu0 0.0
    %1634 = vmatprep.mubr.f32.mxu0 0.0
    %1635 = vmatmul.mubr.f32.gmra.mxu0 %v1568
    %v1636 = vpop.f32.mrf.mxu0
    %v1637 = vadd.f32 0.0, %v1636
    %v1638 = vpop.f32.mrf.mxu0
    %1639 = vdwg.mxu0
    %v1640 = vadd.f32 %v1560, %v1637
    %v1641 = vxor.u32 %v1640, 2147483648
    %v1642 = vmul.f32 %v1641, 1.442695
    %v1643 = vpow.pop %v1642
    %v1644 = vadd.f32 %v1643, 1.0
    %v1645 = vrcp.pop %v1644
    %v1646 = vmul.f32 1.0, %v1645
    %v1647 = vtanh.pop %v1640
    %1649 = vrot.lane.b32.xlu0 %v1562, 32
    %v1650 = vpop.permute.xlu0 %1649
    %v1652 = vmul.f32 %v1646, %v1650
    %1654 = vrot.lane.b32.xlu0 %v1647, 64
    %v1655 = vpop.permute.xlu0 %1654
    %v1657 = vmul.f32 %v1646, %v1655
    %1659 = vrot.lane.b32.xlu0 %v1657, 32
    %v1660 = vpop.permute.xlu0 %1659
    %v1662 = vadd.f32 %v1652, %v1660
    %v1663 = vtanh.pop %v1662
    %1665 = vrot.lane.b32.xlu0 %v1663, 64
    %v1666 = vpop.permute.xlu0 %1665
    %v1668 = vmul.f32 %v1646, %v1666
    %1670 = vrot.lane.b32.xlu0 %v1668, 32
    %v1671 = vpop.permute.xlu0 %1670
    %1673 = vst.msk [vmem:[#allocation2] sm:$0x3] %vm209, %v1671
    %1675 = vrot.lane.b32.xlu0 %v1662, 96
    %v1676 = vpop.permute.xlu0 %1675
    %1678 = vst.msk [vmem:[#allocation3] sm:$0x3] %vm209, %v1676
    %s1679 = scalar_lea.vmem [#allocation14], 12
    %1680 = vst.msk [vmem:[%s1679] sm:$0x3] %vm209, %v1671
    %s1681 = scalar_lea.vmem [#allocation9], 2
    %v1682 = vld [vmem:[%s1681] sm:$0x3]
    %v1683 = vld [vmem:[#allocation4] sm:$0x3]
    %v1684 = vld [vmem:[#allocation5] sm:$0x3]
    %v1685 = vld [vmem:[#allocation12] sm:$0xff]
    %v1686 = vld [vmem:[#allocation12 + $0x8] sm:$0xff]
    %v1687 = vld [vmem:[#allocation12 + $0x10] sm:$0xff]
    %v1688 = vld [vmem:[#allocation12 + $0x18] sm:$0xff]
    %v1690 = vsel %vm102, %v1683, 0
    %1692 = vmatprep.subr.mxu0 0.0
    %1693 = vmatpush1.msra.mxu0 0.0
    %1694 = vmatprep.subr.mxu0 0.0
    %1695 = vmatpush1.msra.mxu0 0.0
    %1696 = vmatprep.subr.mxu0 0.0
    %1697 = vmatpush1.msra.mxu0 0.0
    %1698 = vmatprep.subr.mxu0 0.0
    %1699 = vmatpush1.msra.mxu0 0.0
    %1700 = vmatprep.subr.mxu0 0.0
    %1701 = vmatpush1.msra.mxu0 0.0
    %1702 = vmatprep.subr.mxu0 0.0
    %1703 = vmatpush1.msra.mxu0 0.0
    %1704 = vmatprep.subr.mxu0 0.0
    %1705 = vmatpush1.msra.mxu0 0.0
    %1706 = vmatprep.subr.mxu0 0.0
    %1707 = vmatpush1.msra.mxu0 0.0
    %1708 = vmatprep.subr.mxu0 0.0
    %1709 = vmatpush1.msra.mxu0 0.0
    %1710 = vmatprep.subr.mxu0 0.0
    %1711 = vmatpush1.msra.mxu0 0.0
    %1712 = vmatprep.subr.mxu0 0.0
    %1713 = vmatpush1.msra.mxu0 0.0
    %1714 = vmatprep.subr.mxu0 0.0
    %1715 = vmatpush1.msra.mxu0 0.0
    %1716 = vmatprep.subr.mxu0 0.0
    %1717 = vmatpush1.msra.mxu0 %v1688
    %1718 = vmatprep.subr.mxu0 0.0
    %1719 = vmatpush1.msra.mxu0 %v1687
    %1720 = vmatprep.subr.mxu0 0.0
    %1721 = vmatpush1.msra.mxu0 %v1686
    %1722 = vmatprep.subr.mxu0 0.0
    %1723 = vmatpush1.msra.mxu0 %v1685
    %1724 = vmatprep.subr.mxu0 0.0
    %1725 = vmatpush2.msra.mxu0 0.0
    %1726 = vmatprep.subr.mxu0 0.0
    %1727 = vmatpush2.msra.mxu0 0.0
    %1728 = vmatprep.subr.mxu0 0.0
    %1729 = vmatpush2.msra.mxu0 0.0
    %1730 = vmatprep.subr.mxu0 0.0
    %1731 = vmatpush2.msra.mxu0 0.0
    %1732 = vmatprep.subr.mxu0 0.0
    %1733 = vmatpush2.msra.mxu0 0.0
    %1734 = vmatprep.subr.mxu0 0.0
    %1735 = vmatpush2.msra.mxu0 0.0
    %1736 = vmatprep.subr.mxu0 0.0
    %1737 = vmatpush2.msra.mxu0 0.0
    %1738 = vmatprep.subr.mxu0 0.0
    %1739 = vmatpush2.msra.mxu0 0.0
    %1740 = vmatprep.subr.mxu0 0.0
    %1741 = vmatpush2.msra.mxu0 0.0
    %1742 = vmatprep.subr.mxu0 0.0
    %1743 = vmatpush2.msra.mxu0 0.0
    %1744 = vmatprep.subr.mxu0 0.0
    %1745 = vmatpush2.msra.mxu0 0.0
    %1746 = vmatprep.subr.mxu0 0.0
    %1747 = vmatpush2.msra.mxu0 0.0
    %1748 = vmatprep.subr.mxu0 0.0
    %1749 = vmatpush2.msra.mxu0 0.0
    %1750 = vmatprep.subr.mxu0 0.0
    %1751 = vmatpush2.msra.mxu0 0.0
    %1752 = vmatprep.subr.mxu0 0.0
    %1753 = vmatpush2.msra.mxu0 0.0
    %1754 = vmatprep.subr.mxu0 0.0
    %1755 = vmatpush2.msra.mxu0 0.0
    %1756 = vmatprep.mubr.f32.mxu0 0.0
    %1757 = vmatmul.mubr.f32.gmra.mxu0 %v1690
    %v1758 = vpop.f32.mrf.mxu0
    %v1759 = vadd.f32 0.0, %v1758
    %v1760 = vpop.f32.mrf.mxu0
    %1761 = vdwg.mxu0
    %v1762 = vadd.f32 %v1682, %v1759
    %v1763 = vxor.u32 %v1762, 2147483648
    %v1764 = vmul.f32 %v1763, 1.442695
    %v1765 = vpow.pop %v1764
    %v1766 = vadd.f32 %v1765, 1.0
    %v1767 = vrcp.pop %v1766
    %v1768 = vmul.f32 1.0, %v1767
    %v1769 = vtanh.pop %v1762
    %1771 = vrot.lane.b32.xlu0 %v1684, 32
    %v1772 = vpop.permute.xlu0 %1771
    %v1774 = vmul.f32 %v1768, %v1772
    %1776 = vrot.lane.b32.xlu0 %v1769, 64
    %v1777 = vpop.permute.xlu0 %1776
    %v1779 = vmul.f32 %v1768, %v1777
    %1781 = vrot.lane.b32.xlu0 %v1779, 32
    %v1782 = vpop.permute.xlu0 %1781
    %v1784 = vadd.f32 %v1774, %v1782
    %v1785 = vtanh.pop %v1784
    %1787 = vrot.lane.b32.xlu0 %v1785, 64
    %v1788 = vpop.permute.xlu0 %1787
    %v1790 = vmul.f32 %v1768, %v1788
    %1792 = vrot.lane.b32.xlu0 %v1790, 32
    %v1793 = vpop.permute.xlu0 %1792
    %1795 = vst.msk [vmem:[#allocation4] sm:$0x3] %vm209, %v1793
    %1797 = vrot.lane.b32.xlu0 %v1784, 96
    %v1798 = vpop.permute.xlu0 %1797
    %1800 = vst.msk [vmem:[#allocation5] sm:$0x3] %vm209, %v1798
    %s1801 = scalar_lea.vmem [#allocation15], 2
    %1802 = vst.msk [vmem:[%s1801] sm:$0x3] %vm209, %v1793
    %s1803 = scalar_lea.vmem [#allocation6], 14
    %v1804 = vld [vmem:[%s1803] sm:$0x3]
    %v1805 = vld [vmem:[#allocation2] sm:$0x3]
    %v1806 = vld [vmem:[#allocation3] sm:$0x3]
    %v1807 = vld [vmem:[#allocation11] sm:$0xff]
    %v1808 = vld [vmem:[#allocation11 + $0x8] sm:$0xff]
    %v1809 = vld [vmem:[#allocation11 + $0x10] sm:$0xff]
    %v1810 = vld [vmem:[#allocation11 + $0x18] sm:$0xff]
    %v1812 = vsel %vm102, %v1805, 0
    %1814 = vmatprep.subr.mxu0 0.0
    %1815 = vmatpush1.msra.mxu0 0.0
    %1816 = vmatprep.subr.mxu0 0.0
    %1817 = vmatpush1.msra.mxu0 0.0
    %1818 = vmatprep.subr.mxu0 0.0
    %1819 = vmatpush1.msra.mxu0 0.0
    %1820 = vmatprep.subr.mxu0 0.0
    %1821 = vmatpush1.msra.mxu0 0.0
    %1822 = vmatprep.subr.mxu0 0.0
    %1823 = vmatpush1.msra.mxu0 0.0
    %1824 = vmatprep.subr.mxu0 0.0
    %1825 = vmatpush1.msra.mxu0 0.0
    %1826 = vmatprep.subr.mxu0 0.0
    %1827 = vmatpush1.msra.mxu0 0.0
    %1828 = vmatprep.subr.mxu0 0.0
    %1829 = vmatpush1.msra.mxu0 0.0
    %1830 = vmatprep.subr.mxu0 0.0
    %1831 = vmatpush1.msra.mxu0 0.0
    %1832 = vmatprep.subr.mxu0 0.0
    %1833 = vmatpush1.msra.mxu0 0.0
    %1834 = vmatprep.subr.mxu0 0.0
    %1835 = vmatpush1.msra.mxu0 0.0
    %1836 = vmatprep.subr.mxu0 0.0
    %1837 = vmatpush1.msra.mxu0 0.0
    %1838 = vmatprep.subr.mxu0 0.0
    %1839 = vmatpush1.msra.mxu0 %v1810
    %1840 = vmatprep.subr.mxu0 0.0
    %1841 = vmatpush1.msra.mxu0 %v1809
    %1842 = vmatprep.subr.mxu0 0.0
    %1843 = vmatpush1.msra.mxu0 %v1808
    %1844 = vmatprep.subr.mxu0 0.0
    %1845 = vmatpush1.msra.mxu0 %v1807
    %1846 = vmatprep.subr.mxu0 0.0
    %1847 = vmatpush2.msra.mxu0 0.0
    %1848 = vmatprep.subr.mxu0 0.0
    %1849 = vmatpush2.msra.mxu0 0.0
    %1850 = vmatprep.subr.mxu0 0.0
    %1851 = vmatpush2.msra.mxu0 0.0
    %1852 = vmatprep.subr.mxu0 0.0
    %1853 = vmatpush2.msra.mxu0 0.0
    %1854 = vmatprep.subr.mxu0 0.0
    %1855 = vmatpush2.msra.mxu0 0.0
    %1856 = vmatprep.subr.mxu0 0.0
    %1857 = vmatpush2.msra.mxu0 0.0
    %1858 = vmatprep.subr.mxu0 0.0
    %1859 = vmatpush2.msra.mxu0 0.0
    %1860 = vmatprep.subr.mxu0 0.0
    %1861 = vmatpush2.msra.mxu0 0.0
    %1862 = vmatprep.subr.mxu0 0.0
    %1863 = vmatpush2.msra.mxu0 0.0
    %1864 = vmatprep.subr.mxu0 0.0
    %1865 = vmatpush2.msra.mxu0 0.0
    %1866 = vmatprep.subr.mxu0 0.0
    %1867 = vmatpush2.msra.mxu0 0.0
    %1868 = vmatprep.subr.mxu0 0.0
    %1869 = vmatpush2.msra.mxu0 0.0
    %1870 = vmatprep.subr.mxu0 0.0
    %1871 = vmatpush2.msra.mxu0 0.0
    %1872 = vmatprep.subr.mxu0 0.0
    %1873 = vmatpush2.msra.mxu0 0.0
    %1874 = vmatprep.subr.mxu0 0.0
    %1875 = vmatpush2.msra.mxu0 0.0
    %1876 = vmatprep.subr.mxu0 0.0
    %1877 = vmatpush2.msra.mxu0 0.0
    %1878 = vmatprep.mubr.f32.mxu0 0.0
    %1879 = vmatmul.mubr.f32.gmra.mxu0 %v1812
    %v1880 = vpop.f32.mrf.mxu0
    %v1881 = vadd.f32 0.0, %v1880
    %v1882 = vpop.f32.mrf.mxu0
    %1883 = vdwg.mxu0
    %v1884 = vadd.f32 %v1804, %v1881
    %v1885 = vxor.u32 %v1884, 2147483648
    %v1886 = vmul.f32 %v1885, 1.442695
    %v1887 = vpow.pop %v1886
    %v1888 = vadd.f32 %v1887, 1.0
    %v1889 = vrcp.pop %v1888
    %v1890 = vmul.f32 1.0, %v1889
    %v1891 = vtanh.pop %v1884
    %1893 = vrot.lane.b32.xlu0 %v1806, 32
    %v1894 = vpop.permute.xlu0 %1893
    %v1896 = vmul.f32 %v1890, %v1894
    %1898 = vrot.lane.b32.xlu0 %v1891, 64
    %v1899 = vpop.permute.xlu0 %1898
    %v1901 = vmul.f32 %v1890, %v1899
    %1903 = vrot.lane.b32.xlu0 %v1901, 32
    %v1904 = vpop.permute.xlu0 %1903
    %v1906 = vadd.f32 %v1896, %v1904
    %v1907 = vtanh.pop %v1906
    %1909 = vrot.lane.b32.xlu0 %v1907, 64
    %v1910 = vpop.permute.xlu0 %1909
    %v1912 = vmul.f32 %v1890, %v1910
    %1914 = vrot.lane.b32.xlu0 %v1912, 32
    %v1915 = vpop.permute.xlu0 %1914
    %1917 = vst.msk [vmem:[#allocation2] sm:$0x3] %vm209, %v1915
    %1919 = vrot.lane.b32.xlu0 %v1906, 96
    %v1920 = vpop.permute.xlu0 %1919
    %1922 = vst.msk [vmem:[#allocation3] sm:$0x3] %vm209, %v1920
    %s1923 = scalar_lea.vmem [#allocation14], 14
    %1924 = vst.msk [vmem:[%s1923] sm:$0x3] %vm209, %v1915
    %v1925 = vld [vmem:[#allocation9] sm:$0x3]
    %v1926 = vld [vmem:[#allocation4] sm:$0x3]
    %v1927 = vld [vmem:[#allocation5] sm:$0x3]
    %v1928 = vld [vmem:[#allocation12] sm:$0xff]
    %v1929 = vld [vmem:[#allocation12 + $0x8] sm:$0xff]
    %v1930 = vld [vmem:[#allocation12 + $0x10] sm:$0xff]
    %v1931 = vld [vmem:[#allocation12 + $0x18] sm:$0xff]
    %v1933 = vsel %vm102, %v1926, 0
    %1935 = vmatprep.subr.mxu0 0.0
    %1936 = vmatpush1.msra.mxu0 0.0
    %1937 = vmatprep.subr.mxu0 0.0
    %1938 = vmatpush1.msra.mxu0 0.0
    %1939 = vmatprep.subr.mxu0 0.0
    %1940 = vmatpush1.msra.mxu0 0.0
    %1941 = vmatprep.subr.mxu0 0.0
    %1942 = vmatpush1.msra.mxu0 0.0
    %1943 = vmatprep.subr.mxu0 0.0
    %1944 = vmatpush1.msra.mxu0 0.0
    %1945 = vmatprep.subr.mxu0 0.0
    %1946 = vmatpush1.msra.mxu0 0.0
    %1947 = vmatprep.subr.mxu0 0.0
    %1948 = vmatpush1.msra.mxu0 0.0
    %1949 = vmatprep.subr.mxu0 0.0
    %1950 = vmatpush1.msra.mxu0 0.0
    %1951 = vmatprep.subr.mxu0 0.0
    %1952 = vmatpush1.msra.mxu0 0.0
    %1953 = vmatprep.subr.mxu0 0.0
    %1954 = vmatpush1.msra.mxu0 0.0
    %1955 = vmatprep.subr.mxu0 0.0
    %1956 = vmatpush1.msra.mxu0 0.0
    %1957 = vmatprep.subr.mxu0 0.0
    %1958 = vmatpush1.msra.mxu0 0.0
    %1959 = vmatprep.subr.mxu0 0.0
    %1960 = vmatpush1.msra.mxu0 %v1931
    %1961 = vmatprep.subr.mxu0 0.0
    %1962 = vmatpush1.msra.mxu0 %v1930
    %1963 = vmatprep.subr.mxu0 0.0
    %1964 = vmatpush1.msra.mxu0 %v1929
    %1965 = vmatprep.subr.mxu0 0.0
    %1966 = vmatpush1.msra.mxu0 %v1928
    %1967 = vmatprep.subr.mxu0 0.0
    %1968 = vmatpush2.msra.mxu0 0.0
    %1969 = vmatprep.subr.mxu0 0.0
    %1970 = vmatpush2.msra.mxu0 0.0
    %1971 = vmatprep.subr.mxu0 0.0
    %1972 = vmatpush2.msra.mxu0 0.0
    %1973 = vmatprep.subr.mxu0 0.0
    %1974 = vmatpush2.msra.mxu0 0.0
    %1975 = vmatprep.subr.mxu0 0.0
    %1976 = vmatpush2.msra.mxu0 0.0
    %1977 = vmatprep.subr.mxu0 0.0
    %1978 = vmatpush2.msra.mxu0 0.0
    %1979 = vmatprep.subr.mxu0 0.0
    %1980 = vmatpush2.msra.mxu0 0.0
    %1981 = vmatprep.subr.mxu0 0.0
    %1982 = vmatpush2.msra.mxu0 0.0
    %1983 = vmatprep.subr.mxu0 0.0
    %1984 = vmatpush2.msra.mxu0 0.0
    %1985 = vmatprep.subr.mxu0 0.0
    %1986 = vmatpush2.msra.mxu0 0.0
    %1987 = vmatprep.subr.mxu0 0.0
    %1988 = vmatpush2.msra.mxu0 0.0
    %1989 = vmatprep.subr.mxu0 0.0
    %1990 = vmatpush2.msra.mxu0 0.0
    %1991 = vmatprep.subr.mxu0 0.0
    %1992 = vmatpush2.msra.mxu0 0.0
    %1993 = vmatprep.subr.mxu0 0.0
    %1994 = vmatpush2.msra.mxu0 0.0
    %1995 = vmatprep.subr.mxu0 0.0
    %1996 = vmatpush2.msra.mxu0 0.0
    %1997 = vmatprep.subr.mxu0 0.0
    %1998 = vmatpush2.msra.mxu0 0.0
    %1999 = vmatprep.mubr.f32.mxu0 0.0
    %2000 = vmatmul.mubr.f32.gmra.mxu0 %v1933
    %v2001 = vpop.f32.mrf.mxu0
    %v2002 = vadd.f32 0.0, %v2001
    %v2003 = vpop.f32.mrf.mxu0
    %2004 = vdwg.mxu0
    %v2005 = vadd.f32 %v1925, %v2002
    %v2006 = vxor.u32 %v2005, 2147483648
    %v2007 = vmul.f32 %v2006, 1.442695
    %v2008 = vpow.pop %v2007
    %v2009 = vadd.f32 %v2008, 1.0
    %v2010 = vrcp.pop %v2009
    %v2011 = vmul.f32 1.0, %v2010
    %v2012 = vtanh.pop %v2005
    %2014 = vrot.lane.b32.xlu0 %v1927, 32
    %v2015 = vpop.permute.xlu0 %2014
    %v2017 = vmul.f32 %v2011, %v2015
    %2019 = vrot.lane.b32.xlu0 %v2012, 64
    %v2020 = vpop.permute.xlu0 %2019
    %v2022 = vmul.f32 %v2011, %v2020
    %2024 = vrot.lane.b32.xlu0 %v2022, 32
    %v2025 = vpop.permute.xlu0 %2024
    %v2027 = vadd.f32 %v2017, %v2025
    %v2028 = vtanh.pop %v2027
    %2030 = vrot.lane.b32.xlu0 %v2028, 64
    %v2031 = vpop.permute.xlu0 %2030
    %v2033 = vmul.f32 %v2011, %v2031
    %2035 = vrot.lane.b32.xlu0 %v2033, 32
    %v2036 = vpop.permute.xlu0 %2035
    %2038 = vst.msk [vmem:[#allocation4] sm:$0x3] %vm209, %v2036
    %2040 = vrot.lane.b32.xlu0 %v2027, 96
    %v2041 = vpop.permute.xlu0 %2040
    %2043 = vst.msk [vmem:[#allocation5] sm:$0x3] %vm209, %v2041
    %2044 = vst.msk [vmem:[#allocation15] sm:$0x3] %vm209, %v2036
    // Predicated region
    $region38: #{tpu_custom_call.1} parent=1 // pred_check
      _
    $region39: #{tpu_custom_call.1} parent=1 // pred_check_branch
      %2046 = sbr.rel (0) target = $region41
    $region40: #{tpu_custom_call.1} parent=1 // pred_region
      %s2048 = ssub.s32 256, 256
      %2049 = vsyncadd [#allocation8], %s2048
      %s2050 = sshll.u32 [#allocation14], 4
      %s2051 = int_to_ptr.vmem [resolvable:$true] %s2050
      %2056 = dma.vmem_to_hbm [thread:$0]  %s2051, 256, %s4, [#allocation8], 32, 32, 2
    $region41: #{tpu_custom_call.1} parent=1 // pred_fallthru
      _
    // Predicated region
    $region42: #{tpu_custom_call.1} parent=1 // pred_check
      _
    $region43: #{tpu_custom_call.1} parent=1 // pred_check_branch
      %2058 = sbr.rel (0) target = $region45
    $region44: #{tpu_custom_call.1} parent=1 // pred_region
      %s2059 = ssub.s32 0, 0
      %s2060 = smul.u32 8, %s2059
      %s2062 = ssub.s32 256, 256
      %2063 = vsyncadd [#allocation16], %s2062
      %s2064 = smul.addr %s2060, 32
      %s2065 = scalar_lea.hbm %s5, %s2064
      %s2066 = sshll.u32 [#allocation15], 4
      %s2067 = int_to_ptr.vmem [resolvable:$true] %s2066
      %2072 = dma.vmem_to_hbm [thread:$0]  %s2067, 256, %s2065, [#allocation16], 32, 32, 2
    $region45: #{tpu_custom_call.1} parent=1 // pred_fallthru
      _
    // Predicated region
    $region46: #{tpu_custom_call.1} parent=1 // pred_check
      _
    $region47: #{tpu_custom_call.1} parent=1 // pred_check_branch
      %2074 = sbr.rel (0) target = $region49
    $region48: #{tpu_custom_call.1} parent=1 // pred_region
      %2075 = dma.done [#allocation8], 256
    $region49: #{tpu_custom_call.1} parent=1 // pred_fallthru
      _
    // Predicated region
    $region50: #{tpu_custom_call.1} parent=1 // pred_check
      _
    $region51: #{tpu_custom_call.1} parent=1 // pred_check_branch
      %2077 = sbr.rel (0) target = $region53
    $region52: #{tpu_custom_call.1} parent=1 // pred_region
      %2078 = dma.done [#allocation16], 256
    $region53: #{tpu_custom_call.1} parent=1 // pred_fallthru
      _
    %2079 = vsyncpa [#allocation7], 1
    %2080 = vsyncpa [#allocation10], 1
    %2081 = vsyncpa [#allocation13], 1
    %2082 = vsyncpa [#allocation8], 1
    %2083 = vsyncpa [#allocation16], 1

</llo_original>
